<compile_context>
chip_gen: v5e
topology: v5e:2x2
jax: 0.10.0
libtpu: 0.0.40
codegen_flags: <defaults>
</compile_context>

<pallas_src>
import jax
import jax.numpy as jnp
from jax.experimental import pallas as pl
from jax.experimental.pallas import tpu as pltpu

DIM = 32          # dim == inner_dim
N_HEADS = 2
D_HEAD = 16       # n_heads * d_head == inner_dim
FF_MULT = 4       # FeedForward default mult
FF_INNER = DIM * FF_MULT          # 128
EPS = 1e-5        # nn.LayerNorm default eps

# ---------------------------------------------------------------------------
# packed-parameter layout (sublane offsets: multiples of 8 for f32, 16 for bf16)
# ---------------------------------------------------------------------------
_VEC_SLICES = {                       # (544, 1) float32 slab
    "ln1_g": (0, 32),   "ln1_b": (32, 64),
    "ln2_g": (64, 96),  "ln2_b": (96, 128),
    "ln3_g": (128, 160), "ln3_b": (160, 192),
    "b_o1": (192, 224), "b_o2": (224, 256),
    "b_ff2": (256, 288), "b_ff1": (288, 544),
}
_VEC_ROWS = 544
_W32_SLICES = {                       # (512, 32) bfloat16 slab (all Cin == DIM weights)
    "w_qkv1": (0, 96),   "w_o1": (96, 128),
    "w_qkv2": (128, 224), "w_o2": (224, 256),
    "w_ff1": (256, 512),
}
_W32_ROWS = 512


# ---------------------------------------------------------------------------
# in-kernel helpers: activations are (C, N) f32 with N = t * rows, rows in lanes
# ---------------------------------------------------------------------------
def _layer_norm(x, gamma, beta):
    # x: (C, N); gamma/beta: (C, 1). Normalise over channels (sublane axis).
    mu = jnp.mean(x, axis=0, keepdims=True)
    var = jnp.mean(jnp.square(x - mu), axis=0, keepdims=True)
    return (x - mu) * jax.lax.rsqrt(var + EPS) * gamma + beta


def _linear(w_bf16, x_f32, bias=None):
    # One wide-N MXU matmul: W(out, in) @ X(in, t*rows), f32 accumulation.
    y = jnp.dot(w_bf16, x_f32.astype(jnp.bfloat16),
                preferred_element_type=jnp.float32)
    if bias is not None:
        y = y + bias
    return y


def _attention(x, ln_g, ln_b, w_qkv, w_o, b_o, *, t, sb):
    """Temporal multi-head self-attention (CrossAttention with context=x).

    x: (C, t*sb) f32, columns ordered [t0 rows | t1 rows | ... ]."""
    scale = D_HEAD ** -0.5
    xn = _layer_norm(x, ln_g, ln_b)
    qkv = _linear(w_qkv, xn)                                   # (3C, N): [q | k | v]
    out = None
    for h in range(N_HEADS):
        q = qkv[h * D_HEAD:(h + 1) * D_HEAD]                   # (Dh, N)
        k = qkv[DIM + h * D_HEAD:DIM + (h + 1) * D_HEAD]       # (Dh, N)
        v = qkv[2 * DIM + h * D_HEAD:2 * DIM + (h + 1) * D_HEAD]
        o_cols = []
        for i in range(t):                                     # static, small (=4)
            qi = q[:, i * sb:(i + 1) * sb]                     # lane-aligned slice
            # scores vs every key timestep: VPU multiply + sublane reduce over Dh
            s = [jnp.sum(qi * k[:, j * sb:(j + 1) * sb], axis=0, keepdims=True) * scale
                 for j in range(t)]                            # t x (1, sb)
            m = s[0]
            for j in range(1, t):
                m = jnp.maximum(m, s[j])
            p = [jnp.exp(sj - m) for sj in s]
            denom = p[0]
            for j in range(1, t):
                denom = denom + p[j]
            inv = pl.reciprocal(denom, approx=True)            # EUP slot, free-ish
            oi = (p[0] * inv) * v[:, 0:sb]
            for j in range(1, t):
                oi = oi + (p[j] * inv) * v[:, j * sb:(j + 1) * sb]
            o_cols.append(oi)                                  # (Dh, sb)
        o_h = jnp.concatenate(o_cols, axis=1)                  # (Dh, N) lane concat
        # per-head output projection accumulate (no sublane head-concat)
        y_h = _linear(w_o[:, h * D_HEAD:(h + 1) * D_HEAD], o_h)
        out = y_h if out is None else out + y_h
    return out + b_o


def _ff_geglu(x, ln_g, ln_b, w1, b1, w2, b2):
    """FeedForward w/ GEGLU: Linear(dim, 2*inner) -> a * gelu(gate) -> Linear(inner, dim)."""
    xn = _layer_norm(x, ln_g, ln_b)
    h = _linear(w1, xn, b1)                                    # (2*FF_INNER, N)
    a = h[:FF_INNER]
    gate = h[FF_INNER:]
    # tanh-approx GELU (EUP) instead of exact erf (VPU polynomial).
    # TODO(synk): restore approximate=False if bit-matching PyTorch's erf GELU is required.
    g = a * jax.nn.gelu(gate, approximate=True)
    return _linear(w2, g, b2)


def _make_kernel(t, sb):
    def kernel(x_ref, vec_ref, w32_ref, wff2_ref, o_ref):
        x = x_ref[...].astype(jnp.float32)                     # (C, t*sb)
        vec = vec_ref[...]                                     # (544, 1) f32
        w32 = w32_ref[...]                                     # (512, 32) bf16
        wff2 = wff2_ref[...]                                   # (32, 128) bf16

        def vget(name):
            a, b = _VEC_SLICES[name]
            return vec[a:b]

        def wget(name):
            a, b = _W32_SLICES[name]
            return w32[a:b]

        # attn1: temporal self-attention + residual
        x = _attention(x, vget("ln1_g"), vget("ln1_b"),
                       wget("w_qkv1"), wget("w_o1"), vget("b_o1"), t=t, sb=sb) + x
        # attn2: context=None -> self-attention (CrossAttention default) + residual
        x = _attention(x, vget("ln2_g"), vget("ln2_b"),
                       wget("w_qkv2"), wget("w_o2"), vget("b_o2"), t=t, sb=sb) + x
        # GEGLU feed-forward + residual (is_res: inner_dim == dim)
        x = _ff_geglu(x, vget("ln3_g"), vget("ln3_b"),
                      wget("w_ff1"), vget("b_ff1"), wff2, vget("b_ff2")) + x
        o_ref[...] = x.astype(o_ref.dtype)
    return kernel


# ---------------------------------------------------------------------------
# wrapper: layout plumbing + pallas_call
# ---------------------------------------------------------------------------
def _round_up(x, m):
    return ((x + m - 1) // m) * m


def _tpu_budget():
    """(max rows per tile, vmem_limit_bytes) adapted to the chip generation."""
    try:
        cap = int(pltpu.get_tpu_info().vmem_capacity_bytes)
    except Exception:                       # unknown chip / query unavailable
        cap = 64 * 1024 * 1024              # -> conservative (v7x-safe)
    if cap >= 100 * 1024 * 1024:            # v5e / v6e: 128 MiB physical VMEM
        return 1024, 80 * 1024 * 1024
    return 512, 44 * 1024 * 1024            # v7x: 64 MiB physical VMEM


def _pick_row_tile(rows, max_rows):
    """Row-tile size: multiple of 128 (ragged extents are padded); >=2 grid
    steps whenever there is enough work (v7x has 2 TensorCores)."""
    sb = min(max_rows, _round_up(rows, 128))
    n_tiles = -(-rows // sb)
    if n_tiles == 1 and rows > 128:
        sb = _round_up(-(-rows // 2), 128)
        n_tiles = -(-rows // sb)
    return sb, n_tiles, n_tiles * sb


def _pack_params(p):
    vec = jnp.concatenate([
        p["ln1_g"], p["ln1_b"], p["ln2_g"], p["ln2_b"], p["ln3_g"], p["ln3_b"],
        p["b_o1"], p["b_o2"], p["b_ff2"], p["b_ff1"]]).astype(jnp.float32)[:, None]
    w32 = jnp.concatenate([
        p["w_qkv1"], p["w_o1"], p["w_qkv2"], p["w_o2"], p["w_ff1"]],
        axis=0).astype(jnp.bfloat16)
    wff2 = p["w_ff2"].astype(jnp.bfloat16)
    assert vec.shape == (_VEC_ROWS, 1)
    assert w32.shape == (_W32_ROWS, DIM)
    assert wff2.shape == (DIM, FF_INNER)
    return vec, w32, wff2


def video_transformer_block(x, params, timesteps):
    """x: (B, S, C) with B = b * timesteps, matching the PyTorch forward."""
    B, S, C = x.shape
    assert C == DIM, f"channel dim must be {DIM}"
    assert B % timesteps == 0
    b, t = B // timesteps, timesteps

    rows = b * S                                  # '(b s)' row axis: folding batch keeps
    max_rows, vmem_limit = _tpu_budget()          # the lane axis full even when S < 128
    sb, n_tiles, rows_pad = _pick_row_tile(rows, max_rows)
    n_cols = t * sb

    # '(b t) s c -> (b s) t c', pad ragged rows, then lane-dense tiling:
    # (tiles, C, t*sb) with the big row axis in the 128-wide lane dimension.
    xr = x.reshape(b, t, S, C).transpose(0, 2, 1, 3).reshape(rows, t, C)
    if rows_pad != rows:
        xr = jnp.pad(xr, ((0, rows_pad - rows), (0, 0), (0, 0)))
    xt = xr.reshape(n_tiles, sb, t, C).transpose(0, 3, 2, 1).reshape(n_tiles, C, n_cols)

    vec, w32, wff2 = _pack_params(params)

    io_spec = pl.BlockSpec((None, C, n_cols), lambda i: (i, 0, 0))
    const_map = lambda i: (0, 0)    # copies elided when the block index is unchanged

    out = pl.pallas_call(
        _make_kernel(t, sb),
        out_shape=jax.ShapeDtypeStruct((n_tiles, C, n_cols), x.dtype),
        grid_spec=pltpu.PrefetchScalarGridSpec(
            num_scalar_prefetch=0,
            grid=(n_tiles,),
            in_specs=[io_spec,
                      pl.BlockSpec(vec.shape, const_map),
                      pl.BlockSpec(w32.shape, const_map),
                      pl.BlockSpec(wff2.shape, const_map)],
            out_specs=io_spec,
        ),
        compiler_params=pltpu.CompilerParams(
            dimension_semantics=("parallel",),    # independent row tiles (megacore)
            vmem_limit_bytes=vmem_limit,
        ),
    )(xt, vec, w32, wff2)

    # undo tiling + '(b s) t c -> (b t) s c'
    out = out.reshape(n_tiles, C, t, sb).transpose(0, 3, 2, 1).reshape(rows_pad, t, C)
    out = out[:rows].reshape(b, S, t, C).transpose(0, 2, 1, 3).reshape(B, S, C)
    return out


# ---------------------------------------------------------------------------
# pure-JAX reference (same math & precision policy, no Pallas)
# ---------------------------------------------------------------------------
def reference(x, params, timesteps):
    p = params
    B, S, C = x.shape
    b, t = B // timesteps, timesteps
    xr = x.reshape(b, t, S, C).transpose(0, 2, 1, 3).reshape(b * S, t, C)
    xr = xr.astype(jnp.float32)

    def ln(v, g, bb):
        mu = v.mean(-1, keepdims=True)
        var = jnp.square(v - mu).mean(-1, keepdims=True)
        return (v - mu) * jax.lax.rsqrt(var + EPS) * g.reshape(1, 1, -1) + bb.reshape(1, 1, -1)

    def lin(v, wgt, bias=None):
        y = jnp.einsum("rtc,oc->rto", v.astype(jnp.bfloat16), wgt.astype(jnp.bfloat16),
                       preferred_element_type=jnp.float32)
        if bias is not None:
            y = y + bias.reshape(1, 1, -1)
        return y

    def attn(v, wqkv, wo, bo):
        qkv = lin(v, wqkv)
        q, k, vv = qkv[..., :C], qkv[..., C:2 * C], qkv[..., 2 * C:]
        scale = D_HEAD ** -0.5
        outs = []
        for h in range(N_HEADS):
            sl = slice(h * D_HEAD, (h + 1) * D_HEAD)
            s = jnp.einsum("rid,rjd->rij", q[..., sl], k[..., sl]) * scale
            s = s - s.max(-1, keepdims=True)
            pr = jnp.exp(s)
            pr = pr / pr.sum(-1, keepdims=True)
            outs.append(jnp.einsum("rij,rjd->rid", pr, vv[..., sl]))
        return lin(jnp.concatenate(outs, axis=-1), wo, bo)

    def ff(v, w1, b1, w2, b2):
        h = lin(v, w1, b1)
        a, gate = h[..., :FF_INNER], h[..., FF_INNER:]
        return lin(a * jax.nn.gelu(gate, approximate=True), w2, b2)

    xr = attn(ln(xr, p["ln1_g"], p["ln1_b"]), p["w_qkv1"], p["w_o1"], p["b_o1"]) + xr
    xr = attn(ln(xr, p["ln2_g"], p["ln2_b"]), p["w_qkv2"], p["w_o2"], p["b_o2"]) + xr
    xr = ff(ln(xr, p["ln3_g"], p["ln3_b"]), p["w_ff1"], p["b_ff1"], p["w_ff2"], p["b_ff2"]) + xr
    return xr.reshape(b, S, t, C).transpose(0, 2, 1, 3).reshape(B, S, C)


# ---------------------------------------------------------------------------
# deterministic synthetic parameter init (shapes from VideoTransformerBlock.__init__)
# weights in PyTorch (out, in) layout; matmul weights pre-cast to bf16
# ---------------------------------------------------------------------------
def init_params(key):
    ks = iter(jax.random.split(key, 10))

    def w(shape, scale=0.05):
        return scale * jax.random.normal(next(ks), shape, jnp.float32)

    ln_g = jnp.ones((DIM,), jnp.float32)
    ln_b = jnp.zeros((DIM,), jnp.float32)
    return dict(
        # LayerNorm 1/2/3 (gamma=1, beta=0 -> PyTorch default init)
        ln1_g=ln_g, ln1_b=ln_b, ln2_g=ln_g, ln2_b=ln_b, ln3_g=ln_g, ln3_b=ln_b,
        # attn1: fused [Wq; Wk; Wv] (3C, C) no bias, to_out Linear (C, C) + bias
        w_qkv1=w((3 * DIM, DIM)).astype(jnp.bfloat16),
        w_o1=w((DIM, DIM)).astype(jnp.bfloat16),
        b_o1=w((DIM,)),
        # attn2 (temporal cross-attn; context=None -> self-attn)
        w_qkv2=w((3 * DIM, DIM)).astype(jnp.bfloat16),
        w_o2=w((DIM, DIM)).astype(jnp.bfloat16),
        b_o2=w((DIM,)),
        # FeedForward: GEGLU Linear(dim, 2*inner)+bias, Linear(inner, dim)+bias
        w_ff1=w((2 * FF_INNER, DIM)).astype(jnp.bfloat16),
        b_ff1=w((2 * FF_INNER,)),
        w_ff2=w((DIM, FF_INNER)).astype(jnp.bfloat16),
        b_ff2=w((DIM,)),
    )

# TODO(synk): dropout (p=0 -> identity), gradient checkpointing, skip_attention
# masking and the optional ff_in branch are not exercised by this default config.


if __name__ == "__main__":
    key = jax.random.PRNGKey(0)
    kx, kp = jax.random.split(key)

    timesteps = 4            # t
    b = 2                    # true batch
    S = 16                   # spatial token count
    B = b * timesteps        # module's leading dim is (b t)

    x = jax.random.normal(kx, (B, S, DIM), jnp.float32)
    params = init_params(kp)

    out = jax.block_until_ready(video_transformer_block(x, params, timesteps))

    ref = reference(x, params, timesteps)
    assert out.shape == (B, S, DIM)
    max_err = float(jnp.max(jnp.abs(out - ref)))
    assert max_err < 5e-3, f"mismatch vs reference: {max_err}"

    print("KERNEL_OK")
</pallas_src>

<mosaic_0001>
module attributes {stable_mosaic.version = 11 : i64} {
  func.func @kernel(%arg0: i32, %arg1: memref<1x32x512xf32, #tpu.memory_space<vmem>>, %arg2: memref<544x1xf32, #tpu.memory_space<vmem>>, %arg3: memref<512x32xbf16, #tpu.memory_space<vmem>>, %arg4: memref<32x128xbf16, #tpu.memory_space<vmem>>, %arg5: memref<1x32x512xf32, #tpu.memory_space<vmem>>) attributes {dimension_semantics = [#tpu.dimension_semantics<parallel>], iteration_bounds = array<i64: 1>, scalar_prefetch = 0 : i64, scratch_operands = 0 : i64, tpu.core_type = #tpu.core_type<tc>, window_params = [{transform_indices = @transform_0, window_bounds = array<i64: 1, 32, 512>}, {pipeline_mode = #tpu.pipeline_mode<synchronous>, transform_indices = @transform_1, window_bounds = array<i64: 544, 1>}, {pipeline_mode = #tpu.pipeline_mode<synchronous>, transform_indices = @transform_2, window_bounds = array<i64: 512, 32>}, {pipeline_mode = #tpu.pipeline_mode<synchronous>, transform_indices = @transform_3, window_bounds = array<i64: 32, 128>}, {transform_indices = @transform_4, window_bounds = array<i64: 1, 32, 512>}]} {
    %c0 = arith.constant 0 : index
    %c0_0 = arith.constant 0 : index
    %c0_1 = arith.constant 0 : index
    %0 = vector.load %arg1[%c0, %c0_0, %c0_1] : memref<1x32x512xf32, #tpu.memory_space<vmem>>, vector<1x32x512xf32>
    %1 = vector.shape_cast %0 : vector<1x32x512xf32> to vector<32x512xf32>
    %c0_2 = arith.constant 0 : index
    %c0_3 = arith.constant 0 : index
    %2 = vector.load %arg2[%c0_2, %c0_3] : memref<544x1xf32, #tpu.memory_space<vmem>>, vector<544x1xf32>
    %c0_4 = arith.constant 0 : index
    %c0_5 = arith.constant 0 : index
    %3 = vector.load %arg3[%c0_4, %c0_5] : memref<512x32xbf16, #tpu.memory_space<vmem>>, vector<512x32xbf16>
    %c0_6 = arith.constant 0 : index
    %c0_7 = arith.constant 0 : index
    %4 = vector.load %arg4[%c0_6, %c0_7] : memref<32x128xbf16, #tpu.memory_space<vmem>>, vector<32x128xbf16>
    %5 = vector.extract_strided_slice %2 {offsets = [0, 0], sizes = [32, 1], strides = [1, 1]} : vector<544x1xf32> to vector<32x1xf32>
    %6 = vector.extract_strided_slice %2 {offsets = [32, 0], sizes = [32, 1], strides = [1, 1]} : vector<544x1xf32> to vector<32x1xf32>
    %7 = vector.extract_strided_slice %3 {offsets = [0, 0], sizes = [96, 32], strides = [1, 1]} : vector<512x32xbf16> to vector<96x32xbf16>
    %8 = vector.extract_strided_slice %3 {offsets = [96, 0], sizes = [32, 32], strides = [1, 1]} : vector<512x32xbf16> to vector<32x32xbf16>
    %9 = vector.extract_strided_slice %2 {offsets = [192, 0], sizes = [32, 1], strides = [1, 1]} : vector<544x1xf32> to vector<32x1xf32>
    %cst = arith.constant dense<0.000000e+00> : vector<512xf32>
    %10 = vector.multi_reduction <add>, %1, %cst [0] : vector<32x512xf32> to vector<512xf32>
    %11 = vector.shape_cast %10 : vector<512xf32> to vector<1x512xf32>
    %cst_8 = arith.constant 3.200000e+01 : f32
    %12 = vector.broadcast %cst_8 : f32 to vector<1x512xf32>
    %13 = arith.divf %11, %12 : vector<1x512xf32>
    %14 = vector.broadcast %13 : vector<1x512xf32> to vector<32x512xf32>
    %15 = arith.subf %1, %14 : vector<32x512xf32>
    %16 = arith.mulf %15, %15 : vector<32x512xf32>
    %cst_9 = arith.constant dense<0.000000e+00> : vector<512xf32>
    %17 = vector.multi_reduction <add>, %16, %cst_9 [0] : vector<32x512xf32> to vector<512xf32>
    %18 = vector.shape_cast %17 : vector<512xf32> to vector<1x512xf32>
    %cst_10 = arith.constant 3.200000e+01 : f32
    %19 = vector.broadcast %cst_10 : f32 to vector<1x512xf32>
    %20 = arith.divf %18, %19 : vector<1x512xf32>
    %21 = vector.broadcast %13 : vector<1x512xf32> to vector<32x512xf32>
    %22 = arith.subf %1, %21 : vector<32x512xf32>
    %cst_11 = arith.constant 9.99999974E-6 : f32
    %23 = vector.broadcast %cst_11 : f32 to vector<1x512xf32>
    %24 = arith.addf %20, %23 : vector<1x512xf32>
    %25 = math.rsqrt %24 : vector<1x512xf32>
    %26 = vector.broadcast %25 : vector<1x512xf32> to vector<32x512xf32>
    %27 = arith.mulf %22, %26 : vector<32x512xf32>
    %28 = vector.broadcast %5 : vector<32x1xf32> to vector<32x512xf32>
    %29 = arith.mulf %27, %28 : vector<32x512xf32>
    %30 = vector.broadcast %6 : vector<32x1xf32> to vector<32x512xf32>
    %31 = arith.addf %29, %30 : vector<32x512xf32>
    %32 = arith.truncf %31 : vector<32x512xf32> to vector<32x512xbf16>
    %cst_12 = arith.constant dense<0.000000e+00> : vector<96x512xf32>
    %33 = tpu.matmul %7, %32, %cst_12 {dimension_numbers = #tpu.dot_dimension_numbers<[1], [0], [0], [1], [0, 0, 1, 1], [], []>} : vector<96x32xbf16>, vector<32x512xbf16>, vector<96x512xf32> -> vector<96x512xf32>
    %34 = vector.extract_strided_slice %33 {offsets = [0, 0], sizes = [16, 512], strides = [1, 1]} : vector<96x512xf32> to vector<16x512xf32>
    %35 = vector.extract_strided_slice %33 {offsets = [32, 0], sizes = [16, 512], strides = [1, 1]} : vector<96x512xf32> to vector<16x512xf32>
    %36 = vector.extract_strided_slice %33 {offsets = [64, 0], sizes = [16, 512], strides = [1, 1]} : vector<96x512xf32> to vector<16x512xf32>
    %37 = vector.extract_strided_slice %34 {offsets = [0, 0], sizes = [16, 128], strides = [1, 1]} : vector<16x512xf32> to vector<16x128xf32>
    %38 = vector.extract_strided_slice %35 {offsets = [0, 0], sizes = [16, 128], strides = [1, 1]} : vector<16x512xf32> to vector<16x128xf32>
    %39 = arith.mulf %37, %38 : vector<16x128xf32>
    %cst_13 = arith.constant dense<0.000000e+00> : vector<128xf32>
    %40 = vector.multi_reduction <add>, %39, %cst_13 [0] : vector<16x128xf32> to vector<128xf32>
    %41 = vector.shape_cast %40 : vector<128xf32> to vector<1x128xf32>
    %cst_14 = arith.constant 2.500000e-01 : f32
    %42 = vector.broadcast %cst_14 : f32 to vector<1x128xf32>
    %43 = arith.mulf %41, %42 : vector<1x128xf32>
    %44 = vector.extract_strided_slice %35 {offsets = [0, 128], sizes = [16, 128], strides = [1, 1]} : vector<16x512xf32> to vector<16x128xf32>
    %45 = arith.mulf %37, %44 : vector<16x128xf32>
    %cst_15 = arith.constant dense<0.000000e+00> : vector<128xf32>
    %46 = vector.multi_reduction <add>, %45, %cst_15 [0] : vector<16x128xf32> to vector<128xf32>
    %47 = vector.shape_cast %46 : vector<128xf32> to vector<1x128xf32>
    %cst_16 = arith.constant 2.500000e-01 : f32
    %48 = vector.broadcast %cst_16 : f32 to vector<1x128xf32>
    %49 = arith.mulf %47, %48 : vector<1x128xf32>
    %50 = vector.extract_strided_slice %35 {offsets = [0, 256], sizes = [16, 128], strides = [1, 1]} : vector<16x512xf32> to vector<16x128xf32>
    %51 = arith.mulf %37, %50 : vector<16x128xf32>
    %cst_17 = arith.constant dense<0.000000e+00> : vector<128xf32>
    %52 = vector.multi_reduction <add>, %51, %cst_17 [0] : vector<16x128xf32> to vector<128xf32>
    %53 = vector.shape_cast %52 : vector<128xf32> to vector<1x128xf32>
    %cst_18 = arith.constant 2.500000e-01 : f32
    %54 = vector.broadcast %cst_18 : f32 to vector<1x128xf32>
    %55 = arith.mulf %53, %54 : vector<1x128xf32>
    %56 = vector.extract_strided_slice %35 {offsets = [0, 384], sizes = [16, 128], strides = [1, 1]} : vector<16x512xf32> to vector<16x128xf32>
    %57 = arith.mulf %37, %56 : vector<16x128xf32>
    %cst_19 = arith.constant dense<0.000000e+00> : vector<128xf32>
    %58 = vector.multi_reduction <add>, %57, %cst_19 [0] : vector<16x128xf32> to vector<128xf32>
    %59 = vector.shape_cast %58 : vector<128xf32> to vector<1x128xf32>
    %cst_20 = arith.constant 2.500000e-01 : f32
    %60 = vector.broadcast %cst_20 : f32 to vector<1x128xf32>
    %61 = arith.mulf %59, %60 : vector<1x128xf32>
    %62 = arith.maximumf %43, %49 : vector<1x128xf32>
    %63 = arith.maximumf %62, %55 : vector<1x128xf32>
    %64 = arith.maximumf %63, %61 : vector<1x128xf32>
    %65 = arith.subf %43, %64 : vector<1x128xf32>
    %66 = math.exp %65 : vector<1x128xf32>
    %67 = arith.subf %49, %64 : vector<1x128xf32>
    %68 = math.exp %67 : vector<1x128xf32>
    %69 = arith.subf %55, %64 : vector<1x128xf32>
    %70 = math.exp %69 : vector<1x128xf32>
    %71 = arith.subf %61, %64 : vector<1x128xf32>
    %72 = math.exp %71 : vector<1x128xf32>
    %73 = arith.addf %66, %68 : vector<1x128xf32>
    %74 = arith.addf %73, %70 : vector<1x128xf32>
    %75 = arith.addf %74, %72 : vector<1x128xf32>
    %76 = tpu.reciprocal %75 {approx = true} : vector<1x128xf32> -> vector<1x128xf32>
    %77 = arith.mulf %66, %76 : vector<1x128xf32>
    %78 = vector.extract_strided_slice %36 {offsets = [0, 0], sizes = [16, 128], strides = [1, 1]} : vector<16x512xf32> to vector<16x128xf32>
    %79 = vector.broadcast %77 : vector<1x128xf32> to vector<16x128xf32>
    %80 = arith.mulf %79, %78 : vector<16x128xf32>
    %81 = arith.mulf %68, %76 : vector<1x128xf32>
    %82 = vector.extract_strided_slice %36 {offsets = [0, 128], sizes = [16, 128], strides = [1, 1]} : vector<16x512xf32> to vector<16x128xf32>
    %83 = vector.broadcast %81 : vector<1x128xf32> to vector<16x128xf32>
    %84 = arith.mulf %83, %82 : vector<16x128xf32>
    %85 = arith.addf %80, %84 : vector<16x128xf32>
    %86 = arith.mulf %70, %76 : vector<1x128xf32>
    %87 = vector.extract_strided_slice %36 {offsets = [0, 256], sizes = [16, 128], strides = [1, 1]} : vector<16x512xf32> to vector<16x128xf32>
    %88 = vector.broadcast %86 : vector<1x128xf32> to vector<16x128xf32>
    %89 = arith.mulf %88, %87 : vector<16x128xf32>
    %90 = arith.addf %85, %89 : vector<16x128xf32>
    %91 = arith.mulf %72, %76 : vector<1x128xf32>
    %92 = vector.extract_strided_slice %36 {offsets = [0, 384], sizes = [16, 128], strides = [1, 1]} : vector<16x512xf32> to vector<16x128xf32>
    %93 = vector.broadcast %91 : vector<1x128xf32> to vector<16x128xf32>
    %94 = arith.mulf %93, %92 : vector<16x128xf32>
    %95 = arith.addf %90, %94 : vector<16x128xf32>
    %96 = vector.extract_strided_slice %34 {offsets = [0, 128], sizes = [16, 128], strides = [1, 1]} : vector<16x512xf32> to vector<16x128xf32>
    %97 = vector.extract_strided_slice %35 {offsets = [0, 0], sizes = [16, 128], strides = [1, 1]} : vector<16x512xf32> to vector<16x128xf32>
    %98 = arith.mulf %96, %97 : vector<16x128xf32>
    %cst_21 = arith.constant dense<0.000000e+00> : vector<128xf32>
    %99 = vector.multi_reduction <add>, %98, %cst_21 [0] : vector<16x128xf32> to vector<128xf32>
    %100 = vector.shape_cast %99 : vector<128xf32> to vector<1x128xf32>
    %cst_22 = arith.constant 2.500000e-01 : f32
    %101 = vector.broadcast %cst_22 : f32 to vector<1x128xf32>
    %102 = arith.mulf %100, %101 : vector<1x128xf32>
    %103 = vector.extract_strided_slice %35 {offsets = [0, 128], sizes = [16, 128], strides = [1, 1]} : vector<16x512xf32> to vector<16x128xf32>
    %104 = arith.mulf %96, %103 : vector<16x128xf32>
    %cst_23 = arith.constant dense<0.000000e+00> : vector<128xf32>
    %105 = vector.multi_reduction <add>, %104, %cst_23 [0] : vector<16x128xf32> to vector<128xf32>
    %106 = vector.shape_cast %105 : vector<128xf32> to vector<1x128xf32>
    %cst_24 = arith.constant 2.500000e-01 : f32
    %107 = vector.broadcast %cst_24 : f32 to vector<1x128xf32>
    %108 = arith.mulf %106, %107 : vector<1x128xf32>
    %109 = vector.extract_strided_slice %35 {offsets = [0, 256], sizes = [16, 128], strides = [1, 1]} : vector<16x512xf32> to vector<16x128xf32>
    %110 = arith.mulf %96, %109 : vector<16x128xf32>
    %cst_25 = arith.constant dense<0.000000e+00> : vector<128xf32>
    %111 = vector.multi_reduction <add>, %110, %cst_25 [0] : vector<16x128xf32> to vector<128xf32>
    %112 = vector.shape_cast %111 : vector<128xf32> to vector<1x128xf32>
    %cst_26 = arith.constant 2.500000e-01 : f32
    %113 = vector.broadcast %cst_26 : f32 to vector<1x128xf32>
    %114 = arith.mulf %112, %113 : vector<1x128xf32>
    %115 = vector.extract_strided_slice %35 {offsets = [0, 384], sizes = [16, 128], strides = [1, 1]} : vector<16x512xf32> to vector<16x128xf32>
    %116 = arith.mulf %96, %115 : vector<16x128xf32>
    %cst_27 = arith.constant dense<0.000000e+00> : vector<128xf32>
    %117 = vector.multi_reduction <add>, %116, %cst_27 [0] : vector<16x128xf32> to vector<128xf32>
    %118 = vector.shape_cast %117 : vector<128xf32> to vector<1x128xf32>
    %cst_28 = arith.constant 2.500000e-01 : f32
    %119 = vector.broadcast %cst_28 : f32 to vector<1x128xf32>
    %120 = arith.mulf %118, %119 : vector<1x128xf32>
    %121 = arith.maximumf %102, %108 : vector<1x128xf32>
    %122 = arith.maximumf %121, %114 : vector<1x128xf32>
    %123 = arith.maximumf %122, %120 : vector<1x128xf32>
    %124 = arith.subf %102, %123 : vector<1x128xf32>
    %125 = math.exp %124 : vector<1x128xf32>
    %126 = arith.subf %108, %123 : vector<1x128xf32>
    %127 = math.exp %126 : vector<1x128xf32>
    %128 = arith.subf %114, %123 : vector<1x128xf32>
    %129 = math.exp %128 : vector<1x128xf32>
    %130 = arith.subf %120, %123 : vector<1x128xf32>
    %131 = math.exp %130 : vector<1x128xf32>
    %132 = arith.addf %125, %127 : vector<1x128xf32>
    %133 = arith.addf %132, %129 : vector<1x128xf32>
    %134 = arith.addf %133, %131 : vector<1x128xf32>
    %135 = tpu.reciprocal %134 {approx = true} : vector<1x128xf32> -> vector<1x128xf32>
    %136 = arith.mulf %125, %135 : vector<1x128xf32>
    %137 = vector.extract_strided_slice %36 {offsets = [0, 0], sizes = [16, 128], strides = [1, 1]} : vector<16x512xf32> to vector<16x128xf32>
    %138 = vector.broadcast %136 : vector<1x128xf32> to vector<16x128xf32>
    %139 = arith.mulf %138, %137 : vector<16x128xf32>
    %140 = arith.mulf %127, %135 : vector<1x128xf32>
    %141 = vector.extract_strided_slice %36 {offsets = [0, 128], sizes = [16, 128], strides = [1, 1]} : vector<16x512xf32> to vector<16x128xf32>
    %142 = vector.broadcast %140 : vector<1x128xf32> to vector<16x128xf32>
    %143 = arith.mulf %142, %141 : vector<16x128xf32>
    %144 = arith.addf %139, %143 : vector<16x128xf32>
    %145 = arith.mulf %129, %135 : vector<1x128xf32>
    %146 = vector.extract_strided_slice %36 {offsets = [0, 256], sizes = [16, 128], strides = [1, 1]} : vector<16x512xf32> to vector<16x128xf32>
    %147 = vector.broadcast %145 : vector<1x128xf32> to vector<16x128xf32>
    %148 = arith.mulf %147, %146 : vector<16x128xf32>
    %149 = arith.addf %144, %148 : vector<16x128xf32>
    %150 = arith.mulf %131, %135 : vector<1x128xf32>
    %151 = vector.extract_strided_slice %36 {offsets = [0, 384], sizes = [16, 128], strides = [1, 1]} : vector<16x512xf32> to vector<16x128xf32>
    %152 = vector.broadcast %150 : vector<1x128xf32> to vector<16x128xf32>
    %153 = arith.mulf %152, %151 : vector<16x128xf32>
    %154 = arith.addf %149, %153 : vector<16x128xf32>
    %155 = vector.extract_strided_slice %34 {offsets = [0, 256], sizes = [16, 128], strides = [1, 1]} : vector<16x512xf32> to vector<16x128xf32>
    %156 = vector.extract_strided_slice %35 {offsets = [0, 0], sizes = [16, 128], strides = [1, 1]} : vector<16x512xf32> to vector<16x128xf32>
    %157 = arith.mulf %155, %156 : vector<16x128xf32>
    %cst_29 = arith.constant dense<0.000000e+00> : vector<128xf32>
    %158 = vector.multi_reduction <add>, %157, %cst_29 [0] : vector<16x128xf32> to vector<128xf32>
    %159 = vector.shape_cast %158 : vector<128xf32> to vector<1x128xf32>
    %cst_30 = arith.constant 2.500000e-01 : f32
    %160 = vector.broadcast %cst_30 : f32 to vector<1x128xf32>
    %161 = arith.mulf %159, %160 : vector<1x128xf32>
    %162 = vector.extract_strided_slice %35 {offsets = [0, 128], sizes = [16, 128], strides = [1, 1]} : vector<16x512xf32> to vector<16x128xf32>
    %163 = arith.mulf %155, %162 : vector<16x128xf32>
    %cst_31 = arith.constant dense<0.000000e+00> : vector<128xf32>
    %164 = vector.multi_reduction <add>, %163, %cst_31 [0] : vector<16x128xf32> to vector<128xf32>
    %165 = vector.shape_cast %164 : vector<128xf32> to vector<1x128xf32>
    %cst_32 = arith.constant 2.500000e-01 : f32
    %166 = vector.broadcast %cst_32 : f32 to vector<1x128xf32>
    %167 = arith.mulf %165, %166 : vector<1x128xf32>
    %168 = vector.extract_strided_slice %35 {offsets = [0, 256], sizes = [16, 128], strides = [1, 1]} : vector<16x512xf32> to vector<16x128xf32>
    %169 = arith.mulf %155, %168 : vector<16x128xf32>
    %cst_33 = arith.constant dense<0.000000e+00> : vector<128xf32>
    %170 = vector.multi_reduction <add>, %169, %cst_33 [0] : vector<16x128xf32> to vector<128xf32>
    %171 = vector.shape_cast %170 : vector<128xf32> to vector<1x128xf32>
    %cst_34 = arith.constant 2.500000e-01 : f32
    %172 = vector.broadcast %cst_34 : f32 to vector<1x128xf32>
    %173 = arith.mulf %171, %172 : vector<1x128xf32>
    %174 = vector.extract_strided_slice %35 {offsets = [0, 384], sizes = [16, 128], strides = [1, 1]} : vector<16x512xf32> to vector<16x128xf32>
    %175 = arith.mulf %155, %174 : vector<16x128xf32>
    %cst_35 = arith.constant dense<0.000000e+00> : vector<128xf32>
    %176 = vector.multi_reduction <add>, %175, %cst_35 [0] : vector<16x128xf32> to vector<128xf32>
    %177 = vector.shape_cast %176 : vector<128xf32> to vector<1x128xf32>
    %cst_36 = arith.constant 2.500000e-01 : f32
    %178 = vector.broadcast %cst_36 : f32 to vector<1x128xf32>
    %179 = arith.mulf %177, %178 : vector<1x128xf32>
    %180 = arith.maximumf %161, %167 : vector<1x128xf32>
    %181 = arith.maximumf %180, %173 : vector<1x128xf32>
    %182 = arith.maximumf %181, %179 : vector<1x128xf32>
    %183 = arith.subf %161, %182 : vector<1x128xf32>
    %184 = math.exp %183 : vector<1x128xf32>
    %185 = arith.subf %167, %182 : vector<1x128xf32>
    %186 = math.exp %185 : vector<1x128xf32>
    %187 = arith.subf %173, %182 : vector<1x128xf32>
    %188 = math.exp %187 : vector<1x128xf32>
    %189 = arith.subf %179, %182 : vector<1x128xf32>
    %190 = math.exp %189 : vector<1x128xf32>
    %191 = arith.addf %184, %186 : vector<1x128xf32>
    %192 = arith.addf %191, %188 : vector<1x128xf32>
    %193 = arith.addf %192, %190 : vector<1x128xf32>
    %194 = tpu.reciprocal %193 {approx = true} : vector<1x128xf32> -> vector<1x128xf32>
    %195 = arith.mulf %184, %194 : vector<1x128xf32>
    %196 = vector.extract_strided_slice %36 {offsets = [0, 0], sizes = [16, 128], strides = [1, 1]} : vector<16x512xf32> to vector<16x128xf32>
    %197 = vector.broadcast %195 : vector<1x128xf32> to vector<16x128xf32>
    %198 = arith.mulf %197, %196 : vector<16x128xf32>
    %199 = arith.mulf %186, %194 : vector<1x128xf32>
    %200 = vector.extract_strided_slice %36 {offsets = [0, 128], sizes = [16, 128], strides = [1, 1]} : vector<16x512xf32> to vector<16x128xf32>
    %201 = vector.broadcast %199 : vector<1x128xf32> to vector<16x128xf32>
    %202 = arith.mulf %201, %200 : vector<16x128xf32>
    %203 = arith.addf %198, %202 : vector<16x128xf32>
    %204 = arith.mulf %188, %194 : vector<1x128xf32>
    %205 = vector.extract_strided_slice %36 {offsets = [0, 256], sizes = [16, 128], strides = [1, 1]} : vector<16x512xf32> to vector<16x128xf32>
    %206 = vector.broadcast %204 : vector<1x128xf32> to vector<16x128xf32>
    %207 = arith.mulf %206, %205 : vector<16x128xf32>
    %208 = arith.addf %203, %207 : vector<16x128xf32>
    %209 = arith.mulf %190, %194 : vector<1x128xf32>
    %210 = vector.extract_strided_slice %36 {offsets = [0, 384], sizes = [16, 128], strides = [1, 1]} : vector<16x512xf32> to vector<16x128xf32>
    %211 = vector.broadcast %209 : vector<1x128xf32> to vector<16x128xf32>
    %212 = arith.mulf %211, %210 : vector<16x128xf32>
    %213 = arith.addf %208, %212 : vector<16x128xf32>
    %214 = vector.extract_strided_slice %34 {offsets = [0, 384], sizes = [16, 128], strides = [1, 1]} : vector<16x512xf32> to vector<16x128xf32>
    %215 = vector.extract_strided_slice %35 {offsets = [0, 0], sizes = [16, 128], strides = [1, 1]} : vector<16x512xf32> to vector<16x128xf32>
    %216 = arith.mulf %214, %215 : vector<16x128xf32>
    %cst_37 = arith.constant dense<0.000000e+00> : vector<128xf32>
    %217 = vector.multi_reduction <add>, %216, %cst_37 [0] : vector<16x128xf32> to vector<128xf32>
    %218 = vector.shape_cast %217 : vector<128xf32> to vector<1x128xf32>
    %cst_38 = arith.constant 2.500000e-01 : f32
    %219 = vector.broadcast %cst_38 : f32 to vector<1x128xf32>
    %220 = arith.mulf %218, %219 : vector<1x128xf32>
    %221 = vector.extract_strided_slice %35 {offsets = [0, 128], sizes = [16, 128], strides = [1, 1]} : vector<16x512xf32> to vector<16x128xf32>
    %222 = arith.mulf %214, %221 : vector<16x128xf32>
    %cst_39 = arith.constant dense<0.000000e+00> : vector<128xf32>
    %223 = vector.multi_reduction <add>, %222, %cst_39 [0] : vector<16x128xf32> to vector<128xf32>
    %224 = vector.shape_cast %223 : vector<128xf32> to vector<1x128xf32>
    %cst_40 = arith.constant 2.500000e-01 : f32
    %225 = vector.broadcast %cst_40 : f32 to vector<1x128xf32>
    %226 = arith.mulf %224, %225 : vector<1x128xf32>
    %227 = vector.extract_strided_slice %35 {offsets = [0, 256], sizes = [16, 128], strides = [1, 1]} : vector<16x512xf32> to vector<16x128xf32>
    %228 = arith.mulf %214, %227 : vector<16x128xf32>
    %cst_41 = arith.constant dense<0.000000e+00> : vector<128xf32>
    %229 = vector.multi_reduction <add>, %228, %cst_41 [0] : vector<16x128xf32> to vector<128xf32>
    %230 = vector.shape_cast %229 : vector<128xf32> to vector<1x128xf32>
    %cst_42 = arith.constant 2.500000e-01 : f32
    %231 = vector.broadcast %cst_42 : f32 to vector<1x128xf32>
    %232 = arith.mulf %230, %231 : vector<1x128xf32>
    %233 = vector.extract_strided_slice %35 {offsets = [0, 384], sizes = [16, 128], strides = [1, 1]} : vector<16x512xf32> to vector<16x128xf32>
    %234 = arith.mulf %214, %233 : vector<16x128xf32>
    %cst_43 = arith.constant dense<0.000000e+00> : vector<128xf32>
    %235 = vector.multi_reduction <add>, %234, %cst_43 [0] : vector<16x128xf32> to vector<128xf32>
    %236 = vector.shape_cast %235 : vector<128xf32> to vector<1x128xf32>
    %cst_44 = arith.constant 2.500000e-01 : f32
    %237 = vector.broadcast %cst_44 : f32 to vector<1x128xf32>
    %238 = arith.mulf %236, %237 : vector<1x128xf32>
    %239 = arith.maximumf %220, %226 : vector<1x128xf32>
    %240 = arith.maximumf %239, %232 : vector<1x128xf32>
    %241 = arith.maximumf %240, %238 : vector<1x128xf32>
    %242 = arith.subf %220, %241 : vector<1x128xf32>
    %243 = math.exp %242 : vector<1x128xf32>
    %244 = arith.subf %226, %241 : vector<1x128xf32>
    %245 = math.exp %244 : vector<1x128xf32>
    %246 = arith.subf %232, %241 : vector<1x128xf32>
    %247 = math.exp %246 : vector<1x128xf32>
    %248 = arith.subf %238, %241 : vector<1x128xf32>
    %249 = math.exp %248 : vector<1x128xf32>
    %250 = arith.addf %243, %245 : vector<1x128xf32>
    %251 = arith.addf %250, %247 : vector<1x128xf32>
    %252 = arith.addf %251, %249 : vector<1x128xf32>
    %253 = tpu.reciprocal %252 {approx = true} : vector<1x128xf32> -> vector<1x128xf32>
    %254 = arith.mulf %243, %253 : vector<1x128xf32>
    %255 = vector.extract_strided_slice %36 {offsets = [0, 0], sizes = [16, 128], strides = [1, 1]} : vector<16x512xf32> to vector<16x128xf32>
    %256 = vector.broadcast %254 : vector<1x128xf32> to vector<16x128xf32>
    %257 = arith.mulf %256, %255 : vector<16x128xf32>
    %258 = arith.mulf %245, %253 : vector<1x128xf32>
    %259 = vector.extract_strided_slice %36 {offsets = [0, 128], sizes = [16, 128], strides = [1, 1]} : vector<16x512xf32> to vector<16x128xf32>
    %260 = vector.broadcast %258 : vector<1x128xf32> to vector<16x128xf32>
    %261 = arith.mulf %260, %259 : vector<16x128xf32>
    %262 = arith.addf %257, %261 : vector<16x128xf32>
    %263 = arith.mulf %247, %253 : vector<1x128xf32>
    %264 = vector.extract_strided_slice %36 {offsets = [0, 256], sizes = [16, 128], strides = [1, 1]} : vector<16x512xf32> to vector<16x128xf32>
    %265 = vector.broadcast %263 : vector<1x128xf32> to vector<16x128xf32>
    %266 = arith.mulf %265, %264 : vector<16x128xf32>
    %267 = arith.addf %262, %266 : vector<16x128xf32>
    %268 = arith.mulf %249, %253 : vector<1x128xf32>
    %269 = vector.extract_strided_slice %36 {offsets = [0, 384], sizes = [16, 128], strides = [1, 1]} : vector<16x512xf32> to vector<16x128xf32>
    %270 = vector.broadcast %268 : vector<1x128xf32> to vector<16x128xf32>
    %271 = arith.mulf %270, %269 : vector<16x128xf32>
    %272 = arith.addf %267, %271 : vector<16x128xf32>
    %273 = tpu.concatenate %95, %154, %213, %272 in 1 : vector<16x128xf32>, vector<16x128xf32>, vector<16x128xf32>, vector<16x128xf32> -> vector<16x512xf32>
    %274 = vector.extract_strided_slice %8 {offsets = [0, 0], sizes = [32, 16], strides = [1, 1]} : vector<32x32xbf16> to vector<32x16xbf16>
    %275 = arith.truncf %273 : vector<16x512xf32> to vector<16x512xbf16>
    %cst_45 = arith.constant dense<0.000000e+00> : vector<32x512xf32>
    %276 = tpu.matmul %274, %275, %cst_45 {dimension_numbers = #tpu.dot_dimension_numbers<[1], [0], [0], [1], [0, 0, 1, 1], [], []>} : vector<32x16xbf16>, vector<16x512xbf16>, vector<32x512xf32> -> vector<32x512xf32>
    %277 = vector.extract_strided_slice %33 {offsets = [16, 0], sizes = [16, 512], strides = [1, 1]} : vector<96x512xf32> to vector<16x512xf32>
    %278 = vector.extract_strided_slice %33 {offsets = [48, 0], sizes = [16, 512], strides = [1, 1]} : vector<96x512xf32> to vector<16x512xf32>
    %279 = vector.extract_strided_slice %33 {offsets = [80, 0], sizes = [16, 512], strides = [1, 1]} : vector<96x512xf32> to vector<16x512xf32>
    %280 = vector.extract_strided_slice %277 {offsets = [0, 0], sizes = [16, 128], strides = [1, 1]} : vector<16x512xf32> to vector<16x128xf32>
    %281 = vector.extract_strided_slice %278 {offsets = [0, 0], sizes = [16, 128], strides = [1, 1]} : vector<16x512xf32> to vector<16x128xf32>
    %282 = arith.mulf %280, %281 : vector<16x128xf32>
    %cst_46 = arith.constant dense<0.000000e+00> : vector<128xf32>
    %283 = vector.multi_reduction <add>, %282, %cst_46 [0] : vector<16x128xf32> to vector<128xf32>
    %284 = vector.shape_cast %283 : vector<128xf32> to vector<1x128xf32>
    %cst_47 = arith.constant 2.500000e-01 : f32
    %285 = vector.broadcast %cst_47 : f32 to vector<1x128xf32>
    %286 = arith.mulf %284, %285 : vector<1x128xf32>
    %287 = vector.extract_strided_slice %278 {offsets = [0, 128], sizes = [16, 128], strides = [1, 1]} : vector<16x512xf32> to vector<16x128xf32>
    %288 = arith.mulf %280, %287 : vector<16x128xf32>
    %cst_48 = arith.constant dense<0.000000e+00> : vector<128xf32>
    %289 = vector.multi_reduction <add>, %288, %cst_48 [0] : vector<16x128xf32> to vector<128xf32>
    %290 = vector.shape_cast %289 : vector<128xf32> to vector<1x128xf32>
    %cst_49 = arith.constant 2.500000e-01 : f32
    %291 = vector.broadcast %cst_49 : f32 to vector<1x128xf32>
    %292 = arith.mulf %290, %291 : vector<1x128xf32>
    %293 = vector.extract_strided_slice %278 {offsets = [0, 256], sizes = [16, 128], strides = [1, 1]} : vector<16x512xf32> to vector<16x128xf32>
    %294 = arith.mulf %280, %293 : vector<16x128xf32>
    %cst_50 = arith.constant dense<0.000000e+00> : vector<128xf32>
    %295 = vector.multi_reduction <add>, %294, %cst_50 [0] : vector<16x128xf32> to vector<128xf32>
    %296 = vector.shape_cast %295 : vector<128xf32> to vector<1x128xf32>
    %cst_51 = arith.constant 2.500000e-01 : f32
    %297 = vector.broadcast %cst_51 : f32 to vector<1x128xf32>
    %298 = arith.mulf %296, %297 : vector<1x128xf32>
    %299 = vector.extract_strided_slice %278 {offsets = [0, 384], sizes = [16, 128], strides = [1, 1]} : vector<16x512xf32> to vector<16x128xf32>
    %300 = arith.mulf %280, %299 : vector<16x128xf32>
    %cst_52 = arith.constant dense<0.000000e+00> : vector<128xf32>
    %301 = vector.multi_reduction <add>, %300, %cst_52 [0] : vector<16x128xf32> to vector<128xf32>
    %302 = vector.shape_cast %301 : vector<128xf32> to vector<1x128xf32>
    %cst_53 = arith.constant 2.500000e-01 : f32
    %303 = vector.broadcast %cst_53 : f32 to vector<1x128xf32>
    %304 = arith.mulf %302, %303 : vector<1x128xf32>
    %305 = arith.maximumf %286, %292 : vector<1x128xf32>
    %306 = arith.maximumf %305, %298 : vector<1x128xf32>
    %307 = arith.maximumf %306, %304 : vector<1x128xf32>
    %308 = arith.subf %286, %307 : vector<1x128xf32>
    %309 = math.exp %308 : vector<1x128xf32>
    %310 = arith.subf %292, %307 : vector<1x128xf32>
    %311 = math.exp %310 : vector<1x128xf32>
    %312 = arith.subf %298, %307 : vector<1x128xf32>
    %313 = math.exp %312 : vector<1x128xf32>
    %314 = arith.subf %304, %307 : vector<1x128xf32>
    %315 = math.exp %314 : vector<1x128xf32>
    %316 = arith.addf %309, %311 : vector<1x128xf32>
    %317 = arith.addf %316, %313 : vector<1x128xf32>
    %318 = arith.addf %317, %315 : vector<1x128xf32>
    %319 = tpu.reciprocal %318 {approx = true} : vector<1x128xf32> -> vector<1x128xf32>
    %320 = arith.mulf %309, %319 : vector<1x128xf32>
    %321 = vector.extract_strided_slice %279 {offsets = [0, 0], sizes = [16, 128], strides = [1, 1]} : vector<16x512xf32> to vector<16x128xf32>
    %322 = vector.broadcast %320 : vector<1x128xf32> to vector<16x128xf32>
    %323 = arith.mulf %322, %321 : vector<16x128xf32>
    %324 = arith.mulf %311, %319 : vector<1x128xf32>
    %325 = vector.extract_strided_slice %279 {offsets = [0, 128], sizes = [16, 128], strides = [1, 1]} : vector<16x512xf32> to vector<16x128xf32>
    %326 = vector.broadcast %324 : vector<1x128xf32> to vector<16x128xf32>
    %327 = arith.mulf %326, %325 : vector<16x128xf32>
    %328 = arith.addf %323, %327 : vector<16x128xf32>
    %329 = arith.mulf %313, %319 : vector<1x128xf32>
    %330 = vector.extract_strided_slice %279 {offsets = [0, 256], sizes = [16, 128], strides = [1, 1]} : vector<16x512xf32> to vector<16x128xf32>
    %331 = vector.broadcast %329 : vector<1x128xf32> to vector<16x128xf32>
    %332 = arith.mulf %331, %330 : vector<16x128xf32>
    %333 = arith.addf %328, %332 : vector<16x128xf32>
    %334 = arith.mulf %315, %319 : vector<1x128xf32>
    %335 = vector.extract_strided_slice %279 {offsets = [0, 384], sizes = [16, 128], strides = [1, 1]} : vector<16x512xf32> to vector<16x128xf32>
    %336 = vector.broadcast %334 : vector<1x128xf32> to vector<16x128xf32>
    %337 = arith.mulf %336, %335 : vector<16x128xf32>
    %338 = arith.addf %333, %337 : vector<16x128xf32>
    %339 = vector.extract_strided_slice %277 {offsets = [0, 128], sizes = [16, 128], strides = [1, 1]} : vector<16x512xf32> to vector<16x128xf32>
    %340 = vector.extract_strided_slice %278 {offsets = [0, 0], sizes = [16, 128], strides = [1, 1]} : vector<16x512xf32> to vector<16x128xf32>
    %341 = arith.mulf %339, %340 : vector<16x128xf32>
    %cst_54 = arith.constant dense<0.000000e+00> : vector<128xf32>
    %342 = vector.multi_reduction <add>, %341, %cst_54 [0] : vector<16x128xf32> to vector<128xf32>
    %343 = vector.shape_cast %342 : vector<128xf32> to vector<1x128xf32>
    %cst_55 = arith.constant 2.500000e-01 : f32
    %344 = vector.broadcast %cst_55 : f32 to vector<1x128xf32>
    %345 = arith.mulf %343, %344 : vector<1x128xf32>
    %346 = vector.extract_strided_slice %278 {offsets = [0, 128], sizes = [16, 128], strides = [1, 1]} : vector<16x512xf32> to vector<16x128xf32>
    %347 = arith.mulf %339, %346 : vector<16x128xf32>
    %cst_56 = arith.constant dense<0.000000e+00> : vector<128xf32>
    %348 = vector.multi_reduction <add>, %347, %cst_56 [0] : vector<16x128xf32> to vector<128xf32>
    %349 = vector.shape_cast %348 : vector<128xf32> to vector<1x128xf32>
    %cst_57 = arith.constant 2.500000e-01 : f32
    %350 = vector.broadcast %cst_57 : f32 to vector<1x128xf32>
    %351 = arith.mulf %349, %350 : vector<1x128xf32>
    %352 = vector.extract_strided_slice %278 {offsets = [0, 256], sizes = [16, 128], strides = [1, 1]} : vector<16x512xf32> to vector<16x128xf32>
    %353 = arith.mulf %339, %352 : vector<16x128xf32>
    %cst_58 = arith.constant dense<0.000000e+00> : vector<128xf32>
    %354 = vector.multi_reduction <add>, %353, %cst_58 [0] : vector<16x128xf32> to vector<128xf32>
    %355 = vector.shape_cast %354 : vector<128xf32> to vector<1x128xf32>
    %cst_59 = arith.constant 2.500000e-01 : f32
    %356 = vector.broadcast %cst_59 : f32 to vector<1x128xf32>
    %357 = arith.mulf %355, %356 : vector<1x128xf32>
    %358 = vector.extract_strided_slice %278 {offsets = [0, 384], sizes = [16, 128], strides = [1, 1]} : vector<16x512xf32> to vector<16x128xf32>
    %359 = arith.mulf %339, %358 : vector<16x128xf32>
    %cst_60 = arith.constant dense<0.000000e+00> : vector<128xf32>
    %360 = vector.multi_reduction <add>, %359, %cst_60 [0] : vector<16x128xf32> to vector<128xf32>
    %361 = vector.shape_cast %360 : vector<128xf32> to vector<1x128xf32>
    %cst_61 = arith.constant 2.500000e-01 : f32
    %362 = vector.broadcast %cst_61 : f32 to vector<1x128xf32>
    %363 = arith.mulf %361, %362 : vector<1x128xf32>
    %364 = arith.maximumf %345, %351 : vector<1x128xf32>
    %365 = arith.maximumf %364, %357 : vector<1x128xf32>
    %366 = arith.maximumf %365, %363 : vector<1x128xf32>
    %367 = arith.subf %345, %366 : vector<1x128xf32>
    %368 = math.exp %367 : vector<1x128xf32>
    %369 = arith.subf %351, %366 : vector<1x128xf32>
    %370 = math.exp %369 : vector<1x128xf32>
    %371 = arith.subf %357, %366 : vector<1x128xf32>
    %372 = math.exp %371 : vector<1x128xf32>
    %373 = arith.subf %363, %366 : vector<1x128xf32>
    %374 = math.exp %373 : vector<1x128xf32>
    %375 = arith.addf %368, %370 : vector<1x128xf32>
    %376 = arith.addf %375, %372 : vector<1x128xf32>
    %377 = arith.addf %376, %374 : vector<1x128xf32>
    %378 = tpu.reciprocal %377 {approx = true} : vector<1x128xf32> -> vector<1x128xf32>
    %379 = arith.mulf %368, %378 : vector<1x128xf32>
    %380 = vector.extract_strided_slice %279 {offsets = [0, 0], sizes = [16, 128], strides = [1, 1]} : vector<16x512xf32> to vector<16x128xf32>
    %381 = vector.broadcast %379 : vector<1x128xf32> to vector<16x128xf32>
    %382 = arith.mulf %381, %380 : vector<16x128xf32>
    %383 = arith.mulf %370, %378 : vector<1x128xf32>
    %384 = vector.extract_strided_slice %279 {offsets = [0, 128], sizes = [16, 128], strides = [1, 1]} : vector<16x512xf32> to vector<16x128xf32>
    %385 = vector.broadcast %383 : vector<1x128xf32> to vector<16x128xf32>
    %386 = arith.mulf %385, %384 : vector<16x128xf32>
    %387 = arith.addf %382, %386 : vector<16x128xf32>
    %388 = arith.mulf %372, %378 : vector<1x128xf32>
    %389 = vector.extract_strided_slice %279 {offsets = [0, 256], sizes = [16, 128], strides = [1, 1]} : vector<16x512xf32> to vector<16x128xf32>
    %390 = vector.broadcast %388 : vector<1x128xf32> to vector<16x128xf32>
    %391 = arith.mulf %390, %389 : vector<16x128xf32>
    %392 = arith.addf %387, %391 : vector<16x128xf32>
    %393 = arith.mulf %374, %378 : vector<1x128xf32>
    %394 = vector.extract_strided_slice %279 {offsets = [0, 384], sizes = [16, 128], strides = [1, 1]} : vector<16x512xf32> to vector<16x128xf32>
    %395 = vector.broadcast %393 : vector<1x128xf32> to vector<16x128xf32>
    %396 = arith.mulf %395, %394 : vector<16x128xf32>
    %397 = arith.addf %392, %396 : vector<16x128xf32>
    %398 = vector.extract_strided_slice %277 {offsets = [0, 256], sizes = [16, 128], strides = [1, 1]} : vector<16x512xf32> to vector<16x128xf32>
    %399 = vector.extract_strided_slice %278 {offsets = [0, 0], sizes = [16, 128], strides = [1, 1]} : vector<16x512xf32> to vector<16x128xf32>
    %400 = arith.mulf %398, %399 : vector<16x128xf32>
    %cst_62 = arith.constant dense<0.000000e+00> : vector<128xf32>
    %401 = vector.multi_reduction <add>, %400, %cst_62 [0] : vector<16x128xf32> to vector<128xf32>
    %402 = vector.shape_cast %401 : vector<128xf32> to vector<1x128xf32>
    %cst_63 = arith.constant 2.500000e-01 : f32
    %403 = vector.broadcast %cst_63 : f32 to vector<1x128xf32>
    %404 = arith.mulf %402, %403 : vector<1x128xf32>
    %405 = vector.extract_strided_slice %278 {offsets = [0, 128], sizes = [16, 128], strides = [1, 1]} : vector<16x512xf32> to vector<16x128xf32>
    %406 = arith.mulf %398, %405 : vector<16x128xf32>
    %cst_64 = arith.constant dense<0.000000e+00> : vector<128xf32>
    %407 = vector.multi_reduction <add>, %406, %cst_64 [0] : vector<16x128xf32> to vector<128xf32>
    %408 = vector.shape_cast %407 : vector<128xf32> to vector<1x128xf32>
    %cst_65 = arith.constant 2.500000e-01 : f32
    %409 = vector.broadcast %cst_65 : f32 to vector<1x128xf32>
    %410 = arith.mulf %408, %409 : vector<1x128xf32>
    %411 = vector.extract_strided_slice %278 {offsets = [0, 256], sizes = [16, 128], strides = [1, 1]} : vector<16x512xf32> to vector<16x128xf32>
    %412 = arith.mulf %398, %411 : vector<16x128xf32>
    %cst_66 = arith.constant dense<0.000000e+00> : vector<128xf32>
    %413 = vector.multi_reduction <add>, %412, %cst_66 [0] : vector<16x128xf32> to vector<128xf32>
    %414 = vector.shape_cast %413 : vector<128xf32> to vector<1x128xf32>
    %cst_67 = arith.constant 2.500000e-01 : f32
    %415 = vector.broadcast %cst_67 : f32 to vector<1x128xf32>
    %416 = arith.mulf %414, %415 : vector<1x128xf32>
    %417 = vector.extract_strided_slice %278 {offsets = [0, 384], sizes = [16, 128], strides = [1, 1]} : vector<16x512xf32> to vector<16x128xf32>
    %418 = arith.mulf %398, %417 : vector<16x128xf32>
    %cst_68 = arith.constant dense<0.000000e+00> : vector<128xf32>
    %419 = vector.multi_reduction <add>, %418, %cst_68 [0] : vector<16x128xf32> to vector<128xf32>
    %420 = vector.shape_cast %419 : vector<128xf32> to vector<1x128xf32>
    %cst_69 = arith.constant 2.500000e-01 : f32
    %421 = vector.broadcast %cst_69 : f32 to vector<1x128xf32>
    %422 = arith.mulf %420, %421 : vector<1x128xf32>
    %423 = arith.maximumf %404, %410 : vector<1x128xf32>
    %424 = arith.maximumf %423, %416 : vector<1x128xf32>
    %425 = arith.maximumf %424, %422 : vector<1x128xf32>
    %426 = arith.subf %404, %425 : vector<1x128xf32>
    %427 = math.exp %426 : vector<1x128xf32>
    %428 = arith.subf %410, %425 : vector<1x128xf32>
    %429 = math.exp %428 : vector<1x128xf32>
    %430 = arith.subf %416, %425 : vector<1x128xf32>
    %431 = math.exp %430 : vector<1x128xf32>
    %432 = arith.subf %422, %425 : vector<1x128xf32>
    %433 = math.exp %432 : vector<1x128xf32>
    %434 = arith.addf %427, %429 : vector<1x128xf32>
    %435 = arith.addf %434, %431 : vector<1x128xf32>
    %436 = arith.addf %435, %433 : vector<1x128xf32>
    %437 = tpu.reciprocal %436 {approx = true} : vector<1x128xf32> -> vector<1x128xf32>
    %438 = arith.mulf %427, %437 : vector<1x128xf32>
    %439 = vector.extract_strided_slice %279 {offsets = [0, 0], sizes = [16, 128], strides = [1, 1]} : vector<16x512xf32> to vector<16x128xf32>
    %440 = vector.broadcast %438 : vector<1x128xf32> to vector<16x128xf32>
    %441 = arith.mulf %440, %439 : vector<16x128xf32>
    %442 = arith.mulf %429, %437 : vector<1x128xf32>
    %443 = vector.extract_strided_slice %279 {offsets = [0, 128], sizes = [16, 128], strides = [1, 1]} : vector<16x512xf32> to vector<16x128xf32>
    %444 = vector.broadcast %442 : vector<1x128xf32> to vector<16x128xf32>
    %445 = arith.mulf %444, %443 : vector<16x128xf32>
    %446 = arith.addf %441, %445 : vector<16x128xf32>
    %447 = arith.mulf %431, %437 : vector<1x128xf32>
    %448 = vector.extract_strided_slice %279 {offsets = [0, 256], sizes = [16, 128], strides = [1, 1]} : vector<16x512xf32> to vector<16x128xf32>
    %449 = vector.broadcast %447 : vector<1x128xf32> to vector<16x128xf32>
    %450 = arith.mulf %449, %448 : vector<16x128xf32>
    %451 = arith.addf %446, %450 : vector<16x128xf32>
    %452 = arith.mulf %433, %437 : vector<1x128xf32>
    %453 = vector.extract_strided_slice %279 {offsets = [0, 384], sizes = [16, 128], strides = [1, 1]} : vector<16x512xf32> to vector<16x128xf32>
    %454 = vector.broadcast %452 : vector<1x128xf32> to vector<16x128xf32>
    %455 = arith.mulf %454, %453 : vector<16x128xf32>
    %456 = arith.addf %451, %455 : vector<16x128xf32>
    %457 = vector.extract_strided_slice %277 {offsets = [0, 384], sizes = [16, 128], strides = [1, 1]} : vector<16x512xf32> to vector<16x128xf32>
    %458 = vector.extract_strided_slice %278 {offsets = [0, 0], sizes = [16, 128], strides = [1, 1]} : vector<16x512xf32> to vector<16x128xf32>
    %459 = arith.mulf %457, %458 : vector<16x128xf32>
    %cst_70 = arith.constant dense<0.000000e+00> : vector<128xf32>
    %460 = vector.multi_reduction <add>, %459, %cst_70 [0] : vector<16x128xf32> to vector<128xf32>
    %461 = vector.shape_cast %460 : vector<128xf32> to vector<1x128xf32>
    %cst_71 = arith.constant 2.500000e-01 : f32
    %462 = vector.broadcast %cst_71 : f32 to vector<1x128xf32>
    %463 = arith.mulf %461, %462 : vector<1x128xf32>
    %464 = vector.extract_strided_slice %278 {offsets = [0, 128], sizes = [16, 128], strides = [1, 1]} : vector<16x512xf32> to vector<16x128xf32>
    %465 = arith.mulf %457, %464 : vector<16x128xf32>
    %cst_72 = arith.constant dense<0.000000e+00> : vector<128xf32>
    %466 = vector.multi_reduction <add>, %465, %cst_72 [0] : vector<16x128xf32> to vector<128xf32>
    %467 = vector.shape_cast %466 : vector<128xf32> to vector<1x128xf32>
    %cst_73 = arith.constant 2.500000e-01 : f32
    %468 = vector.broadcast %cst_73 : f32 to vector<1x128xf32>
    %469 = arith.mulf %467, %468 : vector<1x128xf32>
    %470 = vector.extract_strided_slice %278 {offsets = [0, 256], sizes = [16, 128], strides = [1, 1]} : vector<16x512xf32> to vector<16x128xf32>
    %471 = arith.mulf %457, %470 : vector<16x128xf32>
    %cst_74 = arith.constant dense<0.000000e+00> : vector<128xf32>
    %472 = vector.multi_reduction <add>, %471, %cst_74 [0] : vector<16x128xf32> to vector<128xf32>
    %473 = vector.shape_cast %472 : vector<128xf32> to vector<1x128xf32>
    %cst_75 = arith.constant 2.500000e-01 : f32
    %474 = vector.broadcast %cst_75 : f32 to vector<1x128xf32>
    %475 = arith.mulf %473, %474 : vector<1x128xf32>
    %476 = vector.extract_strided_slice %278 {offsets = [0, 384], sizes = [16, 128], strides = [1, 1]} : vector<16x512xf32> to vector<16x128xf32>
    %477 = arith.mulf %457, %476 : vector<16x128xf32>
    %cst_76 = arith.constant dense<0.000000e+00> : vector<128xf32>
    %478 = vector.multi_reduction <add>, %477, %cst_76 [0] : vector<16x128xf32> to vector<128xf32>
    %479 = vector.shape_cast %478 : vector<128xf32> to vector<1x128xf32>
    %cst_77 = arith.constant 2.500000e-01 : f32
    %480 = vector.broadcast %cst_77 : f32 to vector<1x128xf32>
    %481 = arith.mulf %479, %480 : vector<1x128xf32>
    %482 = arith.maximumf %463, %469 : vector<1x128xf32>
    %483 = arith.maximumf %482, %475 : vector<1x128xf32>
    %484 = arith.maximumf %483, %481 : vector<1x128xf32>
    %485 = arith.subf %463, %484 : vector<1x128xf32>
    %486 = math.exp %485 : vector<1x128xf32>
    %487 = arith.subf %469, %484 : vector<1x128xf32>
    %488 = math.exp %487 : vector<1x128xf32>
    %489 = arith.subf %475, %484 : vector<1x128xf32>
    %490 = math.exp %489 : vector<1x128xf32>
    %491 = arith.subf %481, %484 : vector<1x128xf32>
    %492 = math.exp %491 : vector<1x128xf32>
    %493 = arith.addf %486, %488 : vector<1x128xf32>
    %494 = arith.addf %493, %490 : vector<1x128xf32>
    %495 = arith.addf %494, %492 : vector<1x128xf32>
    %496 = tpu.reciprocal %495 {approx = true} : vector<1x128xf32> -> vector<1x128xf32>
    %497 = arith.mulf %486, %496 : vector<1x128xf32>
    %498 = vector.extract_strided_slice %279 {offsets = [0, 0], sizes = [16, 128], strides = [1, 1]} : vector<16x512xf32> to vector<16x128xf32>
    %499 = vector.broadcast %497 : vector<1x128xf32> to vector<16x128xf32>
    %500 = arith.mulf %499, %498 : vector<16x128xf32>
    %501 = arith.mulf %488, %496 : vector<1x128xf32>
    %502 = vector.extract_strided_slice %279 {offsets = [0, 128], sizes = [16, 128], strides = [1, 1]} : vector<16x512xf32> to vector<16x128xf32>
    %503 = vector.broadcast %501 : vector<1x128xf32> to vector<16x128xf32>
    %504 = arith.mulf %503, %502 : vector<16x128xf32>
    %505 = arith.addf %500, %504 : vector<16x128xf32>
    %506 = arith.mulf %490, %496 : vector<1x128xf32>
    %507 = vector.extract_strided_slice %279 {offsets = [0, 256], sizes = [16, 128], strides = [1, 1]} : vector<16x512xf32> to vector<16x128xf32>
    %508 = vector.broadcast %506 : vector<1x128xf32> to vector<16x128xf32>
    %509 = arith.mulf %508, %507 : vector<16x128xf32>
    %510 = arith.addf %505, %509 : vector<16x128xf32>
    %511 = arith.mulf %492, %496 : vector<1x128xf32>
    %512 = vector.extract_strided_slice %279 {offsets = [0, 384], sizes = [16, 128], strides = [1, 1]} : vector<16x512xf32> to vector<16x128xf32>
    %513 = vector.broadcast %511 : vector<1x128xf32> to vector<16x128xf32>
    %514 = arith.mulf %513, %512 : vector<16x128xf32>
    %515 = arith.addf %510, %514 : vector<16x128xf32>
    %516 = tpu.concatenate %338, %397, %456, %515 in 1 : vector<16x128xf32>, vector<16x128xf32>, vector<16x128xf32>, vector<16x128xf32> -> vector<16x512xf32>
    %517 = vector.extract_strided_slice %8 {offsets = [0, 16], sizes = [32, 16], strides = [1, 1]} : vector<32x32xbf16> to vector<32x16xbf16>
    %518 = arith.truncf %516 : vector<16x512xf32> to vector<16x512xbf16>
    %cst_78 = arith.constant dense<0.000000e+00> : vector<32x512xf32>
    %519 = tpu.matmul %517, %518, %cst_78 {dimension_numbers = #tpu.dot_dimension_numbers<[1], [0], [0], [1], [0, 0, 1, 1], [], []>} : vector<32x16xbf16>, vector<16x512xbf16>, vector<32x512xf32> -> vector<32x512xf32>
    %520 = arith.addf %276, %519 : vector<32x512xf32>
    %521 = vector.broadcast %9 : vector<32x1xf32> to vector<32x512xf32>
    %522 = arith.addf %520, %521 : vector<32x512xf32>
    %523 = arith.addf %522, %1 : vector<32x512xf32>
    %524 = vector.extract_strided_slice %2 {offsets = [64, 0], sizes = [32, 1], strides = [1, 1]} : vector<544x1xf32> to vector<32x1xf32>
    %525 = vector.extract_strided_slice %2 {offsets = [96, 0], sizes = [32, 1], strides = [1, 1]} : vector<544x1xf32> to vector<32x1xf32>
    %526 = vector.extract_strided_slice %3 {offsets = [128, 0], sizes = [96, 32], strides = [1, 1]} : vector<512x32xbf16> to vector<96x32xbf16>
    %527 = vector.extract_strided_slice %3 {offsets = [224, 0], sizes = [32, 32], strides = [1, 1]} : vector<512x32xbf16> to vector<32x32xbf16>
    %528 = vector.extract_strided_slice %2 {offsets = [224, 0], sizes = [32, 1], strides = [1, 1]} : vector<544x1xf32> to vector<32x1xf32>
    %cst_79 = arith.constant dense<0.000000e+00> : vector<512xf32>
    %529 = vector.multi_reduction <add>, %523, %cst_79 [0] : vector<32x512xf32> to vector<512xf32>
    %530 = vector.shape_cast %529 : vector<512xf32> to vector<1x512xf32>
    %cst_80 = arith.constant 3.200000e+01 : f32
    %531 = vector.broadcast %cst_80 : f32 to vector<1x512xf32>
    %532 = arith.divf %530, %531 : vector<1x512xf32>
    %533 = vector.broadcast %532 : vector<1x512xf32> to vector<32x512xf32>
    %534 = arith.subf %523, %533 : vector<32x512xf32>
    %535 = arith.mulf %534, %534 : vector<32x512xf32>
    %cst_81 = arith.constant dense<0.000000e+00> : vector<512xf32>
    %536 = vector.multi_reduction <add>, %535, %cst_81 [0] : vector<32x512xf32> to vector<512xf32>
    %537 = vector.shape_cast %536 : vector<512xf32> to vector<1x512xf32>
    %cst_82 = arith.constant 3.200000e+01 : f32
    %538 = vector.broadcast %cst_82 : f32 to vector<1x512xf32>
    %539 = arith.divf %537, %538 : vector<1x512xf32>
    %540 = vector.broadcast %532 : vector<1x512xf32> to vector<32x512xf32>
    %541 = arith.subf %523, %540 : vector<32x512xf32>
    %cst_83 = arith.constant 9.99999974E-6 : f32
    %542 = vector.broadcast %cst_83 : f32 to vector<1x512xf32>
    %543 = arith.addf %539, %542 : vector<1x512xf32>
    %544 = math.rsqrt %543 : vector<1x512xf32>
    %545 = vector.broadcast %544 : vector<1x512xf32> to vector<32x512xf32>
    %546 = arith.mulf %541, %545 : vector<32x512xf32>
    %547 = vector.broadcast %524 : vector<32x1xf32> to vector<32x512xf32>
    %548 = arith.mulf %546, %547 : vector<32x512xf32>
    %549 = vector.broadcast %525 : vector<32x1xf32> to vector<32x512xf32>
    %550 = arith.addf %548, %549 : vector<32x512xf32>
    %551 = arith.truncf %550 : vector<32x512xf32> to vector<32x512xbf16>
    %cst_84 = arith.constant dense<0.000000e+00> : vector<96x512xf32>
    %552 = tpu.matmul %526, %551, %cst_84 {dimension_numbers = #tpu.dot_dimension_numbers<[1], [0], [0], [1], [0, 0, 1, 1], [], []>} : vector<96x32xbf16>, vector<32x512xbf16>, vector<96x512xf32> -> vector<96x512xf32>
    %553 = vector.extract_strided_slice %552 {offsets = [0, 0], sizes = [16, 512], strides = [1, 1]} : vector<96x512xf32> to vector<16x512xf32>
    %554 = vector.extract_strided_slice %552 {offsets = [32, 0], sizes = [16, 512], strides = [1, 1]} : vector<96x512xf32> to vector<16x512xf32>
    %555 = vector.extract_strided_slice %552 {offsets = [64, 0], sizes = [16, 512], strides = [1, 1]} : vector<96x512xf32> to vector<16x512xf32>
    %556 = vector.extract_strided_slice %553 {offsets = [0, 0], sizes = [16, 128], strides = [1, 1]} : vector<16x512xf32> to vector<16x128xf32>
    %557 = vector.extract_strided_slice %554 {offsets = [0, 0], sizes = [16, 128], strides = [1, 1]} : vector<16x512xf32> to vector<16x128xf32>
    %558 = arith.mulf %556, %557 : vector<16x128xf32>
    %cst_85 = arith.constant dense<0.000000e+00> : vector<128xf32>
    %559 = vector.multi_reduction <add>, %558, %cst_85 [0] : vector<16x128xf32> to vector<128xf32>
    %560 = vector.shape_cast %559 : vector<128xf32> to vector<1x128xf32>
    %cst_86 = arith.constant 2.500000e-01 : f32
    %561 = vector.broadcast %cst_86 : f32 to vector<1x128xf32>
    %562 = arith.mulf %560, %561 : vector<1x128xf32>
    %563 = vector.extract_strided_slice %554 {offsets = [0, 128], sizes = [16, 128], strides = [1, 1]} : vector<16x512xf32> to vector<16x128xf32>
    %564 = arith.mulf %556, %563 : vector<16x128xf32>
    %cst_87 = arith.constant dense<0.000000e+00> : vector<128xf32>
    %565 = vector.multi_reduction <add>, %564, %cst_87 [0] : vector<16x128xf32> to vector<128xf32>
    %566 = vector.shape_cast %565 : vector<128xf32> to vector<1x128xf32>
    %cst_88 = arith.constant 2.500000e-01 : f32
    %567 = vector.broadcast %cst_88 : f32 to vector<1x128xf32>
    %568 = arith.mulf %566, %567 : vector<1x128xf32>
    %569 = vector.extract_strided_slice %554 {offsets = [0, 256], sizes = [16, 128], strides = [1, 1]} : vector<16x512xf32> to vector<16x128xf32>
    %570 = arith.mulf %556, %569 : vector<16x128xf32>
    %cst_89 = arith.constant dense<0.000000e+00> : vector<128xf32>
    %571 = vector.multi_reduction <add>, %570, %cst_89 [0] : vector<16x128xf32> to vector<128xf32>
    %572 = vector.shape_cast %571 : vector<128xf32> to vector<1x128xf32>
    %cst_90 = arith.constant 2.500000e-01 : f32
    %573 = vector.broadcast %cst_90 : f32 to vector<1x128xf32>
    %574 = arith.mulf %572, %573 : vector<1x128xf32>
    %575 = vector.extract_strided_slice %554 {offsets = [0, 384], sizes = [16, 128], strides = [1, 1]} : vector<16x512xf32> to vector<16x128xf32>
    %576 = arith.mulf %556, %575 : vector<16x128xf32>
    %cst_91 = arith.constant dense<0.000000e+00> : vector<128xf32>
    %577 = vector.multi_reduction <add>, %576, %cst_91 [0] : vector<16x128xf32> to vector<128xf32>
    %578 = vector.shape_cast %577 : vector<128xf32> to vector<1x128xf32>
    %cst_92 = arith.constant 2.500000e-01 : f32
    %579 = vector.broadcast %cst_92 : f32 to vector<1x128xf32>
    %580 = arith.mulf %578, %579 : vector<1x128xf32>
    %581 = arith.maximumf %562, %568 : vector<1x128xf32>
    %582 = arith.maximumf %581, %574 : vector<1x128xf32>
    %583 = arith.maximumf %582, %580 : vector<1x128xf32>
    %584 = arith.subf %562, %583 : vector<1x128xf32>
    %585 = math.exp %584 : vector<1x128xf32>
    %586 = arith.subf %568, %583 : vector<1x128xf32>
    %587 = math.exp %586 : vector<1x128xf32>
    %588 = arith.subf %574, %583 : vector<1x128xf32>
    %589 = math.exp %588 : vector<1x128xf32>
    %590 = arith.subf %580, %583 : vector<1x128xf32>
    %591 = math.exp %590 : vector<1x128xf32>
    %592 = arith.addf %585, %587 : vector<1x128xf32>
    %593 = arith.addf %592, %589 : vector<1x128xf32>
    %594 = arith.addf %593, %591 : vector<1x128xf32>
    %595 = tpu.reciprocal %594 {approx = true} : vector<1x128xf32> -> vector<1x128xf32>
    %596 = arith.mulf %585, %595 : vector<1x128xf32>
    %597 = vector.extract_strided_slice %555 {offsets = [0, 0], sizes = [16, 128], strides = [1, 1]} : vector<16x512xf32> to vector<16x128xf32>
    %598 = vector.broadcast %596 : vector<1x128xf32> to vector<16x128xf32>
    %599 = arith.mulf %598, %597 : vector<16x128xf32>
    %600 = arith.mulf %587, %595 : vector<1x128xf32>
    %601 = vector.extract_strided_slice %555 {offsets = [0, 128], sizes = [16, 128], strides = [1, 1]} : vector<16x512xf32> to vector<16x128xf32>
    %602 = vector.broadcast %600 : vector<1x128xf32> to vector<16x128xf32>
    %603 = arith.mulf %602, %601 : vector<16x128xf32>
    %604 = arith.addf %599, %603 : vector<16x128xf32>
    %605 = arith.mulf %589, %595 : vector<1x128xf32>
    %606 = vector.extract_strided_slice %555 {offsets = [0, 256], sizes = [16, 128], strides = [1, 1]} : vector<16x512xf32> to vector<16x128xf32>
    %607 = vector.broadcast %605 : vector<1x128xf32> to vector<16x128xf32>
    %608 = arith.mulf %607, %606 : vector<16x128xf32>
    %609 = arith.addf %604, %608 : vector<16x128xf32>
    %610 = arith.mulf %591, %595 : vector<1x128xf32>
    %611 = vector.extract_strided_slice %555 {offsets = [0, 384], sizes = [16, 128], strides = [1, 1]} : vector<16x512xf32> to vector<16x128xf32>
    %612 = vector.broadcast %610 : vector<1x128xf32> to vector<16x128xf32>
    %613 = arith.mulf %612, %611 : vector<16x128xf32>
    %614 = arith.addf %609, %613 : vector<16x128xf32>
    %615 = vector.extract_strided_slice %553 {offsets = [0, 128], sizes = [16, 128], strides = [1, 1]} : vector<16x512xf32> to vector<16x128xf32>
    %616 = vector.extract_strided_slice %554 {offsets = [0, 0], sizes = [16, 128], strides = [1, 1]} : vector<16x512xf32> to vector<16x128xf32>
    %617 = arith.mulf %615, %616 : vector<16x128xf32>
    %cst_93 = arith.constant dense<0.000000e+00> : vector<128xf32>
    %618 = vector.multi_reduction <add>, %617, %cst_93 [0] : vector<16x128xf32> to vector<128xf32>
    %619 = vector.shape_cast %618 : vector<128xf32> to vector<1x128xf32>
    %cst_94 = arith.constant 2.500000e-01 : f32
    %620 = vector.broadcast %cst_94 : f32 to vector<1x128xf32>
    %621 = arith.mulf %619, %620 : vector<1x128xf32>
    %622 = vector.extract_strided_slice %554 {offsets = [0, 128], sizes = [16, 128], strides = [1, 1]} : vector<16x512xf32> to vector<16x128xf32>
    %623 = arith.mulf %615, %622 : vector<16x128xf32>
    %cst_95 = arith.constant dense<0.000000e+00> : vector<128xf32>
    %624 = vector.multi_reduction <add>, %623, %cst_95 [0] : vector<16x128xf32> to vector<128xf32>
    %625 = vector.shape_cast %624 : vector<128xf32> to vector<1x128xf32>
    %cst_96 = arith.constant 2.500000e-01 : f32
    %626 = vector.broadcast %cst_96 : f32 to vector<1x128xf32>
    %627 = arith.mulf %625, %626 : vector<1x128xf32>
    %628 = vector.extract_strided_slice %554 {offsets = [0, 256], sizes = [16, 128], strides = [1, 1]} : vector<16x512xf32> to vector<16x128xf32>
    %629 = arith.mulf %615, %628 : vector<16x128xf32>
    %cst_97 = arith.constant dense<0.000000e+00> : vector<128xf32>
    %630 = vector.multi_reduction <add>, %629, %cst_97 [0] : vector<16x128xf32> to vector<128xf32>
    %631 = vector.shape_cast %630 : vector<128xf32> to vector<1x128xf32>
    %cst_98 = arith.constant 2.500000e-01 : f32
    %632 = vector.broadcast %cst_98 : f32 to vector<1x128xf32>
    %633 = arith.mulf %631, %632 : vector<1x128xf32>
    %634 = vector.extract_strided_slice %554 {offsets = [0, 384], sizes = [16, 128], strides = [1, 1]} : vector<16x512xf32> to vector<16x128xf32>
    %635 = arith.mulf %615, %634 : vector<16x128xf32>
    %cst_99 = arith.constant dense<0.000000e+00> : vector<128xf32>
    %636 = vector.multi_reduction <add>, %635, %cst_99 [0] : vector<16x128xf32> to vector<128xf32>
    %637 = vector.shape_cast %636 : vector<128xf32> to vector<1x128xf32>
    %cst_100 = arith.constant 2.500000e-01 : f32
    %638 = vector.broadcast %cst_100 : f32 to vector<1x128xf32>
    %639 = arith.mulf %637, %638 : vector<1x128xf32>
    %640 = arith.maximumf %621, %627 : vector<1x128xf32>
    %641 = arith.maximumf %640, %633 : vector<1x128xf32>
    %642 = arith.maximumf %641, %639 : vector<1x128xf32>
    %643 = arith.subf %621, %642 : vector<1x128xf32>
    %644 = math.exp %643 : vector<1x128xf32>
    %645 = arith.subf %627, %642 : vector<1x128xf32>
    %646 = math.exp %645 : vector<1x128xf32>
    %647 = arith.subf %633, %642 : vector<1x128xf32>
    %648 = math.exp %647 : vector<1x128xf32>
    %649 = arith.subf %639, %642 : vector<1x128xf32>
    %650 = math.exp %649 : vector<1x128xf32>
    %651 = arith.addf %644, %646 : vector<1x128xf32>
    %652 = arith.addf %651, %648 : vector<1x128xf32>
    %653 = arith.addf %652, %650 : vector<1x128xf32>
    %654 = tpu.reciprocal %653 {approx = true} : vector<1x128xf32> -> vector<1x128xf32>
    %655 = arith.mulf %644, %654 : vector<1x128xf32>
    %656 = vector.extract_strided_slice %555 {offsets = [0, 0], sizes = [16, 128], strides = [1, 1]} : vector<16x512xf32> to vector<16x128xf32>
    %657 = vector.broadcast %655 : vector<1x128xf32> to vector<16x128xf32>
    %658 = arith.mulf %657, %656 : vector<16x128xf32>
    %659 = arith.mulf %646, %654 : vector<1x128xf32>
    %660 = vector.extract_strided_slice %555 {offsets = [0, 128], sizes = [16, 128], strides = [1, 1]} : vector<16x512xf32> to vector<16x128xf32>
    %661 = vector.broadcast %659 : vector<1x128xf32> to vector<16x128xf32>
    %662 = arith.mulf %661, %660 : vector<16x128xf32>
    %663 = arith.addf %658, %662 : vector<16x128xf32>
    %664 = arith.mulf %648, %654 : vector<1x128xf32>
    %665 = vector.extract_strided_slice %555 {offsets = [0, 256], sizes = [16, 128], strides = [1, 1]} : vector<16x512xf32> to vector<16x128xf32>
    %666 = vector.broadcast %664 : vector<1x128xf32> to vector<16x128xf32>
    %667 = arith.mulf %666, %665 : vector<16x128xf32>
    %668 = arith.addf %663, %667 : vector<16x128xf32>
    %669 = arith.mulf %650, %654 : vector<1x128xf32>
    %670 = vector.extract_strided_slice %555 {offsets = [0, 384], sizes = [16, 128], strides = [1, 1]} : vector<16x512xf32> to vector<16x128xf32>
    %671 = vector.broadcast %669 : vector<1x128xf32> to vector<16x128xf32>
    %672 = arith.mulf %671, %670 : vector<16x128xf32>
    %673 = arith.addf %668, %672 : vector<16x128xf32>
    %674 = vector.extract_strided_slice %553 {offsets = [0, 256], sizes = [16, 128], strides = [1, 1]} : vector<16x512xf32> to vector<16x128xf32>
    %675 = vector.extract_strided_slice %554 {offsets = [0, 0], sizes = [16, 128], strides = [1, 1]} : vector<16x512xf32> to vector<16x128xf32>
    %676 = arith.mulf %674, %675 : vector<16x128xf32>
    %cst_101 = arith.constant dense<0.000000e+00> : vector<128xf32>
    %677 = vector.multi_reduction <add>, %676, %cst_101 [0] : vector<16x128xf32> to vector<128xf32>
    %678 = vector.shape_cast %677 : vector<128xf32> to vector<1x128xf32>
    %cst_102 = arith.constant 2.500000e-01 : f32
    %679 = vector.broadcast %cst_102 : f32 to vector<1x128xf32>
    %680 = arith.mulf %678, %679 : vector<1x128xf32>
    %681 = vector.extract_strided_slice %554 {offsets = [0, 128], sizes = [16, 128], strides = [1, 1]} : vector<16x512xf32> to vector<16x128xf32>
    %682 = arith.mulf %674, %681 : vector<16x128xf32>
    %cst_103 = arith.constant dense<0.000000e+00> : vector<128xf32>
    %683 = vector.multi_reduction <add>, %682, %cst_103 [0] : vector<16x128xf32> to vector<128xf32>
    %684 = vector.shape_cast %683 : vector<128xf32> to vector<1x128xf32>
    %cst_104 = arith.constant 2.500000e-01 : f32
    %685 = vector.broadcast %cst_104 : f32 to vector<1x128xf32>
    %686 = arith.mulf %684, %685 : vector<1x128xf32>
    %687 = vector.extract_strided_slice %554 {offsets = [0, 256], sizes = [16, 128], strides = [1, 1]} : vector<16x512xf32> to vector<16x128xf32>
    %688 = arith.mulf %674, %687 : vector<16x128xf32>
    %cst_105 = arith.constant dense<0.000000e+00> : vector<128xf32>
    %689 = vector.multi_reduction <add>, %688, %cst_105 [0] : vector<16x128xf32> to vector<128xf32>
    %690 = vector.shape_cast %689 : vector<128xf32> to vector<1x128xf32>
    %cst_106 = arith.constant 2.500000e-01 : f32
    %691 = vector.broadcast %cst_106 : f32 to vector<1x128xf32>
    %692 = arith.mulf %690, %691 : vector<1x128xf32>
    %693 = vector.extract_strided_slice %554 {offsets = [0, 384], sizes = [16, 128], strides = [1, 1]} : vector<16x512xf32> to vector<16x128xf32>
    %694 = arith.mulf %674, %693 : vector<16x128xf32>
    %cst_107 = arith.constant dense<0.000000e+00> : vector<128xf32>
    %695 = vector.multi_reduction <add>, %694, %cst_107 [0] : vector<16x128xf32> to vector<128xf32>
    %696 = vector.shape_cast %695 : vector<128xf32> to vector<1x128xf32>
    %cst_108 = arith.constant 2.500000e-01 : f32
    %697 = vector.broadcast %cst_108 : f32 to vector<1x128xf32>
    %698 = arith.mulf %696, %697 : vector<1x128xf32>
    %699 = arith.maximumf %680, %686 : vector<1x128xf32>
    %700 = arith.maximumf %699, %692 : vector<1x128xf32>
    %701 = arith.maximumf %700, %698 : vector<1x128xf32>
    %702 = arith.subf %680, %701 : vector<1x128xf32>
    %703 = math.exp %702 : vector<1x128xf32>
    %704 = arith.subf %686, %701 : vector<1x128xf32>
    %705 = math.exp %704 : vector<1x128xf32>
    %706 = arith.subf %692, %701 : vector<1x128xf32>
    %707 = math.exp %706 : vector<1x128xf32>
    %708 = arith.subf %698, %701 : vector<1x128xf32>
    %709 = math.exp %708 : vector<1x128xf32>
    %710 = arith.addf %703, %705 : vector<1x128xf32>
    %711 = arith.addf %710, %707 : vector<1x128xf32>
    %712 = arith.addf %711, %709 : vector<1x128xf32>
    %713 = tpu.reciprocal %712 {approx = true} : vector<1x128xf32> -> vector<1x128xf32>
    %714 = arith.mulf %703, %713 : vector<1x128xf32>
    %715 = vector.extract_strided_slice %555 {offsets = [0, 0], sizes = [16, 128], strides = [1, 1]} : vector<16x512xf32> to vector<16x128xf32>
    %716 = vector.broadcast %714 : vector<1x128xf32> to vector<16x128xf32>
    %717 = arith.mulf %716, %715 : vector<16x128xf32>
    %718 = arith.mulf %705, %713 : vector<1x128xf32>
    %719 = vector.extract_strided_slice %555 {offsets = [0, 128], sizes = [16, 128], strides = [1, 1]} : vector<16x512xf32> to vector<16x128xf32>
    %720 = vector.broadcast %718 : vector<1x128xf32> to vector<16x128xf32>
    %721 = arith.mulf %720, %719 : vector<16x128xf32>
    %722 = arith.addf %717, %721 : vector<16x128xf32>
    %723 = arith.mulf %707, %713 : vector<1x128xf32>
    %724 = vector.extract_strided_slice %555 {offsets = [0, 256], sizes = [16, 128], strides = [1, 1]} : vector<16x512xf32> to vector<16x128xf32>
    %725 = vector.broadcast %723 : vector<1x128xf32> to vector<16x128xf32>
    %726 = arith.mulf %725, %724 : vector<16x128xf32>
    %727 = arith.addf %722, %726 : vector<16x128xf32>
    %728 = arith.mulf %709, %713 : vector<1x128xf32>
    %729 = vector.extract_strided_slice %555 {offsets = [0, 384], sizes = [16, 128], strides = [1, 1]} : vector<16x512xf32> to vector<16x128xf32>
    %730 = vector.broadcast %728 : vector<1x128xf32> to vector<16x128xf32>
    %731 = arith.mulf %730, %729 : vector<16x128xf32>
    %732 = arith.addf %727, %731 : vector<16x128xf32>
    %733 = vector.extract_strided_slice %553 {offsets = [0, 384], sizes = [16, 128], strides = [1, 1]} : vector<16x512xf32> to vector<16x128xf32>
    %734 = vector.extract_strided_slice %554 {offsets = [0, 0], sizes = [16, 128], strides = [1, 1]} : vector<16x512xf32> to vector<16x128xf32>
    %735 = arith.mulf %733, %734 : vector<16x128xf32>
    %cst_109 = arith.constant dense<0.000000e+00> : vector<128xf32>
    %736 = vector.multi_reduction <add>, %735, %cst_109 [0] : vector<16x128xf32> to vector<128xf32>
    %737 = vector.shape_cast %736 : vector<128xf32> to vector<1x128xf32>
    %cst_110 = arith.constant 2.500000e-01 : f32
    %738 = vector.broadcast %cst_110 : f32 to vector<1x128xf32>
    %739 = arith.mulf %737, %738 : vector<1x128xf32>
    %740 = vector.extract_strided_slice %554 {offsets = [0, 128], sizes = [16, 128], strides = [1, 1]} : vector<16x512xf32> to vector<16x128xf32>
    %741 = arith.mulf %733, %740 : vector<16x128xf32>
    %cst_111 = arith.constant dense<0.000000e+00> : vector<128xf32>
    %742 = vector.multi_reduction <add>, %741, %cst_111 [0] : vector<16x128xf32> to vector<128xf32>
    %743 = vector.shape_cast %742 : vector<128xf32> to vector<1x128xf32>
    %cst_112 = arith.constant 2.500000e-01 : f32
    %744 = vector.broadcast %cst_112 : f32 to vector<1x128xf32>
    %745 = arith.mulf %743, %744 : vector<1x128xf32>
    %746 = vector.extract_strided_slice %554 {offsets = [0, 256], sizes = [16, 128], strides = [1, 1]} : vector<16x512xf32> to vector<16x128xf32>
    %747 = arith.mulf %733, %746 : vector<16x128xf32>
    %cst_113 = arith.constant dense<0.000000e+00> : vector<128xf32>
    %748 = vector.multi_reduction <add>, %747, %cst_113 [0] : vector<16x128xf32> to vector<128xf32>
    %749 = vector.shape_cast %748 : vector<128xf32> to vector<1x128xf32>
    %cst_114 = arith.constant 2.500000e-01 : f32
    %750 = vector.broadcast %cst_114 : f32 to vector<1x128xf32>
    %751 = arith.mulf %749, %750 : vector<1x128xf32>
    %752 = vector.extract_strided_slice %554 {offsets = [0, 384], sizes = [16, 128], strides = [1, 1]} : vector<16x512xf32> to vector<16x128xf32>
    %753 = arith.mulf %733, %752 : vector<16x128xf32>
    %cst_115 = arith.constant dense<0.000000e+00> : vector<128xf32>
    %754 = vector.multi_reduction <add>, %753, %cst_115 [0] : vector<16x128xf32> to vector<128xf32>
    %755 = vector.shape_cast %754 : vector<128xf32> to vector<1x128xf32>
    %cst_116 = arith.constant 2.500000e-01 : f32
    %756 = vector.broadcast %cst_116 : f32 to vector<1x128xf32>
    %757 = arith.mulf %755, %756 : vector<1x128xf32>
    %758 = arith.maximumf %739, %745 : vector<1x128xf32>
    %759 = arith.maximumf %758, %751 : vector<1x128xf32>
    %760 = arith.maximumf %759, %757 : vector<1x128xf32>
    %761 = arith.subf %739, %760 : vector<1x128xf32>
    %762 = math.exp %761 : vector<1x128xf32>
    %763 = arith.subf %745, %760 : vector<1x128xf32>
    %764 = math.exp %763 : vector<1x128xf32>
    %765 = arith.subf %751, %760 : vector<1x128xf32>
    %766 = math.exp %765 : vector<1x128xf32>
    %767 = arith.subf %757, %760 : vector<1x128xf32>
    %768 = math.exp %767 : vector<1x128xf32>
    %769 = arith.addf %762, %764 : vector<1x128xf32>
    %770 = arith.addf %769, %766 : vector<1x128xf32>
    %771 = arith.addf %770, %768 : vector<1x128xf32>
    %772 = tpu.reciprocal %771 {approx = true} : vector<1x128xf32> -> vector<1x128xf32>
    %773 = arith.mulf %762, %772 : vector<1x128xf32>
    %774 = vector.extract_strided_slice %555 {offsets = [0, 0], sizes = [16, 128], strides = [1, 1]} : vector<16x512xf32> to vector<16x128xf32>
    %775 = vector.broadcast %773 : vector<1x128xf32> to vector<16x128xf32>
    %776 = arith.mulf %775, %774 : vector<16x128xf32>
    %777 = arith.mulf %764, %772 : vector<1x128xf32>
    %778 = vector.extract_strided_slice %555 {offsets = [0, 128], sizes = [16, 128], strides = [1, 1]} : vector<16x512xf32> to vector<16x128xf32>
    %779 = vector.broadcast %777 : vector<1x128xf32> to vector<16x128xf32>
    %780 = arith.mulf %779, %778 : vector<16x128xf32>
    %781 = arith.addf %776, %780 : vector<16x128xf32>
    %782 = arith.mulf %766, %772 : vector<1x128xf32>
    %783 = vector.extract_strided_slice %555 {offsets = [0, 256], sizes = [16, 128], strides = [1, 1]} : vector<16x512xf32> to vector<16x128xf32>
    %784 = vector.broadcast %782 : vector<1x128xf32> to vector<16x128xf32>
    %785 = arith.mulf %784, %783 : vector<16x128xf32>
    %786 = arith.addf %781, %785 : vector<16x128xf32>
    %787 = arith.mulf %768, %772 : vector<1x128xf32>
    %788 = vector.extract_strided_slice %555 {offsets = [0, 384], sizes = [16, 128], strides = [1, 1]} : vector<16x512xf32> to vector<16x128xf32>
    %789 = vector.broadcast %787 : vector<1x128xf32> to vector<16x128xf32>
    %790 = arith.mulf %789, %788 : vector<16x128xf32>
    %791 = arith.addf %786, %790 : vector<16x128xf32>
    %792 = tpu.concatenate %614, %673, %732, %791 in 1 : vector<16x128xf32>, vector<16x128xf32>, vector<16x128xf32>, vector<16x128xf32> -> vector<16x512xf32>
    %793 = vector.extract_strided_slice %527 {offsets = [0, 0], sizes = [32, 16], strides = [1, 1]} : vector<32x32xbf16> to vector<32x16xbf16>
    %794 = arith.truncf %792 : vector<16x512xf32> to vector<16x512xbf16>
    %cst_117 = arith.constant dense<0.000000e+00> : vector<32x512xf32>
    %795 = tpu.matmul %793, %794, %cst_117 {dimension_numbers = #tpu.dot_dimension_numbers<[1], [0], [0], [1], [0, 0, 1, 1], [], []>} : vector<32x16xbf16>, vector<16x512xbf16>, vector<32x512xf32> -> vector<32x512xf32>
    %796 = vector.extract_strided_slice %552 {offsets = [16, 0], sizes = [16, 512], strides = [1, 1]} : vector<96x512xf32> to vector<16x512xf32>
    %797 = vector.extract_strided_slice %552 {offsets = [48, 0], sizes = [16, 512], strides = [1, 1]} : vector<96x512xf32> to vector<16x512xf32>
    %798 = vector.extract_strided_slice %552 {offsets = [80, 0], sizes = [16, 512], strides = [1, 1]} : vector<96x512xf32> to vector<16x512xf32>
    %799 = vector.extract_strided_slice %796 {offsets = [0, 0], sizes = [16, 128], strides = [1, 1]} : vector<16x512xf32> to vector<16x128xf32>
    %800 = vector.extract_strided_slice %797 {offsets = [0, 0], sizes = [16, 128], strides = [1, 1]} : vector<16x512xf32> to vector<16x128xf32>
    %801 = arith.mulf %799, %800 : vector<16x128xf32>
    %cst_118 = arith.constant dense<0.000000e+00> : vector<128xf32>
    %802 = vector.multi_reduction <add>, %801, %cst_118 [0] : vector<16x128xf32> to vector<128xf32>
    %803 = vector.shape_cast %802 : vector<128xf32> to vector<1x128xf32>
    %cst_119 = arith.constant 2.500000e-01 : f32
    %804 = vector.broadcast %cst_119 : f32 to vector<1x128xf32>
    %805 = arith.mulf %803, %804 : vector<1x128xf32>
    %806 = vector.extract_strided_slice %797 {offsets = [0, 128], sizes = [16, 128], strides = [1, 1]} : vector<16x512xf32> to vector<16x128xf32>
    %807 = arith.mulf %799, %806 : vector<16x128xf32>
    %cst_120 = arith.constant dense<0.000000e+00> : vector<128xf32>
    %808 = vector.multi_reduction <add>, %807, %cst_120 [0] : vector<16x128xf32> to vector<128xf32>
    %809 = vector.shape_cast %808 : vector<128xf32> to vector<1x128xf32>
    %cst_121 = arith.constant 2.500000e-01 : f32
    %810 = vector.broadcast %cst_121 : f32 to vector<1x128xf32>
    %811 = arith.mulf %809, %810 : vector<1x128xf32>
    %812 = vector.extract_strided_slice %797 {offsets = [0, 256], sizes = [16, 128], strides = [1, 1]} : vector<16x512xf32> to vector<16x128xf32>
    %813 = arith.mulf %799, %812 : vector<16x128xf32>
    %cst_122 = arith.constant dense<0.000000e+00> : vector<128xf32>
    %814 = vector.multi_reduction <add>, %813, %cst_122 [0] : vector<16x128xf32> to vector<128xf32>
    %815 = vector.shape_cast %814 : vector<128xf32> to vector<1x128xf32>
    %cst_123 = arith.constant 2.500000e-01 : f32
    %816 = vector.broadcast %cst_123 : f32 to vector<1x128xf32>
    %817 = arith.mulf %815, %816 : vector<1x128xf32>
    %818 = vector.extract_strided_slice %797 {offsets = [0, 384], sizes = [16, 128], strides = [1, 1]} : vector<16x512xf32> to vector<16x128xf32>
    %819 = arith.mulf %799, %818 : vector<16x128xf32>
    %cst_124 = arith.constant dense<0.000000e+00> : vector<128xf32>
    %820 = vector.multi_reduction <add>, %819, %cst_124 [0] : vector<16x128xf32> to vector<128xf32>
    %821 = vector.shape_cast %820 : vector<128xf32> to vector<1x128xf32>
    %cst_125 = arith.constant 2.500000e-01 : f32
    %822 = vector.broadcast %cst_125 : f32 to vector<1x128xf32>
    %823 = arith.mulf %821, %822 : vector<1x128xf32>
    %824 = arith.maximumf %805, %811 : vector<1x128xf32>
    %825 = arith.maximumf %824, %817 : vector<1x128xf32>
    %826 = arith.maximumf %825, %823 : vector<1x128xf32>
    %827 = arith.subf %805, %826 : vector<1x128xf32>
    %828 = math.exp %827 : vector<1x128xf32>
    %829 = arith.subf %811, %826 : vector<1x128xf32>
    %830 = math.exp %829 : vector<1x128xf32>
    %831 = arith.subf %817, %826 : vector<1x128xf32>
    %832 = math.exp %831 : vector<1x128xf32>
    %833 = arith.subf %823, %826 : vector<1x128xf32>
    %834 = math.exp %833 : vector<1x128xf32>
    %835 = arith.addf %828, %830 : vector<1x128xf32>
    %836 = arith.addf %835, %832 : vector<1x128xf32>
    %837 = arith.addf %836, %834 : vector<1x128xf32>
    %838 = tpu.reciprocal %837 {approx = true} : vector<1x128xf32> -> vector<1x128xf32>
    %839 = arith.mulf %828, %838 : vector<1x128xf32>
    %840 = vector.extract_strided_slice %798 {offsets = [0, 0], sizes = [16, 128], strides = [1, 1]} : vector<16x512xf32> to vector<16x128xf32>
    %841 = vector.broadcast %839 : vector<1x128xf32> to vector<16x128xf32>
    %842 = arith.mulf %841, %840 : vector<16x128xf32>
    %843 = arith.mulf %830, %838 : vector<1x128xf32>
    %844 = vector.extract_strided_slice %798 {offsets = [0, 128], sizes = [16, 128], strides = [1, 1]} : vector<16x512xf32> to vector<16x128xf32>
    %845 = vector.broadcast %843 : vector<1x128xf32> to vector<16x128xf32>
    %846 = arith.mulf %845, %844 : vector<16x128xf32>
    %847 = arith.addf %842, %846 : vector<16x128xf32>
    %848 = arith.mulf %832, %838 : vector<1x128xf32>
    %849 = vector.extract_strided_slice %798 {offsets = [0, 256], sizes = [16, 128], strides = [1, 1]} : vector<16x512xf32> to vector<16x128xf32>
    %850 = vector.broadcast %848 : vector<1x128xf32> to vector<16x128xf32>
    %851 = arith.mulf %850, %849 : vector<16x128xf32>
    %852 = arith.addf %847, %851 : vector<16x128xf32>
    %853 = arith.mulf %834, %838 : vector<1x128xf32>
    %854 = vector.extract_strided_slice %798 {offsets = [0, 384], sizes = [16, 128], strides = [1, 1]} : vector<16x512xf32> to vector<16x128xf32>
    %855 = vector.broadcast %853 : vector<1x128xf32> to vector<16x128xf32>
    %856 = arith.mulf %855, %854 : vector<16x128xf32>
    %857 = arith.addf %852, %856 : vector<16x128xf32>
    %858 = vector.extract_strided_slice %796 {offsets = [0, 128], sizes = [16, 128], strides = [1, 1]} : vector<16x512xf32> to vector<16x128xf32>
    %859 = vector.extract_strided_slice %797 {offsets = [0, 0], sizes = [16, 128], strides = [1, 1]} : vector<16x512xf32> to vector<16x128xf32>
    %860 = arith.mulf %858, %859 : vector<16x128xf32>
    %cst_126 = arith.constant dense<0.000000e+00> : vector<128xf32>
    %861 = vector.multi_reduction <add>, %860, %cst_126 [0] : vector<16x128xf32> to vector<128xf32>
    %862 = vector.shape_cast %861 : vector<128xf32> to vector<1x128xf32>
    %cst_127 = arith.constant 2.500000e-01 : f32
    %863 = vector.broadcast %cst_127 : f32 to vector<1x128xf32>
    %864 = arith.mulf %862, %863 : vector<1x128xf32>
    %865 = vector.extract_strided_slice %797 {offsets = [0, 128], sizes = [16, 128], strides = [1, 1]} : vector<16x512xf32> to vector<16x128xf32>
    %866 = arith.mulf %858, %865 : vector<16x128xf32>
    %cst_128 = arith.constant dense<0.000000e+00> : vector<128xf32>
    %867 = vector.multi_reduction <add>, %866, %cst_128 [0] : vector<16x128xf32> to vector<128xf32>
    %868 = vector.shape_cast %867 : vector<128xf32> to vector<1x128xf32>
    %cst_129 = arith.constant 2.500000e-01 : f32
    %869 = vector.broadcast %cst_129 : f32 to vector<1x128xf32>
    %870 = arith.mulf %868, %869 : vector<1x128xf32>
    %871 = vector.extract_strided_slice %797 {offsets = [0, 256], sizes = [16, 128], strides = [1, 1]} : vector<16x512xf32> to vector<16x128xf32>
    %872 = arith.mulf %858, %871 : vector<16x128xf32>
    %cst_130 = arith.constant dense<0.000000e+00> : vector<128xf32>
    %873 = vector.multi_reduction <add>, %872, %cst_130 [0] : vector<16x128xf32> to vector<128xf32>
    %874 = vector.shape_cast %873 : vector<128xf32> to vector<1x128xf32>
    %cst_131 = arith.constant 2.500000e-01 : f32
    %875 = vector.broadcast %cst_131 : f32 to vector<1x128xf32>
    %876 = arith.mulf %874, %875 : vector<1x128xf32>
    %877 = vector.extract_strided_slice %797 {offsets = [0, 384], sizes = [16, 128], strides = [1, 1]} : vector<16x512xf32> to vector<16x128xf32>
    %878 = arith.mulf %858, %877 : vector<16x128xf32>
    %cst_132 = arith.constant dense<0.000000e+00> : vector<128xf32>
    %879 = vector.multi_reduction <add>, %878, %cst_132 [0] : vector<16x128xf32> to vector<128xf32>
    %880 = vector.shape_cast %879 : vector<128xf32> to vector<1x128xf32>
    %cst_133 = arith.constant 2.500000e-01 : f32
    %881 = vector.broadcast %cst_133 : f32 to vector<1x128xf32>
    %882 = arith.mulf %880, %881 : vector<1x128xf32>
    %883 = arith.maximumf %864, %870 : vector<1x128xf32>
    %884 = arith.maximumf %883, %876 : vector<1x128xf32>
    %885 = arith.maximumf %884, %882 : vector<1x128xf32>
    %886 = arith.subf %864, %885 : vector<1x128xf32>
    %887 = math.exp %886 : vector<1x128xf32>
    %888 = arith.subf %870, %885 : vector<1x128xf32>
    %889 = math.exp %888 : vector<1x128xf32>
    %890 = arith.subf %876, %885 : vector<1x128xf32>
    %891 = math.exp %890 : vector<1x128xf32>
    %892 = arith.subf %882, %885 : vector<1x128xf32>
    %893 = math.exp %892 : vector<1x128xf32>
    %894 = arith.addf %887, %889 : vector<1x128xf32>
    %895 = arith.addf %894, %891 : vector<1x128xf32>
    %896 = arith.addf %895, %893 : vector<1x128xf32>
    %897 = tpu.reciprocal %896 {approx = true} : vector<1x128xf32> -> vector<1x128xf32>
    %898 = arith.mulf %887, %897 : vector<1x128xf32>
    %899 = vector.extract_strided_slice %798 {offsets = [0, 0], sizes = [16, 128], strides = [1, 1]} : vector<16x512xf32> to vector<16x128xf32>
    %900 = vector.broadcast %898 : vector<1x128xf32> to vector<16x128xf32>
    %901 = arith.mulf %900, %899 : vector<16x128xf32>
    %902 = arith.mulf %889, %897 : vector<1x128xf32>
    %903 = vector.extract_strided_slice %798 {offsets = [0, 128], sizes = [16, 128], strides = [1, 1]} : vector<16x512xf32> to vector<16x128xf32>
    %904 = vector.broadcast %902 : vector<1x128xf32> to vector<16x128xf32>
    %905 = arith.mulf %904, %903 : vector<16x128xf32>
    %906 = arith.addf %901, %905 : vector<16x128xf32>
    %907 = arith.mulf %891, %897 : vector<1x128xf32>
    %908 = vector.extract_strided_slice %798 {offsets = [0, 256], sizes = [16, 128], strides = [1, 1]} : vector<16x512xf32> to vector<16x128xf32>
    %909 = vector.broadcast %907 : vector<1x128xf32> to vector<16x128xf32>
    %910 = arith.mulf %909, %908 : vector<16x128xf32>
    %911 = arith.addf %906, %910 : vector<16x128xf32>
    %912 = arith.mulf %893, %897 : vector<1x128xf32>
    %913 = vector.extract_strided_slice %798 {offsets = [0, 384], sizes = [16, 128], strides = [1, 1]} : vector<16x512xf32> to vector<16x128xf32>
    %914 = vector.broadcast %912 : vector<1x128xf32> to vector<16x128xf32>
    %915 = arith.mulf %914, %913 : vector<16x128xf32>
    %916 = arith.addf %911, %915 : vector<16x128xf32>
    %917 = vector.extract_strided_slice %796 {offsets = [0, 256], sizes = [16, 128], strides = [1, 1]} : vector<16x512xf32> to vector<16x128xf32>
    %918 = vector.extract_strided_slice %797 {offsets = [0, 0], sizes = [16, 128], strides = [1, 1]} : vector<16x512xf32> to vector<16x128xf32>
    %919 = arith.mulf %917, %918 : vector<16x128xf32>
    %cst_134 = arith.constant dense<0.000000e+00> : vector<128xf32>
    %920 = vector.multi_reduction <add>, %919, %cst_134 [0] : vector<16x128xf32> to vector<128xf32>
    %921 = vector.shape_cast %920 : vector<128xf32> to vector<1x128xf32>
    %cst_135 = arith.constant 2.500000e-01 : f32
    %922 = vector.broadcast %cst_135 : f32 to vector<1x128xf32>
    %923 = arith.mulf %921, %922 : vector<1x128xf32>
    %924 = vector.extract_strided_slice %797 {offsets = [0, 128], sizes = [16, 128], strides = [1, 1]} : vector<16x512xf32> to vector<16x128xf32>
    %925 = arith.mulf %917, %924 : vector<16x128xf32>
    %cst_136 = arith.constant dense<0.000000e+00> : vector<128xf32>
    %926 = vector.multi_reduction <add>, %925, %cst_136 [0] : vector<16x128xf32> to vector<128xf32>
    %927 = vector.shape_cast %926 : vector<128xf32> to vector<1x128xf32>
    %cst_137 = arith.constant 2.500000e-01 : f32
    %928 = vector.broadcast %cst_137 : f32 to vector<1x128xf32>
    %929 = arith.mulf %927, %928 : vector<1x128xf32>
    %930 = vector.extract_strided_slice %797 {offsets = [0, 256], sizes = [16, 128], strides = [1, 1]} : vector<16x512xf32> to vector<16x128xf32>
    %931 = arith.mulf %917, %930 : vector<16x128xf32>
    %cst_138 = arith.constant dense<0.000000e+00> : vector<128xf32>
    %932 = vector.multi_reduction <add>, %931, %cst_138 [0] : vector<16x128xf32> to vector<128xf32>
    %933 = vector.shape_cast %932 : vector<128xf32> to vector<1x128xf32>
    %cst_139 = arith.constant 2.500000e-01 : f32
    %934 = vector.broadcast %cst_139 : f32 to vector<1x128xf32>
    %935 = arith.mulf %933, %934 : vector<1x128xf32>
    %936 = vector.extract_strided_slice %797 {offsets = [0, 384], sizes = [16, 128], strides = [1, 1]} : vector<16x512xf32> to vector<16x128xf32>
    %937 = arith.mulf %917, %936 : vector<16x128xf32>
    %cst_140 = arith.constant dense<0.000000e+00> : vector<128xf32>
    %938 = vector.multi_reduction <add>, %937, %cst_140 [0] : vector<16x128xf32> to vector<128xf32>
    %939 = vector.shape_cast %938 : vector<128xf32> to vector<1x128xf32>
    %cst_141 = arith.constant 2.500000e-01 : f32
    %940 = vector.broadcast %cst_141 : f32 to vector<1x128xf32>
    %941 = arith.mulf %939, %940 : vector<1x128xf32>
    %942 = arith.maximumf %923, %929 : vector<1x128xf32>
    %943 = arith.maximumf %942, %935 : vector<1x128xf32>
    %944 = arith.maximumf %943, %941 : vector<1x128xf32>
    %945 = arith.subf %923, %944 : vector<1x128xf32>
    %946 = math.exp %945 : vector<1x128xf32>
    %947 = arith.subf %929, %944 : vector<1x128xf32>
    %948 = math.exp %947 : vector<1x128xf32>
    %949 = arith.subf %935, %944 : vector<1x128xf32>
    %950 = math.exp %949 : vector<1x128xf32>
    %951 = arith.subf %941, %944 : vector<1x128xf32>
    %952 = math.exp %951 : vector<1x128xf32>
    %953 = arith.addf %946, %948 : vector<1x128xf32>
    %954 = arith.addf %953, %950 : vector<1x128xf32>
    %955 = arith.addf %954, %952 : vector<1x128xf32>
    %956 = tpu.reciprocal %955 {approx = true} : vector<1x128xf32> -> vector<1x128xf32>
    %957 = arith.mulf %946, %956 : vector<1x128xf32>
    %958 = vector.extract_strided_slice %798 {offsets = [0, 0], sizes = [16, 128], strides = [1, 1]} : vector<16x512xf32> to vector<16x128xf32>
    %959 = vector.broadcast %957 : vector<1x128xf32> to vector<16x128xf32>
    %960 = arith.mulf %959, %958 : vector<16x128xf32>
    %961 = arith.mulf %948, %956 : vector<1x128xf32>
    %962 = vector.extract_strided_slice %798 {offsets = [0, 128], sizes = [16, 128], strides = [1, 1]} : vector<16x512xf32> to vector<16x128xf32>
    %963 = vector.broadcast %961 : vector<1x128xf32> to vector<16x128xf32>
    %964 = arith.mulf %963, %962 : vector<16x128xf32>
    %965 = arith.addf %960, %964 : vector<16x128xf32>
    %966 = arith.mulf %950, %956 : vector<1x128xf32>
    %967 = vector.extract_strided_slice %798 {offsets = [0, 256], sizes = [16, 128], strides = [1, 1]} : vector<16x512xf32> to vector<16x128xf32>
    %968 = vector.broadcast %966 : vector<1x128xf32> to vector<16x128xf32>
    %969 = arith.mulf %968, %967 : vector<16x128xf32>
    %970 = arith.addf %965, %969 : vector<16x128xf32>
    %971 = arith.mulf %952, %956 : vector<1x128xf32>
    %972 = vector.extract_strided_slice %798 {offsets = [0, 384], sizes = [16, 128], strides = [1, 1]} : vector<16x512xf32> to vector<16x128xf32>
    %973 = vector.broadcast %971 : vector<1x128xf32> to vector<16x128xf32>
    %974 = arith.mulf %973, %972 : vector<16x128xf32>
    %975 = arith.addf %970, %974 : vector<16x128xf32>
    %976 = vector.extract_strided_slice %796 {offsets = [0, 384], sizes = [16, 128], strides = [1, 1]} : vector<16x512xf32> to vector<16x128xf32>
    %977 = vector.extract_strided_slice %797 {offsets = [0, 0], sizes = [16, 128], strides = [1, 1]} : vector<16x512xf32> to vector<16x128xf32>
    %978 = arith.mulf %976, %977 : vector<16x128xf32>
    %cst_142 = arith.constant dense<0.000000e+00> : vector<128xf32>
    %979 = vector.multi_reduction <add>, %978, %cst_142 [0] : vector<16x128xf32> to vector<128xf32>
    %980 = vector.shape_cast %979 : vector<128xf32> to vector<1x128xf32>
    %cst_143 = arith.constant 2.500000e-01 : f32
    %981 = vector.broadcast %cst_143 : f32 to vector<1x128xf32>
    %982 = arith.mulf %980, %981 : vector<1x128xf32>
    %983 = vector.extract_strided_slice %797 {offsets = [0, 128], sizes = [16, 128], strides = [1, 1]} : vector<16x512xf32> to vector<16x128xf32>
    %984 = arith.mulf %976, %983 : vector<16x128xf32>
    %cst_144 = arith.constant dense<0.000000e+00> : vector<128xf32>
    %985 = vector.multi_reduction <add>, %984, %cst_144 [0] : vector<16x128xf32> to vector<128xf32>
    %986 = vector.shape_cast %985 : vector<128xf32> to vector<1x128xf32>
    %cst_145 = arith.constant 2.500000e-01 : f32
    %987 = vector.broadcast %cst_145 : f32 to vector<1x128xf32>
    %988 = arith.mulf %986, %987 : vector<1x128xf32>
    %989 = vector.extract_strided_slice %797 {offsets = [0, 256], sizes = [16, 128], strides = [1, 1]} : vector<16x512xf32> to vector<16x128xf32>
    %990 = arith.mulf %976, %989 : vector<16x128xf32>
    %cst_146 = arith.constant dense<0.000000e+00> : vector<128xf32>
    %991 = vector.multi_reduction <add>, %990, %cst_146 [0] : vector<16x128xf32> to vector<128xf32>
    %992 = vector.shape_cast %991 : vector<128xf32> to vector<1x128xf32>
    %cst_147 = arith.constant 2.500000e-01 : f32
    %993 = vector.broadcast %cst_147 : f32 to vector<1x128xf32>
    %994 = arith.mulf %992, %993 : vector<1x128xf32>
    %995 = vector.extract_strided_slice %797 {offsets = [0, 384], sizes = [16, 128], strides = [1, 1]} : vector<16x512xf32> to vector<16x128xf32>
    %996 = arith.mulf %976, %995 : vector<16x128xf32>
    %cst_148 = arith.constant dense<0.000000e+00> : vector<128xf32>
    %997 = vector.multi_reduction <add>, %996, %cst_148 [0] : vector<16x128xf32> to vector<128xf32>
    %998 = vector.shape_cast %997 : vector<128xf32> to vector<1x128xf32>
    %cst_149 = arith.constant 2.500000e-01 : f32
    %999 = vector.broadcast %cst_149 : f32 to vector<1x128xf32>
    %1000 = arith.mulf %998, %999 : vector<1x128xf32>
    %1001 = arith.maximumf %982, %988 : vector<1x128xf32>
    %1002 = arith.maximumf %1001, %994 : vector<1x128xf32>
    %1003 = arith.maximumf %1002, %1000 : vector<1x128xf32>
    %1004 = arith.subf %982, %1003 : vector<1x128xf32>
    %1005 = math.exp %1004 : vector<1x128xf32>
    %1006 = arith.subf %988, %1003 : vector<1x128xf32>
    %1007 = math.exp %1006 : vector<1x128xf32>
    %1008 = arith.subf %994, %1003 : vector<1x128xf32>
    %1009 = math.exp %1008 : vector<1x128xf32>
    %1010 = arith.subf %1000, %1003 : vector<1x128xf32>
    %1011 = math.exp %1010 : vector<1x128xf32>
    %1012 = arith.addf %1005, %1007 : vector<1x128xf32>
    %1013 = arith.addf %1012, %1009 : vector<1x128xf32>
    %1014 = arith.addf %1013, %1011 : vector<1x128xf32>
    %1015 = tpu.reciprocal %1014 {approx = true} : vector<1x128xf32> -> vector<1x128xf32>
    %1016 = arith.mulf %1005, %1015 : vector<1x128xf32>
    %1017 = vector.extract_strided_slice %798 {offsets = [0, 0], sizes = [16, 128], strides = [1, 1]} : vector<16x512xf32> to vector<16x128xf32>
    %1018 = vector.broadcast %1016 : vector<1x128xf32> to vector<16x128xf32>
    %1019 = arith.mulf %1018, %1017 : vector<16x128xf32>
    %1020 = arith.mulf %1007, %1015 : vector<1x128xf32>
    %1021 = vector.extract_strided_slice %798 {offsets = [0, 128], sizes = [16, 128], strides = [1, 1]} : vector<16x512xf32> to vector<16x128xf32>
    %1022 = vector.broadcast %1020 : vector<1x128xf32> to vector<16x128xf32>
    %1023 = arith.mulf %1022, %1021 : vector<16x128xf32>
    %1024 = arith.addf %1019, %1023 : vector<16x128xf32>
    %1025 = arith.mulf %1009, %1015 : vector<1x128xf32>
    %1026 = vector.extract_strided_slice %798 {offsets = [0, 256], sizes = [16, 128], strides = [1, 1]} : vector<16x512xf32> to vector<16x128xf32>
    %1027 = vector.broadcast %1025 : vector<1x128xf32> to vector<16x128xf32>
    %1028 = arith.mulf %1027, %1026 : vector<16x128xf32>
    %1029 = arith.addf %1024, %1028 : vector<16x128xf32>
    %1030 = arith.mulf %1011, %1015 : vector<1x128xf32>
    %1031 = vector.extract_strided_slice %798 {offsets = [0, 384], sizes = [16, 128], strides = [1, 1]} : vector<16x512xf32> to vector<16x128xf32>
    %1032 = vector.broadcast %1030 : vector<1x128xf32> to vector<16x128xf32>
    %1033 = arith.mulf %1032, %1031 : vector<16x128xf32>
    %1034 = arith.addf %1029, %1033 : vector<16x128xf32>
    %1035 = tpu.concatenate %857, %916, %975, %1034 in 1 : vector<16x128xf32>, vector<16x128xf32>, vector<16x128xf32>, vector<16x128xf32> -> vector<16x512xf32>
    %1036 = vector.extract_strided_slice %527 {offsets = [0, 16], sizes = [32, 16], strides = [1, 1]} : vector<32x32xbf16> to vector<32x16xbf16>
    %1037 = arith.truncf %1035 : vector<16x512xf32> to vector<16x512xbf16>
    %cst_150 = arith.constant dense<0.000000e+00> : vector<32x512xf32>
    %1038 = tpu.matmul %1036, %1037, %cst_150 {dimension_numbers = #tpu.dot_dimension_numbers<[1], [0], [0], [1], [0, 0, 1, 1], [], []>} : vector<32x16xbf16>, vector<16x512xbf16>, vector<32x512xf32> -> vector<32x512xf32>
    %1039 = arith.addf %795, %1038 : vector<32x512xf32>
    %1040 = vector.broadcast %528 : vector<32x1xf32> to vector<32x512xf32>
    %1041 = arith.addf %1039, %1040 : vector<32x512xf32>
    %1042 = arith.addf %1041, %523 : vector<32x512xf32>
    %1043 = vector.extract_strided_slice %2 {offsets = [128, 0], sizes = [32, 1], strides = [1, 1]} : vector<544x1xf32> to vector<32x1xf32>
    %1044 = vector.extract_strided_slice %2 {offsets = [160, 0], sizes = [32, 1], strides = [1, 1]} : vector<544x1xf32> to vector<32x1xf32>
    %1045 = vector.extract_strided_slice %3 {offsets = [256, 0], sizes = [256, 32], strides = [1, 1]} : vector<512x32xbf16> to vector<256x32xbf16>
    %1046 = vector.extract_strided_slice %2 {offsets = [288, 0], sizes = [256, 1], strides = [1, 1]} : vector<544x1xf32> to vector<256x1xf32>
    %1047 = vector.extract_strided_slice %2 {offsets = [256, 0], sizes = [32, 1], strides = [1, 1]} : vector<544x1xf32> to vector<32x1xf32>
    %cst_151 = arith.constant dense<0.000000e+00> : vector<512xf32>
    %1048 = vector.multi_reduction <add>, %1042, %cst_151 [0] : vector<32x512xf32> to vector<512xf32>
    %1049 = vector.shape_cast %1048 : vector<512xf32> to vector<1x512xf32>
    %cst_152 = arith.constant 3.200000e+01 : f32
    %1050 = vector.broadcast %cst_152 : f32 to vector<1x512xf32>
    %1051 = arith.divf %1049, %1050 : vector<1x512xf32>
    %1052 = vector.broadcast %1051 : vector<1x512xf32> to vector<32x512xf32>
    %1053 = arith.subf %1042, %1052 : vector<32x512xf32>
    %1054 = arith.mulf %1053, %1053 : vector<32x512xf32>
    %cst_153 = arith.constant dense<0.000000e+00> : vector<512xf32>
    %1055 = vector.multi_reduction <add>, %1054, %cst_153 [0] : vector<32x512xf32> to vector<512xf32>
    %1056 = vector.shape_cast %1055 : vector<512xf32> to vector<1x512xf32>
    %cst_154 = arith.constant 3.200000e+01 : f32
    %1057 = vector.broadcast %cst_154 : f32 to vector<1x512xf32>
    %1058 = arith.divf %1056, %1057 : vector<1x512xf32>
    %1059 = vector.broadcast %1051 : vector<1x512xf32> to vector<32x512xf32>
    %1060 = arith.subf %1042, %1059 : vector<32x512xf32>
    %cst_155 = arith.constant 9.99999974E-6 : f32
    %1061 = vector.broadcast %cst_155 : f32 to vector<1x512xf32>
    %1062 = arith.addf %1058, %1061 : vector<1x512xf32>
    %1063 = math.rsqrt %1062 : vector<1x512xf32>
    %1064 = vector.broadcast %1063 : vector<1x512xf32> to vector<32x512xf32>
    %1065 = arith.mulf %1060, %1064 : vector<32x512xf32>
    %1066 = vector.broadcast %1043 : vector<32x1xf32> to vector<32x512xf32>
    %1067 = arith.mulf %1065, %1066 : vector<32x512xf32>
    %1068 = vector.broadcast %1044 : vector<32x1xf32> to vector<32x512xf32>
    %1069 = arith.addf %1067, %1068 : vector<32x512xf32>
    %1070 = arith.truncf %1069 : vector<32x512xf32> to vector<32x512xbf16>
    %cst_156 = arith.constant dense<0.000000e+00> : vector<256x512xf32>
    %1071 = tpu.matmul %1045, %1070, %cst_156 {dimension_numbers = #tpu.dot_dimension_numbers<[1], [0], [0], [1], [0, 0, 1, 1], [], []>} : vector<256x32xbf16>, vector<32x512xbf16>, vector<256x512xf32> -> vector<256x512xf32>
    %1072 = vector.broadcast %1046 : vector<256x1xf32> to vector<256x512xf32>
    %1073 = arith.addf %1071, %1072 : vector<256x512xf32>
    %1074 = vector.extract_strided_slice %1073 {offsets = [0, 0], sizes = [128, 512], strides = [1, 1]} : vector<256x512xf32> to vector<128x512xf32>
    %1075 = vector.extract_strided_slice %1073 {offsets = [128, 0], sizes = [128, 512], strides = [1, 1]} : vector<256x512xf32> to vector<128x512xf32>
    %1076 = arith.mulf %1075, %1075 : vector<128x512xf32>
    %1077 = arith.mulf %1075, %1076 : vector<128x512xf32>
    %cst_157 = arith.constant 4.471500e-02 : f32
    %1078 = vector.broadcast %cst_157 : f32 to vector<128x512xf32>
    %1079 = arith.mulf %1078, %1077 : vector<128x512xf32>
    %1080 = arith.addf %1075, %1079 : vector<128x512xf32>
    %cst_158 = arith.constant 0.797884583 : f32
    %1081 = vector.broadcast %cst_158 : f32 to vector<128x512xf32>
    %1082 = arith.mulf %1081, %1080 : vector<128x512xf32>
    %1083 = math.tanh %1082 : vector<128x512xf32>
    %cst_159 = arith.constant 1.000000e+00 : f32
    %1084 = vector.broadcast %cst_159 : f32 to vector<128x512xf32>
    %1085 = arith.addf %1084, %1083 : vector<128x512xf32>
    %cst_160 = arith.constant 5.000000e-01 : f32
    %1086 = vector.broadcast %cst_160 : f32 to vector<128x512xf32>
    %1087 = arith.mulf %1086, %1085 : vector<128x512xf32>
    %1088 = arith.mulf %1075, %1087 : vector<128x512xf32>
    %1089 = arith.mulf %1074, %1088 : vector<128x512xf32>
    %1090 = arith.truncf %1089 : vector<128x512xf32> to vector<128x512xbf16>
    %cst_161 = arith.constant dense<0.000000e+00> : vector<32x512xf32>
    %1091 = tpu.matmul %4, %1090, %cst_161 {dimension_numbers = #tpu.dot_dimension_numbers<[1], [0], [0], [1], [0, 0, 1, 1], [], []>} : vector<32x128xbf16>, vector<128x512xbf16>, vector<32x512xf32> -> vector<32x512xf32>
    %1092 = vector.broadcast %1047 : vector<32x1xf32> to vector<32x512xf32>
    %1093 = arith.addf %1091, %1092 : vector<32x512xf32>
    %1094 = arith.addf %1093, %1042 : vector<32x512xf32>
    %c0_162 = arith.constant 0 : index
    %c0_163 = arith.constant 0 : index
    %c0_164 = arith.constant 0 : index
    %1095 = vector.load %arg5[%c0_162, %c0_163, %c0_164] : memref<1x32x512xf32, #tpu.memory_space<vmem>>, vector<1x32x512xf32>
    %1096 = vector.shape_cast %1095 : vector<1x32x512xf32> to vector<32x512xf32>
    %1097 = vector.shape_cast %1094 : vector<32x512xf32> to vector<1x32x512xf32>
    tpu.vector_store %arg5[%c0_162, %c0_163, %c0_164], %1097 {strides = array<i32>} : memref<1x32x512xf32, #tpu.memory_space<vmem>>, vector<1x32x512xf32>,
    return
  }
  func.func @transform_0(%arg0: i32) -> (i32, i32, i32) {
    %c0_i32 = arith.constant 0 : i32
    %c0_i32_0 = arith.constant 0 : i32
    %c0_i32_1 = arith.constant 0 : i32
    return %arg0, %c0_i32, %c0_i32_0 : i32, i32, i32
  }
  func.func @transform_1(%arg0: i32) -> (i32, i32) {
    %c0_i32 = arith.constant 0 : i32
    %c0_i32_0 = arith.constant 0 : i32
    %c0_i32_1 = arith.constant 0 : i32
    return %c0_i32, %c0_i32_0 : i32, i32
  }
  func.func @transform_2(%arg0: i32) -> (i32, i32) {
    %c0_i32 = arith.constant 0 : i32
    %c0_i32_0 = arith.constant 0 : i32
    %c0_i32_1 = arith.constant 0 : i32
    return %c0_i32, %c0_i32_0 : i32, i32
  }
  func.func @transform_3(%arg0: i32) -> (i32, i32) {
    %c0_i32 = arith.constant 0 : i32
    %c0_i32_0 = arith.constant 0 : i32
    %c0_i32_1 = arith.constant 0 : i32
    return %c0_i32, %c0_i32_0 : i32, i32
  }
  func.func @transform_4(%arg0: i32) -> (i32, i32, i32) {
    %c0_i32 = arith.constant 0 : i32
    %c0_i32_0 = arith.constant 0 : i32
    %c0_i32_1 = arith.constant 0 : i32
    return %arg0, %c0_i32, %c0_i32_0 : i32, i32, i32
  }
}

</mosaic_0001>

<llo_original>
// kernel: tpu_custom_call.1
$region0: #{tpu_custom_call.1}
  #allocation0 [shape = 'u32[]', space=smem, size = 0x4, offset = 0x4, fixed_abs, tag = 'smem constant byte address 0x4 - core index']
  #allocation1 [shape = 'u32[72,128]{1,0:T(1,128)}', space=vmem, size = 0x9000, scoped, tag = 'internal scratch']
  %s0 = inlined_call_operand.vmem [shape: f32[1,32,512], index: 0, kind: input, shape index: {}]
  %s1 = inlined_call_operand.vmem [shape: f32[544,1], index: 1, kind: input, shape index: {}]
  %s2 = inlined_call_operand.vmem [shape: bf16[512,32], index: 2, kind: input, shape index: {}]
  %s3 = inlined_call_operand.vmem [shape: bf16[32,128], index: 3, kind: input, shape index: {}]
  %s4 = inlined_call_operand.hbm [shape: f32[1,32,512], index: 4, kind: output, shape index: {}]
  %s5 = sld [smem:[#allocation0]]
  $region26: #{tpu_custom_call.1} parent=0
    _
  %s7 = ssub.s32 1, %s5
  %s8 = scalar_select 0, %s7, %s5
  $region1: #{tpu_custom_call.1} parent=0
    #allocation2 [shape = 'u8[65536]{0}', space=vmem, size = 0x10000, scoped, tag = 'output window, operand 0, single buffered']
    #allocation3 [shape = 's32[1]{0}', space=sflag, size = 0x4, scoped, tag = 'scoped memory for tpu_custom_call.1']
    %9 = vsyncpa [#allocation3], 0
    // Predicated region
    $region2: #{tpu_custom_call.1} parent=1 // pred_check
      _
    $region3: #{tpu_custom_call.1} parent=1 // pred_check_branch
      %11 = sbr.rel (0) target = $region5
    $region4: #{tpu_custom_call.1} parent=1 // pred_region
      _
    $region5: #{tpu_custom_call.1} parent=1 // pred_fallthru
      _
    // Predicated region
    $region6: #{tpu_custom_call.1} parent=1 // pred_check
      _
    $region7: #{tpu_custom_call.1} parent=1 // pred_check_branch
      %13 = sbr.rel (0) target = $region9
    $region8: #{tpu_custom_call.1} parent=1 // pred_region
      _
    $region9: #{tpu_custom_call.1} parent=1 // pred_fallthru
      _
    // Predicated region
    $region10: #{tpu_custom_call.1} parent=1 // pred_check
      _
    $region11: #{tpu_custom_call.1} parent=1 // pred_check_branch
      %15 = sbr.rel (0) target = $region13
    $region12: #{tpu_custom_call.1} parent=1 // pred_region
      _
    $region13: #{tpu_custom_call.1} parent=1 // pred_fallthru
      _
    // Predicated region
    $region14: #{tpu_custom_call.1} parent=1 // pred_check
      _
    $region15: #{tpu_custom_call.1} parent=1 // pred_check_branch
      %17 = sbr.rel (0) target = $region17
    $region16: #{tpu_custom_call.1} parent=1 // pred_region
      _
    $region17: #{tpu_custom_call.1} parent=1 // pred_fallthru
      _
    %v19 = vld [vmem:[%s0] sm:$0xff]
    %v20 = vld [vmem:[%s0 + $0x8] sm:$0xff]
    %v21 = vld [vmem:[%s0 + $0x10] sm:$0xff]
    %v22 = vld [vmem:[%s0 + $0x18] sm:$0xff]
    %v23 = vld [vmem:[%s0 + $0x20] sm:$0xff]
    %v24 = vld [vmem:[%s0 + $0x28] sm:$0xff]
    %v25 = vld [vmem:[%s0 + $0x30] sm:$0xff]
    %v26 = vld [vmem:[%s0 + $0x38] sm:$0xff]
    %v27 = vld [vmem:[%s0 + $0x40] sm:$0xff]
    %v28 = vld [vmem:[%s0 + $0x48] sm:$0xff]
    %v29 = vld [vmem:[%s0 + $0x50] sm:$0xff]
    %v30 = vld [vmem:[%s0 + $0x58] sm:$0xff]
    %v31 = vld [vmem:[%s0 + $0x60] sm:$0xff]
    %v32 = vld [vmem:[%s0 + $0x68] sm:$0xff]
    %v33 = vld [vmem:[%s0 + $0x70] sm:$0xff]
    %v34 = vld [vmem:[%s0 + $0x78] sm:$0xff]
    %v35 = vld [vmem:[%s1] sm:$0xff]
    %v36 = vld [vmem:[%s1 + $0x8] sm:$0xff]
    %v37 = vld [vmem:[%s1 + $0x10] sm:$0xff]
    %v38 = vld [vmem:[%s1 + $0x18] sm:$0xff]
    %v39 = vld [vmem:[%s1 + $0x20] sm:$0xff]
    %v40 = vld [vmem:[%s1 + $0x28] sm:$0xff]
    %v41 = vld [vmem:[%s1 + $0x30] sm:$0xff]
    %v42 = vld [vmem:[%s1 + $0x38] sm:$0xff]
    %v43 = vld [vmem:[%s1 + $0x40] sm:$0xff]
    %v44 = vld [vmem:[%s1 + $0x48] sm:$0xff]
    %v45 = vld [vmem:[%s1 + $0x50] sm:$0xff]
    %v46 = vld [vmem:[%s1 + $0x58] sm:$0xff]
    %v47 = vld [vmem:[%s1 + $0x60] sm:$0xff]
    %v48 = vld [vmem:[%s1 + $0x68] sm:$0xff]
    %v49 = vld [vmem:[%s1 + $0x70] sm:$0xff]
    %v50 = vld [vmem:[%s1 + $0x78] sm:$0xff]
    %v51 = vld [vmem:[%s1 + $0x80] sm:$0xff]
    %v52 = vld [vmem:[%s1 + $0x88] sm:$0xff]
    %v53 = vld [vmem:[%s1 + $0x90] sm:$0xff]
    %v54 = vld [vmem:[%s1 + $0x98] sm:$0xff]
    %v55 = vld [vmem:[%s1 + $0xa0] sm:$0xff]
    %v56 = vld [vmem:[%s1 + $0xa8] sm:$0xff]
    %v57 = vld [vmem:[%s1 + $0xb0] sm:$0xff]
    %v58 = vld [vmem:[%s1 + $0xb8] sm:$0xff]
    %v59 = vld [vmem:[%s1 + $0xc0] sm:$0xff]
    %v60 = vld [vmem:[%s1 + $0xc8] sm:$0xff]
    %v61 = vld [vmem:[%s1 + $0xd0] sm:$0xff]
    %v62 = vld [vmem:[%s1 + $0xd8] sm:$0xff]
    %v63 = vld [vmem:[%s1 + $0xe0] sm:$0xff]
    %v64 = vld [vmem:[%s1 + $0xe8] sm:$0xff]
    %v65 = vld [vmem:[%s1 + $0xf0] sm:$0xff]
    %v66 = vld [vmem:[%s1 + $0xf8] sm:$0xff]
    %v67 = vld [vmem:[%s1 + $0x100] sm:$0xff]
    %v68 = vld [vmem:[%s1 + $0x108] sm:$0xff]
    %v69 = vld [vmem:[%s1 + $0x110] sm:$0xff]
    %v70 = vld [vmem:[%s1 + $0x118] sm:$0xff]
    %v71 = vld [vmem:[%s1 + $0x120] sm:$0xff]
    %v72 = vld [vmem:[%s1 + $0x128] sm:$0xff]
    %v73 = vld [vmem:[%s1 + $0x130] sm:$0xff]
    %v74 = vld [vmem:[%s1 + $0x138] sm:$0xff]
    %v75 = vld [vmem:[%s1 + $0x140] sm:$0xff]
    %v76 = vld [vmem:[%s1 + $0x148] sm:$0xff]
    %v77 = vld [vmem:[%s1 + $0x150] sm:$0xff]
    %v78 = vld [vmem:[%s1 + $0x158] sm:$0xff]
    %v79 = vld [vmem:[%s1 + $0x160] sm:$0xff]
    %v80 = vld [vmem:[%s1 + $0x168] sm:$0xff]
    %v81 = vld [vmem:[%s1 + $0x170] sm:$0xff]
    %v82 = vld [vmem:[%s1 + $0x178] sm:$0xff]
    %v83 = vld [vmem:[%s1 + $0x180] sm:$0xff]
    %v84 = vld [vmem:[%s1 + $0x188] sm:$0xff]
    %v85 = vld [vmem:[%s1 + $0x190] sm:$0xff]
    %v86 = vld [vmem:[%s1 + $0x198] sm:$0xff]
    %v87 = vld [vmem:[%s1 + $0x1a0] sm:$0xff]
    %v88 = vld [vmem:[%s1 + $0x1a8] sm:$0xff]
    %v89 = vld [vmem:[%s1 + $0x1b0] sm:$0xff]
    %v90 = vld [vmem:[%s1 + $0x1b8] sm:$0xff]
    %v91 = vld [vmem:[%s1 + $0x1c0] sm:$0xff]
    %v92 = vld [vmem:[%s1 + $0x1c8] sm:$0xff]
    %v93 = vld [vmem:[%s1 + $0x1d0] sm:$0xff]
    %v94 = vld [vmem:[%s1 + $0x1d8] sm:$0xff]
    %v95 = vld [vmem:[%s1 + $0x1e0] sm:$0xff]
    %v96 = vld [vmem:[%s1 + $0x1e8] sm:$0xff]
    %v97 = vld [vmem:[%s1 + $0x1f0] sm:$0xff]
    %v98 = vld [vmem:[%s1 + $0x1f8] sm:$0xff]
    %v99 = vld [vmem:[%s1 + $0x200] sm:$0xff]
    %v100 = vld [vmem:[%s1 + $0x208] sm:$0xff]
    %v101 = vld [vmem:[%s1 + $0x210] sm:$0xff]
    %v102 = vld [vmem:[%s1 + $0x218] sm:$0xff]
    %v103 = vld [vmem:[%s2] sm:$0xf]
    %v104 = vld [vmem:[%s2 + $0x4] sm:$0xf]
    %v105 = vld [vmem:[%s2 + $0x8] sm:$0xf]
    %v106 = vld [vmem:[%s2 + $0xc] sm:$0xf]
    %v107 = vld [vmem:[%s2 + $0x10] sm:$0xf]
    %v108 = vld [vmem:[%s2 + $0x14] sm:$0xf]
    %v109 = vld [vmem:[%s2 + $0x18] sm:$0xf]
    %v110 = vld [vmem:[%s2 + $0x1c] sm:$0xf]
    %v111 = vld [vmem:[%s2 + $0x20] sm:$0xf]
    %v112 = vld [vmem:[%s2 + $0x24] sm:$0xf]
    %v113 = vld [vmem:[%s2 + $0x28] sm:$0xf]
    %v114 = vld [vmem:[%s2 + $0x2c] sm:$0xf]
    %v115 = vld [vmem:[%s2 + $0x30] sm:$0xf]
    %v116 = vld [vmem:[%s2 + $0x34] sm:$0xf]
    %v117 = vld [vmem:[%s2 + $0x38] sm:$0xf]
    %v118 = vld [vmem:[%s2 + $0x3c] sm:$0xf]
    %v119 = vld [vmem:[%s2 + $0x40] sm:$0xf]
    %v120 = vld [vmem:[%s2 + $0x44] sm:$0xf]
    %v121 = vld [vmem:[%s2 + $0x48] sm:$0xf]
    %v122 = vld [vmem:[%s2 + $0x4c] sm:$0xf]
    %v123 = vld [vmem:[%s2 + $0x50] sm:$0xf]
    %v124 = vld [vmem:[%s2 + $0x54] sm:$0xf]
    %v125 = vld [vmem:[%s2 + $0x58] sm:$0xf]
    %v126 = vld [vmem:[%s2 + $0x5c] sm:$0xf]
    %v127 = vld [vmem:[%s2 + $0x60] sm:$0xf]
    %v128 = vld [vmem:[%s2 + $0x64] sm:$0xf]
    %v129 = vld [vmem:[%s2 + $0x68] sm:$0xf]
    %v130 = vld [vmem:[%s2 + $0x6c] sm:$0xf]
    %v131 = vld [vmem:[%s2 + $0x70] sm:$0xf]
    %v132 = vld [vmem:[%s2 + $0x74] sm:$0xf]
    %v133 = vld [vmem:[%s2 + $0x78] sm:$0xf]
    %v134 = vld [vmem:[%s2 + $0x7c] sm:$0xf]
    %v135 = vld [vmem:[%s2 + $0x80] sm:$0xf]
    %v136 = vld [vmem:[%s2 + $0x84] sm:$0xf]
    %v137 = vld [vmem:[%s2 + $0x88] sm:$0xf]
    %v138 = vld [vmem:[%s2 + $0x8c] sm:$0xf]
    %v139 = vld [vmem:[%s2 + $0x90] sm:$0xf]
    %v140 = vld [vmem:[%s2 + $0x94] sm:$0xf]
    %v141 = vld [vmem:[%s2 + $0x98] sm:$0xf]
    %v142 = vld [vmem:[%s2 + $0x9c] sm:$0xf]
    %v143 = vld [vmem:[%s2 + $0xa0] sm:$0xf]
    %v144 = vld [vmem:[%s2 + $0xa4] sm:$0xf]
    %v145 = vld [vmem:[%s2 + $0xa8] sm:$0xf]
    %v146 = vld [vmem:[%s2 + $0xac] sm:$0xf]
    %v147 = vld [vmem:[%s2 + $0xb0] sm:$0xf]
    %v148 = vld [vmem:[%s2 + $0xb4] sm:$0xf]
    %v149 = vld [vmem:[%s2 + $0xb8] sm:$0xf]
    %v150 = vld [vmem:[%s2 + $0xbc] sm:$0xf]
    %v151 = vld [vmem:[%s2 + $0xc0] sm:$0xf]
    %v152 = vld [vmem:[%s2 + $0xc4] sm:$0xf]
    %v153 = vld [vmem:[%s2 + $0xc8] sm:$0xf]
    %v154 = vld [vmem:[%s2 + $0xcc] sm:$0xf]
    %v155 = vld [vmem:[%s2 + $0xd0] sm:$0xf]
    %v156 = vld [vmem:[%s2 + $0xd4] sm:$0xf]
    %v157 = vld [vmem:[%s2 + $0xd8] sm:$0xf]
    %v158 = vld [vmem:[%s2 + $0xdc] sm:$0xf]
    %v159 = vld [vmem:[%s2 + $0xe0] sm:$0xf]
    %v160 = vld [vmem:[%s2 + $0xe4] sm:$0xf]
    %v161 = vld [vmem:[%s2 + $0xe8] sm:$0xf]
    %v162 = vld [vmem:[%s2 + $0xec] sm:$0xf]
    %v163 = vld [vmem:[%s2 + $0xf0] sm:$0xf]
    %v164 = vld [vmem:[%s2 + $0xf4] sm:$0xf]
    %v165 = vld [vmem:[%s2 + $0xf8] sm:$0xf]
    %v166 = vld [vmem:[%s2 + $0xfc] sm:$0xf]
    %v167 = vld [vmem:[%s3] sm:$0xf]
    %v168 = vld [vmem:[%s3 + $0x4] sm:$0xf]
    %v169 = vld [vmem:[%s3 + $0x8] sm:$0xf]
    %v170 = vld [vmem:[%s3 + $0xc] sm:$0xf]
    %v171 = vadd.f32 %v19, %v23
    %v172 = vadd.f32 %v171, %v27
    %v173 = vadd.f32 %v172, %v31
    %v174 = vrot.slane %v173, 4
    %v175 = vadd.f32 %v173, %v174
    %v176 = vrot.slane %v175, 2
    %v177 = vadd.f32 %v175, %v176
    %v178 = vrot.slane %v177, 1
    %v179 = vadd.f32 %v177, %v178
    %v180 = vadd.f32 %v20, %v24
    %v181 = vadd.f32 %v180, %v28
    %v182 = vadd.f32 %v181, %v32
    %v183 = vrot.slane %v182, 4
    %v184 = vadd.f32 %v182, %v183
    %v185 = vrot.slane %v184, 2
    %v186 = vadd.f32 %v184, %v185
    %v187 = vrot.slane %v186, 1
    %v188 = vadd.f32 %v186, %v187
    %v189 = vadd.f32 %v21, %v25
    %v190 = vadd.f32 %v189, %v29
    %v191 = vadd.f32 %v190, %v33
    %v192 = vrot.slane %v191, 4
    %v193 = vadd.f32 %v191, %v192
    %v194 = vrot.slane %v193, 2
    %v195 = vadd.f32 %v193, %v194
    %v196 = vrot.slane %v195, 1
    %v197 = vadd.f32 %v195, %v196
    %v198 = vadd.f32 %v22, %v26
    %v199 = vadd.f32 %v198, %v30
    %v200 = vadd.f32 %v199, %v34
    %v201 = vrot.slane %v200, 4
    %v202 = vadd.f32 %v200, %v201
    %v203 = vrot.slane %v202, 2
    %v204 = vadd.f32 %v202, %v203
    %v205 = vrot.slane %v204, 1
    %v206 = vadd.f32 %v204, %v205
    %v207 = vrcp.pop 32.0
    %v208 = vmul.f32 32.0, %v207
    %v209 = vsub.f32 1.0, %v208
    %v210 = vmul.f32 %v207, %v209
    %v211 = vadd.f32 %v207, %v210
    %vm212 = vweird.f32 %v207
    %v213 = vsel %vm212, %v207, %v211
    %v214 = vmul.f32 %v179, %v213
    %v215 = vmul.f32 %v188, %v213
    %v216 = vmul.f32 %v197, %v213
    %v217 = vmul.f32 %v206, %v213
    %v218 = vsub.f32 %v19, %v214
    %v219 = vsub.f32 %v20, %v215
    %v220 = vsub.f32 %v21, %v216
    %v221 = vsub.f32 %v22, %v217
    %v222 = vsub.f32 %v23, %v214
    %v223 = vsub.f32 %v24, %v215
    %v224 = vsub.f32 %v25, %v216
    %v225 = vsub.f32 %v26, %v217
    %v226 = vsub.f32 %v27, %v214
    %v227 = vsub.f32 %v28, %v215
    %v228 = vsub.f32 %v29, %v216
    %v229 = vsub.f32 %v30, %v217
    %v230 = vsub.f32 %v31, %v214
    %v231 = vsub.f32 %v32, %v215
    %v232 = vsub.f32 %v33, %v216
    %v233 = vsub.f32 %v34, %v217
    %v234 = vmul.f32 %v218, %v218
    %v235 = vmul.f32 %v219, %v219
    %v236 = vmul.f32 %v220, %v220
    %v237 = vmul.f32 %v221, %v221
    %v238 = vmul.f32 %v222, %v222
    %v239 = vmul.f32 %v223, %v223
    %v240 = vmul.f32 %v224, %v224
    %v241 = vmul.f32 %v225, %v225
    %v242 = vmul.f32 %v226, %v226
    %v243 = vmul.f32 %v227, %v227
    %v244 = vmul.f32 %v228, %v228
    %v245 = vmul.f32 %v229, %v229
    %v246 = vmul.f32 %v230, %v230
    %v247 = vmul.f32 %v231, %v231
    %v248 = vmul.f32 %v232, %v232
    %v249 = vmul.f32 %v233, %v233
    %v250 = vadd.f32 %v234, %v238
    %v251 = vadd.f32 %v250, %v242
    %v252 = vadd.f32 %v251, %v246
    %v253 = vrot.slane %v252, 4
    %v254 = vadd.f32 %v252, %v253
    %v255 = vrot.slane %v254, 2
    %v256 = vadd.f32 %v254, %v255
    %v257 = vrot.slane %v256, 1
    %v258 = vadd.f32 %v256, %v257
    %v259 = vadd.f32 %v235, %v239
    %v260 = vadd.f32 %v259, %v243
    %v261 = vadd.f32 %v260, %v247
    %v262 = vrot.slane %v261, 4
    %v263 = vadd.f32 %v261, %v262
    %v264 = vrot.slane %v263, 2
    %v265 = vadd.f32 %v263, %v264
    %v266 = vrot.slane %v265, 1
    %v267 = vadd.f32 %v265, %v266
    %v268 = vadd.f32 %v236, %v240
    %v269 = vadd.f32 %v268, %v244
    %v270 = vadd.f32 %v269, %v248
    %v271 = vrot.slane %v270, 4
    %v272 = vadd.f32 %v270, %v271
    %v273 = vrot.slane %v272, 2
    %v274 = vadd.f32 %v272, %v273
    %v275 = vrot.slane %v274, 1
    %v276 = vadd.f32 %v274, %v275
    %v277 = vadd.f32 %v237, %v241
    %v278 = vadd.f32 %v277, %v245
    %v279 = vadd.f32 %v278, %v249
    %v280 = vrot.slane %v279, 4
    %v281 = vadd.f32 %v279, %v280
    %v282 = vrot.slane %v281, 2
    %v283 = vadd.f32 %v281, %v282
    %v284 = vrot.slane %v283, 1
    %v285 = vadd.f32 %v283, %v284
    %v286 = vmul.f32 %v258, %v213
    %v287 = vmul.f32 %v267, %v213
    %v288 = vmul.f32 %v276, %v213
    %v289 = vmul.f32 %v285, %v213
    %v290 = vadd.f32 %v286, 1e-05
    %v291 = vadd.f32 %v287, 1e-05
    %v292 = vadd.f32 %v288, 1e-05
    %v293 = vadd.f32 %v289, 1e-05
    %v294 = vrsqrt.pop %v290
    %v295 = vmul.f32 %v294, %v290
    %v296 = vmul.f32 %v295, %v294
    %v297 = vmul.f32 0.5, %v296
    %v298 = vsub.f32 1.5, %v297
    %v299 = vmul.f32 %v294, %v298
    %vm300 = vweird.f32 %v290
    %vm301 = vweird.f32 %v294
    %vm302 = vmor %vm300, %vm301
    %v303 = vsel %vm302, %v294, %v299
    %v304 = vrsqrt.pop %v291
    %v305 = vmul.f32 %v304, %v291
    %v306 = vmul.f32 %v305, %v304
    %v307 = vmul.f32 0.5, %v306
    %v308 = vsub.f32 1.5, %v307
    %v309 = vmul.f32 %v304, %v308
    %vm310 = vweird.f32 %v291
    %vm311 = vweird.f32 %v304
    %vm312 = vmor %vm310, %vm311
    %v313 = vsel %vm312, %v304, %v309
    %v314 = vrsqrt.pop %v292
    %v315 = vmul.f32 %v314, %v292
    %v316 = vmul.f32 %v315, %v314
    %v317 = vmul.f32 0.5, %v316
    %v318 = vsub.f32 1.5, %v317
    %v319 = vmul.f32 %v314, %v318
    %vm320 = vweird.f32 %v292
    %vm321 = vweird.f32 %v314
    %vm322 = vmor %vm320, %vm321
    %v323 = vsel %vm322, %v314, %v319
    %v324 = vrsqrt.pop %v293
    %v325 = vmul.f32 %v324, %v293
    %v326 = vmul.f32 %v325, %v324
    %v327 = vmul.f32 0.5, %v326
    %v328 = vsub.f32 1.5, %v327
    %v329 = vmul.f32 %v324, %v328
    %vm330 = vweird.f32 %v293
    %vm331 = vweird.f32 %v324
    %vm332 = vmor %vm330, %vm331
    %v333 = vsel %vm332, %v324, %v329
    %v334 = vmul.f32 %v218, %v303
    %v335 = vmul.f32 %v219, %v313
    %v336 = vmul.f32 %v220, %v323
    %v337 = vmul.f32 %v221, %v333
    %v338 = vmul.f32 %v222, %v303
    %v339 = vmul.f32 %v223, %v313
    %v340 = vmul.f32 %v224, %v323
    %v341 = vmul.f32 %v225, %v333
    %v342 = vmul.f32 %v226, %v303
    %v343 = vmul.f32 %v227, %v313
    %v344 = vmul.f32 %v228, %v323
    %v345 = vmul.f32 %v229, %v333
    %v346 = vmul.f32 %v230, %v303
    %v347 = vmul.f32 %v231, %v313
    %v348 = vmul.f32 %v232, %v323
    %v349 = vmul.f32 %v233, %v333
    %351 = vset.pattern.permute.xlu0 0
    %352 = vperm.xlu0 %351, %v35
    %v353 = vpop.permute.xlu0 %352
    %356 = vset.pattern.permute.xlu0 0
    %357 = vperm.xlu0 %356, %v36
    %v358 = vpop.permute.xlu0 %357
    %361 = vset.pattern.permute.xlu0 0
    %362 = vperm.xlu0 %361, %v37
    %v363 = vpop.permute.xlu0 %362
    %366 = vset.pattern.permute.xlu0 0
    %367 = vperm.xlu0 %366, %v38
    %v368 = vpop.permute.xlu0 %367
    %v370 = vmul.f32 %v334, %v353
    %v371 = vmul.f32 %v335, %v353
    %v372 = vmul.f32 %v336, %v353
    %v373 = vmul.f32 %v337, %v353
    %v374 = vmul.f32 %v338, %v358
    %v375 = vmul.f32 %v339, %v358
    %v376 = vmul.f32 %v340, %v358
    %v377 = vmul.f32 %v341, %v358
    %v378 = vmul.f32 %v342, %v363
    %v379 = vmul.f32 %v343, %v363
    %v380 = vmul.f32 %v344, %v363
    %v381 = vmul.f32 %v345, %v363
    %v382 = vmul.f32 %v346, %v368
    %v383 = vmul.f32 %v347, %v368
    %v384 = vmul.f32 %v348, %v368
    %v385 = vmul.f32 %v349, %v368
    %387 = vset.pattern.permute.xlu0 0
    %388 = vperm.xlu0 %387, %v39
    %v389 = vpop.permute.xlu0 %388
    %392 = vset.pattern.permute.xlu0 0
    %393 = vperm.xlu0 %392, %v40
    %v394 = vpop.permute.xlu0 %393
    %397 = vset.pattern.permute.xlu0 0
    %398 = vperm.xlu0 %397, %v41
    %v399 = vpop.permute.xlu0 %398
    %402 = vset.pattern.permute.xlu0 0
    %403 = vperm.xlu0 %402, %v42
    %v404 = vpop.permute.xlu0 %403
    %v406 = vadd.f32 %v370, %v389
    %v407 = vadd.f32 %v371, %v389
    %v408 = vadd.f32 %v372, %v389
    %v409 = vadd.f32 %v373, %v389
    %v410 = vadd.f32 %v374, %v394
    %v411 = vadd.f32 %v375, %v394
    %v412 = vadd.f32 %v376, %v394
    %v413 = vadd.f32 %v377, %v394
    %v414 = vadd.f32 %v378, %v399
    %v415 = vadd.f32 %v379, %v399
    %v416 = vadd.f32 %v380, %v399
    %v417 = vadd.f32 %v381, %v399
    %v418 = vadd.f32 %v382, %v404
    %v419 = vadd.f32 %v383, %v404
    %v420 = vadd.f32 %v384, %v404
    %v421 = vadd.f32 %v385, %v404
    %v422 = vpack.c.bf16 %v410, %v406
    %v423 = vpack.c.bf16 %v411, %v407
    %v424 = vpack.c.bf16 %v412, %v408
    %v425 = vpack.c.bf16 %v413, %v409
    %v426 = vpack.c.bf16 %v418, %v414
    %v427 = vpack.c.bf16 %v419, %v415
    %v428 = vpack.c.bf16 %v420, %v416
    %v429 = vpack.c.bf16 %v421, %v417
    %v442 = vunpack.c.l.b16 %v103
    %v443 = vunpack.c.l.b16 %v104
    %v444 = vunpack.c.l.b16 %v105
    %v445 = vunpack.c.l.b16 %v106
    %v446 = vunpack.c.l.b16 %v107
    %v447 = vunpack.c.l.b16 %v108
    %v448 = vunpack.c.l.b16 %v109
    %v449 = vunpack.c.l.b16 %v110
    %v450 = vunpack.c.l.b16 %v111
    %v451 = vunpack.c.l.b16 %v112
    %v452 = vunpack.c.l.b16 %v113
    %v453 = vunpack.c.l.b16 %v114
    %v454 = vpack.c.b16 %v443, %v442
    %v455 = vpack.c.b16 %v445, %v444
    %v456 = vpack.c.b16 %v447, %v446
    %v457 = vpack.c.b16 %v449, %v448
    %v458 = vpack.c.b16 %v451, %v450
    %v459 = vpack.c.b16 %v453, %v452
    %vm460 = vcmask 261120
    %v462 = vsel %vm460, %v454, 0
    %v465 = vsel %vm460, %v455, 0
    %v468 = vsel %vm460, %v456, 0
    %v471 = vsel %vm460, %v457, 0
    %v474 = vsel %vm460, %v458, 0
    %v477 = vsel %vm460, %v459, 0
    %479 = vmatpush.bf16.msra.mxu0 0
    %480 = vmatpush.bf16.msra.mxu0 0
    %481 = vmatpush.bf16.msra.mxu0 0
    %482 = vmatpush.bf16.msra.mxu0 0
    %483 = vmatpush.bf16.msra.mxu0 0
    %484 = vmatpush.bf16.msra.mxu0 0
    %485 = vmatpush.bf16.msra.mxu0 %v426
    %486 = vmatpush.bf16.msra.mxu0 %v422
    %487 = vmatmul.bf16.gmra.mxu0 %v462
    %v488 = vpop.f32.mrf.mxu0
    %v489 = vadd.f32 0.0, %v488
    %v490 = vpop.f32.mrf.mxu0
    %v491 = vadd.f32 0.0, %v490
    %492 = vmatmul.bf16.gmra.mxu0 %v465
    %v493 = vpop.f32.mrf.mxu0
    %v494 = vadd.f32 0.0, %v493
    %v495 = vpop.f32.mrf.mxu0
    %v496 = vadd.f32 0.0, %v495
    %497 = vmatmul.bf16.gmra.mxu0 %v468
    %v498 = vpop.f32.mrf.mxu0
    %v499 = vadd.f32 0.0, %v498
    %v500 = vpop.f32.mrf.mxu0
    %v501 = vadd.f32 0.0, %v500
    %502 = vmatmul.bf16.gmra.mxu0 %v471
    %v503 = vpop.f32.mrf.mxu0
    %v504 = vadd.f32 0.0, %v503
    %v505 = vpop.f32.mrf.mxu0
    %v506 = vadd.f32 0.0, %v505
    %507 = vmatmul.bf16.gmra.mxu0 %v474
    %v508 = vpop.f32.mrf.mxu0
    %v509 = vadd.f32 0.0, %v508
    %v510 = vpop.f32.mrf.mxu0
    %v511 = vadd.f32 0.0, %v510
    %512 = vmatmul.bf16.gmra.mxu0 %v477
    %v513 = vpop.f32.mrf.mxu0
    %v514 = vadd.f32 0.0, %v513
    %v515 = vpop.f32.mrf.mxu0
    %v516 = vadd.f32 0.0, %v515
    %517 = vdwg.mxu0
    %518 = vmatpush.bf16.msra.mxu0 0
    %519 = vmatpush.bf16.msra.mxu0 0
    %520 = vmatpush.bf16.msra.mxu0 0
    %521 = vmatpush.bf16.msra.mxu0 0
    %522 = vmatpush.bf16.msra.mxu0 0
    %523 = vmatpush.bf16.msra.mxu0 0
    %524 = vmatpush.bf16.msra.mxu0 %v427
    %525 = vmatpush.bf16.msra.mxu0 %v423
    %526 = vmatmul.bf16.gmra.mxu0 %v462
    %v527 = vpop.f32.mrf.mxu0
    %v528 = vadd.f32 0.0, %v527
    %v529 = vpop.f32.mrf.mxu0
    %v530 = vadd.f32 0.0, %v529
    %531 = vmatmul.bf16.gmra.mxu0 %v465
    %v532 = vpop.f32.mrf.mxu0
    %v533 = vadd.f32 0.0, %v532
    %v534 = vpop.f32.mrf.mxu0
    %v535 = vadd.f32 0.0, %v534
    %536 = vmatmul.bf16.gmra.mxu0 %v468
    %v537 = vpop.f32.mrf.mxu0
    %v538 = vadd.f32 0.0, %v537
    %v539 = vpop.f32.mrf.mxu0
    %v540 = vadd.f32 0.0, %v539
    %541 = vmatmul.bf16.gmra.mxu0 %v471
    %v542 = vpop.f32.mrf.mxu0
    %v543 = vadd.f32 0.0, %v542
    %v544 = vpop.f32.mrf.mxu0
    %v545 = vadd.f32 0.0, %v544
    %546 = vmatmul.bf16.gmra.mxu0 %v474
    %v547 = vpop.f32.mrf.mxu0
    %v548 = vadd.f32 0.0, %v547
    %v549 = vpop.f32.mrf.mxu0
    %v550 = vadd.f32 0.0, %v549
    %551 = vmatmul.bf16.gmra.mxu0 %v477
    %v552 = vpop.f32.mrf.mxu0
    %v553 = vadd.f32 0.0, %v552
    %v554 = vpop.f32.mrf.mxu0
    %v555 = vadd.f32 0.0, %v554
    %556 = vdwg.mxu0
    %557 = vmatpush.bf16.msra.mxu0 0
    %558 = vmatpush.bf16.msra.mxu0 0
    %559 = vmatpush.bf16.msra.mxu0 0
    %560 = vmatpush.bf16.msra.mxu0 0
    %561 = vmatpush.bf16.msra.mxu0 0
    %562 = vmatpush.bf16.msra.mxu0 0
    %563 = vmatpush.bf16.msra.mxu0 %v428
    %564 = vmatpush.bf16.msra.mxu0 %v424
    %565 = vmatmul.bf16.gmra.mxu0 %v462
    %v566 = vpop.f32.mrf.mxu0
    %v567 = vadd.f32 0.0, %v566
    %v568 = vpop.f32.mrf.mxu0
    %v569 = vadd.f32 0.0, %v568
    %570 = vmatmul.bf16.gmra.mxu0 %v465
    %v571 = vpop.f32.mrf.mxu0
    %v572 = vadd.f32 0.0, %v571
    %v573 = vpop.f32.mrf.mxu0
    %v574 = vadd.f32 0.0, %v573
    %575 = vmatmul.bf16.gmra.mxu0 %v468
    %v576 = vpop.f32.mrf.mxu0
    %v577 = vadd.f32 0.0, %v576
    %v578 = vpop.f32.mrf.mxu0
    %v579 = vadd.f32 0.0, %v578
    %580 = vmatmul.bf16.gmra.mxu0 %v471
    %v581 = vpop.f32.mrf.mxu0
    %v582 = vadd.f32 0.0, %v581
    %v583 = vpop.f32.mrf.mxu0
    %v584 = vadd.f32 0.0, %v583
    %585 = vmatmul.bf16.gmra.mxu0 %v474
    %v586 = vpop.f32.mrf.mxu0
    %v587 = vadd.f32 0.0, %v586
    %v588 = vpop.f32.mrf.mxu0
    %v589 = vadd.f32 0.0, %v588
    %590 = vmatmul.bf16.gmra.mxu0 %v477
    %v591 = vpop.f32.mrf.mxu0
    %v592 = vadd.f32 0.0, %v591
    %v593 = vpop.f32.mrf.mxu0
    %v594 = vadd.f32 0.0, %v593
    %595 = vdwg.mxu0
    %596 = vmatpush.bf16.msra.mxu0 0
    %597 = vmatpush.bf16.msra.mxu0 0
    %598 = vmatpush.bf16.msra.mxu0 0
    %599 = vmatpush.bf16.msra.mxu0 0
    %600 = vmatpush.bf16.msra.mxu0 0
    %601 = vmatpush.bf16.msra.mxu0 0
    %602 = vmatpush.bf16.msra.mxu0 %v429
    %603 = vmatpush.bf16.msra.mxu0 %v425
    %604 = vmatmul.bf16.gmra.mxu0 %v462
    %v605 = vpop.f32.mrf.mxu0
    %v606 = vadd.f32 0.0, %v605
    %v607 = vpop.f32.mrf.mxu0
    %v608 = vadd.f32 0.0, %v607
    %609 = vmatmul.bf16.gmra.mxu0 %v465
    %v610 = vpop.f32.mrf.mxu0
    %v611 = vadd.f32 0.0, %v610
    %v612 = vpop.f32.mrf.mxu0
    %v613 = vadd.f32 0.0, %v612
    %614 = vmatmul.bf16.gmra.mxu0 %v468
    %v615 = vpop.f32.mrf.mxu0
    %v616 = vadd.f32 0.0, %v615
    %v617 = vpop.f32.mrf.mxu0
    %v618 = vadd.f32 0.0, %v617
    %619 = vmatmul.bf16.gmra.mxu0 %v471
    %v620 = vpop.f32.mrf.mxu0
    %v621 = vadd.f32 0.0, %v620
    %v622 = vpop.f32.mrf.mxu0
    %v623 = vadd.f32 0.0, %v622
    %624 = vmatmul.bf16.gmra.mxu0 %v474
    %v625 = vpop.f32.mrf.mxu0
    %v626 = vadd.f32 0.0, %v625
    %v627 = vpop.f32.mrf.mxu0
    %v628 = vadd.f32 0.0, %v627
    %629 = vmatmul.bf16.gmra.mxu0 %v477
    %v630 = vpop.f32.mrf.mxu0
    %v631 = vadd.f32 0.0, %v630
    %v632 = vpop.f32.mrf.mxu0
    %v633 = vadd.f32 0.0, %v632
    %634 = vdwg.mxu0
    %v635 = vmul.f32 %v489, %v499
    %v636 = vmul.f32 %v491, %v501
    %v637 = vadd.f32 %v635, %v636
    %v638 = vrot.slane %v637, 4
    %v639 = vadd.f32 %v637, %v638
    %v640 = vrot.slane %v639, 2
    %v641 = vadd.f32 %v639, %v640
    %v642 = vrot.slane %v641, 1
    %v643 = vadd.f32 %v641, %v642
    %v644 = vmul.f32 %v643, 0.25
    %v645 = vmul.f32 %v489, %v538
    %v646 = vmul.f32 %v491, %v540
    %v647 = vadd.f32 %v645, %v646
    %v648 = vrot.slane %v647, 4
    %v649 = vadd.f32 %v647, %v648
    %v650 = vrot.slane %v649, 2
    %v651 = vadd.f32 %v649, %v650
    %v652 = vrot.slane %v651, 1
    %v653 = vadd.f32 %v651, %v652
    %v654 = vmul.f32 %v653, 0.25
    %v655 = vmul.f32 %v489, %v577
    %v656 = vmul.f32 %v491, %v579
    %v657 = vadd.f32 %v655, %v656
    %v658 = vrot.slane %v657, 4
    %v659 = vadd.f32 %v657, %v658
    %v660 = vrot.slane %v659, 2
    %v661 = vadd.f32 %v659, %v660
    %v662 = vrot.slane %v661, 1
    %v663 = vadd.f32 %v661, %v662
    %v664 = vmul.f32 %v663, 0.25
    %v665 = vmul.f32 %v489, %v616
    %v666 = vmul.f32 %v491, %v618
    %v667 = vadd.f32 %v665, %v666
    %v668 = vrot.slane %v667, 4
    %v669 = vadd.f32 %v667, %v668
    %v670 = vrot.slane %v669, 2
    %v671 = vadd.f32 %v669, %v670
    %v672 = vrot.slane %v671, 1
    %v673 = vadd.f32 %v671, %v672
    %v674 = vmul.f32 %v673, 0.25
    %v675 = vmax.f32 %v644, %v654
    %v676 = vmax.f32 %v675, %v664
    %v677 = vmax.f32 %v676, %v674
    %v678 = vsub.f32 %v644, %v677
    %v679 = vmul.f32 %v678, 1.442695
    %v680 = vpow.pop %v679
    %v681 = vsub.f32 %v654, %v677
    %v682 = vmul.f32 %v681, 1.442695
    %v683 = vpow.pop %v682
    %v684 = vsub.f32 %v664, %v677
    %v685 = vmul.f32 %v684, 1.442695
    %v686 = vpow.pop %v685
    %v687 = vsub.f32 %v674, %v677
    %v688 = vmul.f32 %v687, 1.442695
    %v689 = vpow.pop %v688
    %v690 = vadd.f32 %v680, %v683
    %v691 = vadd.f32 %v690, %v686
    %v692 = vadd.f32 %v691, %v689
    %v693 = vrcp.pop %v692
    %v694 = vmul.f32 %v680, %v693
    %v695 = vmul.f32 %v694, %v509
    %v696 = vmul.f32 %v694, %v511
    %v697 = vmul.f32 %v683, %v693
    %v698 = vmul.f32 %v697, %v548
    %v699 = vmul.f32 %v697, %v550
    %v700 = vadd.f32 %v695, %v698
    %v701 = vadd.f32 %v696, %v699
    %v702 = vmul.f32 %v686, %v693
    %v703 = vmul.f32 %v702, %v587
    %v704 = vmul.f32 %v702, %v589
    %v705 = vadd.f32 %v700, %v703
    %v706 = vadd.f32 %v701, %v704
    %v707 = vmul.f32 %v689, %v693
    %v708 = vmul.f32 %v707, %v626
    %v709 = vmul.f32 %v707, %v628
    %v710 = vadd.f32 %v705, %v708
    %v711 = vadd.f32 %v706, %v709
    %v712 = vmul.f32 %v528, %v499
    %v713 = vmul.f32 %v530, %v501
    %v714 = vadd.f32 %v712, %v713
    %v715 = vrot.slane %v714, 4
    %v716 = vadd.f32 %v714, %v715
    %v717 = vrot.slane %v716, 2
    %v718 = vadd.f32 %v716, %v717
    %v719 = vrot.slane %v718, 1
    %v720 = vadd.f32 %v718, %v719
    %v721 = vmul.f32 %v720, 0.25
    %v722 = vmul.f32 %v528, %v538
    %v723 = vmul.f32 %v530, %v540
    %v724 = vadd.f32 %v722, %v723
    %v725 = vrot.slane %v724, 4
    %v726 = vadd.f32 %v724, %v725
    %v727 = vrot.slane %v726, 2
    %v728 = vadd.f32 %v726, %v727
    %v729 = vrot.slane %v728, 1
    %v730 = vadd.f32 %v728, %v729
    %v731 = vmul.f32 %v730, 0.25
    %v732 = vmul.f32 %v528, %v577
    %v733 = vmul.f32 %v530, %v579
    %v734 = vadd.f32 %v732, %v733
    %v735 = vrot.slane %v734, 4
    %v736 = vadd.f32 %v734, %v735
    %v737 = vrot.slane %v736, 2
    %v738 = vadd.f32 %v736, %v737
    %v739 = vrot.slane %v738, 1
    %v740 = vadd.f32 %v738, %v739
    %v741 = vmul.f32 %v740, 0.25
    %v742 = vmul.f32 %v528, %v616
    %v743 = vmul.f32 %v530, %v618
    %v744 = vadd.f32 %v742, %v743
    %v745 = vrot.slane %v744, 4
    %v746 = vadd.f32 %v744, %v745
    %v747 = vrot.slane %v746, 2
    %v748 = vadd.f32 %v746, %v747
    %v749 = vrot.slane %v748, 1
    %v750 = vadd.f32 %v748, %v749
    %v751 = vmul.f32 %v750, 0.25
    %v752 = vmax.f32 %v721, %v731
    %v753 = vmax.f32 %v752, %v741
    %v754 = vmax.f32 %v753, %v751
    %v755 = vsub.f32 %v721, %v754
    %v756 = vmul.f32 %v755, 1.442695
    %v757 = vpow.pop %v756
    %v758 = vsub.f32 %v731, %v754
    %v759 = vmul.f32 %v758, 1.442695
    %v760 = vpow.pop %v759
    %v761 = vsub.f32 %v741, %v754
    %v762 = vmul.f32 %v761, 1.442695
    %v763 = vpow.pop %v762
    %v764 = vsub.f32 %v751, %v754
    %v765 = vmul.f32 %v764, 1.442695
    %v766 = vpow.pop %v765
    %v767 = vadd.f32 %v757, %v760
    %v768 = vadd.f32 %v767, %v763
    %v769 = vadd.f32 %v768, %v766
    %v770 = vrcp.pop %v769
    %v771 = vmul.f32 %v757, %v770
    %v772 = vmul.f32 %v771, %v509
    %v773 = vmul.f32 %v771, %v511
    %v774 = vmul.f32 %v760, %v770
    %v775 = vmul.f32 %v774, %v548
    %v776 = vmul.f32 %v774, %v550
    %v777 = vadd.f32 %v772, %v775
    %v778 = vadd.f32 %v773, %v776
    %v779 = vmul.f32 %v763, %v770
    %v780 = vmul.f32 %v779, %v587
    %v781 = vmul.f32 %v779, %v589
    %v782 = vadd.f32 %v777, %v780
    %v783 = vadd.f32 %v778, %v781
    %v784 = vmul.f32 %v766, %v770
    %v785 = vmul.f32 %v784, %v626
    %v786 = vmul.f32 %v784, %v628
    %v787 = vadd.f32 %v782, %v785
    %v788 = vadd.f32 %v783, %v786
    %v789 = vmul.f32 %v567, %v499
    %v790 = vmul.f32 %v569, %v501
    %v791 = vadd.f32 %v789, %v790
    %v792 = vrot.slane %v791, 4
    %v793 = vadd.f32 %v791, %v792
    %v794 = vrot.slane %v793, 2
    %v795 = vadd.f32 %v793, %v794
    %v796 = vrot.slane %v795, 1
    %v797 = vadd.f32 %v795, %v796
    %v798 = vmul.f32 %v797, 0.25
    %v799 = vmul.f32 %v567, %v538
    %v800 = vmul.f32 %v569, %v540
    %v801 = vadd.f32 %v799, %v800
    %v802 = vrot.slane %v801, 4
    %v803 = vadd.f32 %v801, %v802
    %v804 = vrot.slane %v803, 2
    %v805 = vadd.f32 %v803, %v804
    %v806 = vrot.slane %v805, 1
    %v807 = vadd.f32 %v805, %v806
    %v808 = vmul.f32 %v807, 0.25
    %v809 = vmul.f32 %v567, %v577
    %v810 = vmul.f32 %v569, %v579
    %v811 = vadd.f32 %v809, %v810
    %v812 = vrot.slane %v811, 4
    %v813 = vadd.f32 %v811, %v812
    %v814 = vrot.slane %v813, 2
    %v815 = vadd.f32 %v813, %v814
    %v816 = vrot.slane %v815, 1
    %v817 = vadd.f32 %v815, %v816
    %v818 = vmul.f32 %v817, 0.25
    %v819 = vmul.f32 %v567, %v616
    %v820 = vmul.f32 %v569, %v618
    %v821 = vadd.f32 %v819, %v820
    %v822 = vrot.slane %v821, 4
    %v823 = vadd.f32 %v821, %v822
    %v824 = vrot.slane %v823, 2
    %v825 = vadd.f32 %v823, %v824
    %v826 = vrot.slane %v825, 1
    %v827 = vadd.f32 %v825, %v826
    %v828 = vmul.f32 %v827, 0.25
    %v829 = vmax.f32 %v798, %v808
    %v830 = vmax.f32 %v829, %v818
    %v831 = vmax.f32 %v830, %v828
    %v832 = vsub.f32 %v798, %v831
    %v833 = vmul.f32 %v832, 1.442695
    %v834 = vpow.pop %v833
    %v835 = vsub.f32 %v808, %v831
    %v836 = vmul.f32 %v835, 1.442695
    %v837 = vpow.pop %v836
    %v838 = vsub.f32 %v818, %v831
    %v839 = vmul.f32 %v838, 1.442695
    %v840 = vpow.pop %v839
    %v841 = vsub.f32 %v828, %v831
    %v842 = vmul.f32 %v841, 1.442695
    %v843 = vpow.pop %v842
    %v844 = vadd.f32 %v834, %v837
    %v845 = vadd.f32 %v844, %v840
    %v846 = vadd.f32 %v845, %v843
    %v847 = vrcp.pop %v846
    %v848 = vmul.f32 %v834, %v847
    %v849 = vmul.f32 %v848, %v509
    %v850 = vmul.f32 %v848, %v511
    %v851 = vmul.f32 %v837, %v847
    %v852 = vmul.f32 %v851, %v548
    %v853 = vmul.f32 %v851, %v550
    %v854 = vadd.f32 %v849, %v852
    %v855 = vadd.f32 %v850, %v853
    %v856 = vmul.f32 %v840, %v847
    %v857 = vmul.f32 %v856, %v587
    %v858 = vmul.f32 %v856, %v589
    %v859 = vadd.f32 %v854, %v857
    %v860 = vadd.f32 %v855, %v858
    %v861 = vmul.f32 %v843, %v847
    %v862 = vmul.f32 %v861, %v626
    %v863 = vmul.f32 %v861, %v628
    %v864 = vadd.f32 %v859, %v862
    %v865 = vadd.f32 %v860, %v863
    %v866 = vmul.f32 %v606, %v499
    %v867 = vmul.f32 %v608, %v501
    %v868 = vadd.f32 %v866, %v867
    %v869 = vrot.slane %v868, 4
    %v870 = vadd.f32 %v868, %v869
    %v871 = vrot.slane %v870, 2
    %v872 = vadd.f32 %v870, %v871
    %v873 = vrot.slane %v872, 1
    %v874 = vadd.f32 %v872, %v873
    %v875 = vmul.f32 %v874, 0.25
    %v876 = vmul.f32 %v606, %v538
    %v877 = vmul.f32 %v608, %v540
    %v878 = vadd.f32 %v876, %v877
    %v879 = vrot.slane %v878, 4
    %v880 = vadd.f32 %v878, %v879
    %v881 = vrot.slane %v880, 2
    %v882 = vadd.f32 %v880, %v881
    %v883 = vrot.slane %v882, 1
    %v884 = vadd.f32 %v882, %v883
    %v885 = vmul.f32 %v884, 0.25
    %v886 = vmul.f32 %v606, %v577
    %v887 = vmul.f32 %v608, %v579
    %v888 = vadd.f32 %v886, %v887
    %v889 = vrot.slane %v888, 4
    %v890 = vadd.f32 %v888, %v889
    %v891 = vrot.slane %v890, 2
    %v892 = vadd.f32 %v890, %v891
    %v893 = vrot.slane %v892, 1
    %v894 = vadd.f32 %v892, %v893
    %v895 = vmul.f32 %v894, 0.25
    %v896 = vmul.f32 %v606, %v616
    %v897 = vmul.f32 %v608, %v618
    %v898 = vadd.f32 %v896, %v897
    %v899 = vrot.slane %v898, 4
    %v900 = vadd.f32 %v898, %v899
    %v901 = vrot.slane %v900, 2
    %v902 = vadd.f32 %v900, %v901
    %v903 = vrot.slane %v902, 1
    %v904 = vadd.f32 %v902, %v903
    %v905 = vmul.f32 %v904, 0.25
    %v906 = vmax.f32 %v875, %v885
    %v907 = vmax.f32 %v906, %v895
    %v908 = vmax.f32 %v907, %v905
    %v909 = vsub.f32 %v875, %v908
    %v910 = vmul.f32 %v909, 1.442695
    %v911 = vpow.pop %v910
    %v912 = vsub.f32 %v885, %v908
    %v913 = vmul.f32 %v912, 1.442695
    %v914 = vpow.pop %v913
    %v915 = vsub.f32 %v895, %v908
    %v916 = vmul.f32 %v915, 1.442695
    %v917 = vpow.pop %v916
    %v918 = vsub.f32 %v905, %v908
    %v919 = vmul.f32 %v918, 1.442695
    %v920 = vpow.pop %v919
    %v921 = vadd.f32 %v911, %v914
    %v922 = vadd.f32 %v921, %v917
    %v923 = vadd.f32 %v922, %v920
    %v924 = vrcp.pop %v923
    %v925 = vmul.f32 %v911, %v924
    %v926 = vmul.f32 %v925, %v509
    %v927 = vmul.f32 %v925, %v511
    %v928 = vmul.f32 %v914, %v924
    %v929 = vmul.f32 %v928, %v548
    %v930 = vmul.f32 %v928, %v550
    %v931 = vadd.f32 %v926, %v929
    %v932 = vadd.f32 %v927, %v930
    %v933 = vmul.f32 %v917, %v924
    %v934 = vmul.f32 %v933, %v587
    %v935 = vmul.f32 %v933, %v589
    %v936 = vadd.f32 %v931, %v934
    %v937 = vadd.f32 %v932, %v935
    %v938 = vmul.f32 %v920, %v924
    %v939 = vmul.f32 %v938, %v626
    %v940 = vmul.f32 %v938, %v628
    %v941 = vadd.f32 %v936, %v939
    %v942 = vadd.f32 %v937, %v940
    %v943 = vpack.c.bf16 %v711, %v710
    %v944 = vpack.c.bf16 %v788, %v787
    %v945 = vpack.c.bf16 %v865, %v864
    %v946 = vpack.c.bf16 %v942, %v941
    %v947 = vmul.f32 %v494, %v504
    %v948 = vmul.f32 %v496, %v506
    %v949 = vadd.f32 %v947, %v948
    %v950 = vrot.slane %v949, 4
    %v951 = vadd.f32 %v949, %v950
    %v952 = vrot.slane %v951, 2
    %v953 = vadd.f32 %v951, %v952
    %v954 = vrot.slane %v953, 1
    %v955 = vadd.f32 %v953, %v954
    %v956 = vmul.f32 %v955, 0.25
    %v957 = vmul.f32 %v494, %v543
    %v958 = vmul.f32 %v496, %v545
    %v959 = vadd.f32 %v957, %v958
    %v960 = vrot.slane %v959, 4
    %v961 = vadd.f32 %v959, %v960
    %v962 = vrot.slane %v961, 2
    %v963 = vadd.f32 %v961, %v962
    %v964 = vrot.slane %v963, 1
    %v965 = vadd.f32 %v963, %v964
    %v966 = vmul.f32 %v965, 0.25
    %v967 = vmul.f32 %v494, %v582
    %v968 = vmul.f32 %v496, %v584
    %v969 = vadd.f32 %v967, %v968
    %v970 = vrot.slane %v969, 4
    %v971 = vadd.f32 %v969, %v970
    %v972 = vrot.slane %v971, 2
    %v973 = vadd.f32 %v971, %v972
    %v974 = vrot.slane %v973, 1
    %v975 = vadd.f32 %v973, %v974
    %v976 = vmul.f32 %v975, 0.25
    %v977 = vmul.f32 %v494, %v621
    %v978 = vmul.f32 %v496, %v623
    %v979 = vadd.f32 %v977, %v978
    %v980 = vrot.slane %v979, 4
    %v981 = vadd.f32 %v979, %v980
    %v982 = vrot.slane %v981, 2
    %v983 = vadd.f32 %v981, %v982
    %v984 = vrot.slane %v983, 1
    %v985 = vadd.f32 %v983, %v984
    %v986 = vmul.f32 %v985, 0.25
    %v987 = vmax.f32 %v956, %v966
    %v988 = vmax.f32 %v987, %v976
    %v989 = vmax.f32 %v988, %v986
    %v990 = vsub.f32 %v956, %v989
    %v991 = vmul.f32 %v990, 1.442695
    %v992 = vpow.pop %v991
    %v993 = vsub.f32 %v966, %v989
    %v994 = vmul.f32 %v993, 1.442695
    %v995 = vpow.pop %v994
    %v996 = vsub.f32 %v976, %v989
    %v997 = vmul.f32 %v996, 1.442695
    %v998 = vpow.pop %v997
    %v999 = vsub.f32 %v986, %v989
    %v1000 = vmul.f32 %v999, 1.442695
    %v1001 = vpow.pop %v1000
    %v1002 = vadd.f32 %v992, %v995
    %v1003 = vadd.f32 %v1002, %v998
    %v1004 = vadd.f32 %v1003, %v1001
    %v1005 = vrcp.pop %v1004
    %v1006 = vmul.f32 %v992, %v1005
    %v1007 = vmul.f32 %v1006, %v514
    %v1008 = vmul.f32 %v1006, %v516
    %v1009 = vmul.f32 %v995, %v1005
    %v1010 = vmul.f32 %v1009, %v553
    %v1011 = vmul.f32 %v1009, %v555
    %v1012 = vadd.f32 %v1007, %v1010
    %v1013 = vadd.f32 %v1008, %v1011
    %v1014 = vmul.f32 %v998, %v1005
    %v1015 = vmul.f32 %v1014, %v592
    %v1016 = vmul.f32 %v1014, %v594
    %v1017 = vadd.f32 %v1012, %v1015
    %v1018 = vadd.f32 %v1013, %v1016
    %v1019 = vmul.f32 %v1001, %v1005
    %v1020 = vmul.f32 %v1019, %v631
    %v1021 = vmul.f32 %v1019, %v633
    %v1022 = vadd.f32 %v1017, %v1020
    %v1023 = vadd.f32 %v1018, %v1021
    %v1024 = vmul.f32 %v533, %v504
    %v1025 = vmul.f32 %v535, %v506
    %v1026 = vadd.f32 %v1024, %v1025
    %v1027 = vrot.slane %v1026, 4
    %v1028 = vadd.f32 %v1026, %v1027
    %v1029 = vrot.slane %v1028, 2
    %v1030 = vadd.f32 %v1028, %v1029
    %v1031 = vrot.slane %v1030, 1
    %v1032 = vadd.f32 %v1030, %v1031
    %v1033 = vmul.f32 %v1032, 0.25
    %v1034 = vmul.f32 %v533, %v543
    %v1035 = vmul.f32 %v535, %v545
    %v1036 = vadd.f32 %v1034, %v1035
    %v1037 = vrot.slane %v1036, 4
    %v1038 = vadd.f32 %v1036, %v1037
    %v1039 = vrot.slane %v1038, 2
    %v1040 = vadd.f32 %v1038, %v1039
    %v1041 = vrot.slane %v1040, 1
    %v1042 = vadd.f32 %v1040, %v1041
    %v1043 = vmul.f32 %v1042, 0.25
    %v1044 = vmul.f32 %v533, %v582
    %v1045 = vmul.f32 %v535, %v584
    %v1046 = vadd.f32 %v1044, %v1045
    %v1047 = vrot.slane %v1046, 4
    %v1048 = vadd.f32 %v1046, %v1047
    %v1049 = vrot.slane %v1048, 2
    %v1050 = vadd.f32 %v1048, %v1049
    %v1051 = vrot.slane %v1050, 1
    %v1052 = vadd.f32 %v1050, %v1051
    %v1053 = vmul.f32 %v1052, 0.25
    %v1054 = vmul.f32 %v533, %v621
    %v1055 = vmul.f32 %v535, %v623
    %v1056 = vadd.f32 %v1054, %v1055
    %v1057 = vrot.slane %v1056, 4
    %v1058 = vadd.f32 %v1056, %v1057
    %v1059 = vrot.slane %v1058, 2
    %v1060 = vadd.f32 %v1058, %v1059
    %v1061 = vrot.slane %v1060, 1
    %v1062 = vadd.f32 %v1060, %v1061
    %v1063 = vmul.f32 %v1062, 0.25
    %v1064 = vmax.f32 %v1033, %v1043
    %v1065 = vmax.f32 %v1064, %v1053
    %v1066 = vmax.f32 %v1065, %v1063
    %v1067 = vsub.f32 %v1033, %v1066
    %v1068 = vmul.f32 %v1067, 1.442695
    %v1069 = vpow.pop %v1068
    %v1070 = vsub.f32 %v1043, %v1066
    %v1071 = vmul.f32 %v1070, 1.442695
    %v1072 = vpow.pop %v1071
    %v1073 = vsub.f32 %v1053, %v1066
    %v1074 = vmul.f32 %v1073, 1.442695
    %v1075 = vpow.pop %v1074
    %v1076 = vsub.f32 %v1063, %v1066
    %v1077 = vmul.f32 %v1076, 1.442695
    %v1078 = vpow.pop %v1077
    %v1079 = vadd.f32 %v1069, %v1072
    %v1080 = vadd.f32 %v1079, %v1075
    %v1081 = vadd.f32 %v1080, %v1078
    %v1082 = vrcp.pop %v1081
    %v1083 = vmul.f32 %v1069, %v1082
    %v1084 = vmul.f32 %v1083, %v514
    %v1085 = vmul.f32 %v1083, %v516
    %v1086 = vmul.f32 %v1072, %v1082
    %v1087 = vmul.f32 %v1086, %v553
    %v1088 = vmul.f32 %v1086, %v555
    %v1089 = vadd.f32 %v1084, %v1087
    %v1090 = vadd.f32 %v1085, %v1088
    %v1091 = vmul.f32 %v1075, %v1082
    %v1092 = vmul.f32 %v1091, %v592
    %v1093 = vmul.f32 %v1091, %v594
    %v1094 = vadd.f32 %v1089, %v1092
    %v1095 = vadd.f32 %v1090, %v1093
    %v1096 = vmul.f32 %v1078, %v1082
    %v1097 = vmul.f32 %v1096, %v631
    %v1098 = vmul.f32 %v1096, %v633
    %v1099 = vadd.f32 %v1094, %v1097
    %v1100 = vadd.f32 %v1095, %v1098
    %v1101 = vmul.f32 %v572, %v504
    %v1102 = vmul.f32 %v574, %v506
    %v1103 = vadd.f32 %v1101, %v1102
    %v1104 = vrot.slane %v1103, 4
    %v1105 = vadd.f32 %v1103, %v1104
    %v1106 = vrot.slane %v1105, 2
    %v1107 = vadd.f32 %v1105, %v1106
    %v1108 = vrot.slane %v1107, 1
    %v1109 = vadd.f32 %v1107, %v1108
    %v1110 = vmul.f32 %v1109, 0.25
    %v1111 = vmul.f32 %v572, %v543
    %v1112 = vmul.f32 %v574, %v545
    %v1113 = vadd.f32 %v1111, %v1112
    %v1114 = vrot.slane %v1113, 4
    %v1115 = vadd.f32 %v1113, %v1114
    %v1116 = vrot.slane %v1115, 2
    %v1117 = vadd.f32 %v1115, %v1116
    %v1118 = vrot.slane %v1117, 1
    %v1119 = vadd.f32 %v1117, %v1118
    %v1120 = vmul.f32 %v1119, 0.25
    %v1121 = vmul.f32 %v572, %v582
    %v1122 = vmul.f32 %v574, %v584
    %v1123 = vadd.f32 %v1121, %v1122
    %v1124 = vrot.slane %v1123, 4
    %v1125 = vadd.f32 %v1123, %v1124
    %v1126 = vrot.slane %v1125, 2
    %v1127 = vadd.f32 %v1125, %v1126
    %v1128 = vrot.slane %v1127, 1
    %v1129 = vadd.f32 %v1127, %v1128
    %v1130 = vmul.f32 %v1129, 0.25
    %v1131 = vmul.f32 %v572, %v621
    %v1132 = vmul.f32 %v574, %v623
    %v1133 = vadd.f32 %v1131, %v1132
    %v1134 = vrot.slane %v1133, 4
    %v1135 = vadd.f32 %v1133, %v1134
    %v1136 = vrot.slane %v1135, 2
    %v1137 = vadd.f32 %v1135, %v1136
    %v1138 = vrot.slane %v1137, 1
    %v1139 = vadd.f32 %v1137, %v1138
    %v1140 = vmul.f32 %v1139, 0.25
    %v1141 = vmax.f32 %v1110, %v1120
    %v1142 = vmax.f32 %v1141, %v1130
    %v1143 = vmax.f32 %v1142, %v1140
    %v1144 = vsub.f32 %v1110, %v1143
    %v1145 = vmul.f32 %v1144, 1.442695
    %v1146 = vpow.pop %v1145
    %v1147 = vsub.f32 %v1120, %v1143
    %v1148 = vmul.f32 %v1147, 1.442695
    %v1149 = vpow.pop %v1148
    %v1150 = vsub.f32 %v1130, %v1143
    %v1151 = vmul.f32 %v1150, 1.442695
    %v1152 = vpow.pop %v1151
    %v1153 = vsub.f32 %v1140, %v1143
    %v1154 = vmul.f32 %v1153, 1.442695
    %v1155 = vpow.pop %v1154
    %v1156 = vadd.f32 %v1146, %v1149
    %v1157 = vadd.f32 %v1156, %v1152
    %v1158 = vadd.f32 %v1157, %v1155
    %v1159 = vrcp.pop %v1158
    %v1160 = vmul.f32 %v1146, %v1159
    %v1161 = vmul.f32 %v1160, %v514
    %v1162 = vmul.f32 %v1160, %v516
    %v1163 = vmul.f32 %v1149, %v1159
    %v1164 = vmul.f32 %v1163, %v553
    %v1165 = vmul.f32 %v1163, %v555
    %v1166 = vadd.f32 %v1161, %v1164
    %v1167 = vadd.f32 %v1162, %v1165
    %v1168 = vmul.f32 %v1152, %v1159
    %v1169 = vmul.f32 %v1168, %v592
    %v1170 = vmul.f32 %v1168, %v594
    %v1171 = vadd.f32 %v1166, %v1169
    %v1172 = vadd.f32 %v1167, %v1170
    %v1173 = vmul.f32 %v1155, %v1159
    %v1174 = vmul.f32 %v1173, %v631
    %v1175 = vmul.f32 %v1173, %v633
    %v1176 = vadd.f32 %v1171, %v1174
    %v1177 = vadd.f32 %v1172, %v1175
    %v1178 = vmul.f32 %v611, %v504
    %v1179 = vmul.f32 %v613, %v506
    %v1180 = vadd.f32 %v1178, %v1179
    %v1181 = vrot.slane %v1180, 4
    %v1182 = vadd.f32 %v1180, %v1181
    %v1183 = vrot.slane %v1182, 2
    %v1184 = vadd.f32 %v1182, %v1183
    %v1185 = vrot.slane %v1184, 1
    %v1186 = vadd.f32 %v1184, %v1185
    %v1187 = vmul.f32 %v1186, 0.25
    %v1188 = vmul.f32 %v611, %v543
    %v1189 = vmul.f32 %v613, %v545
    %v1190 = vadd.f32 %v1188, %v1189
    %v1191 = vrot.slane %v1190, 4
    %v1192 = vadd.f32 %v1190, %v1191
    %v1193 = vrot.slane %v1192, 2
    %v1194 = vadd.f32 %v1192, %v1193
    %v1195 = vrot.slane %v1194, 1
    %v1196 = vadd.f32 %v1194, %v1195
    %v1197 = vmul.f32 %v1196, 0.25
    %v1198 = vmul.f32 %v611, %v582
    %v1199 = vmul.f32 %v613, %v584
    %v1200 = vadd.f32 %v1198, %v1199
    %v1201 = vrot.slane %v1200, 4
    %v1202 = vadd.f32 %v1200, %v1201
    %v1203 = vrot.slane %v1202, 2
    %v1204 = vadd.f32 %v1202, %v1203
    %v1205 = vrot.slane %v1204, 1
    %v1206 = vadd.f32 %v1204, %v1205
    %v1207 = vmul.f32 %v1206, 0.25
    %v1208 = vmul.f32 %v611, %v621
    %v1209 = vmul.f32 %v613, %v623
    %v1210 = vadd.f32 %v1208, %v1209
    %v1211 = vrot.slane %v1210, 4
    %v1212 = vadd.f32 %v1210, %v1211
    %v1213 = vrot.slane %v1212, 2
    %v1214 = vadd.f32 %v1212, %v1213
    %v1215 = vrot.slane %v1214, 1
    %v1216 = vadd.f32 %v1214, %v1215
    %v1217 = vmul.f32 %v1216, 0.25
    %v1218 = vmax.f32 %v1187, %v1197
    %v1219 = vmax.f32 %v1218, %v1207
    %v1220 = vmax.f32 %v1219, %v1217
    %v1221 = vsub.f32 %v1187, %v1220
    %v1222 = vmul.f32 %v1221, 1.442695
    %v1223 = vpow.pop %v1222
    %v1224 = vsub.f32 %v1197, %v1220
    %v1225 = vmul.f32 %v1224, 1.442695
    %v1226 = vpow.pop %v1225
    %v1227 = vsub.f32 %v1207, %v1220
    %v1228 = vmul.f32 %v1227, 1.442695
    %v1229 = vpow.pop %v1228
    %v1230 = vsub.f32 %v1217, %v1220
    %v1231 = vmul.f32 %v1230, 1.442695
    %v1232 = vpow.pop %v1231
    %v1233 = vadd.f32 %v1223, %v1226
    %v1234 = vadd.f32 %v1233, %v1229
    %v1235 = vadd.f32 %v1234, %v1232
    %v1236 = vrcp.pop %v1235
    %v1237 = vmul.f32 %v1223, %v1236
    %v1238 = vmul.f32 %v1237, %v514
    %v1239 = vmul.f32 %v1237, %v516
    %v1240 = vmul.f32 %v1226, %v1236
    %v1241 = vmul.f32 %v1240, %v553
    %v1242 = vmul.f32 %v1240, %v555
    %v1243 = vadd.f32 %v1238, %v1241
    %v1244 = vadd.f32 %v1239, %v1242
    %v1245 = vmul.f32 %v1229, %v1236
    %v1246 = vmul.f32 %v1245, %v592
    %v1247 = vmul.f32 %v1245, %v594
    %v1248 = vadd.f32 %v1243, %v1246
    %v1249 = vadd.f32 %v1244, %v1247
    %v1250 = vmul.f32 %v1232, %v1236
    %v1251 = vmul.f32 %v1250, %v631
    %v1252 = vmul.f32 %v1250, %v633
    %v1253 = vadd.f32 %v1248, %v1251
    %v1254 = vadd.f32 %v1249, %v1252
    %v1255 = vpack.c.bf16 %v1023, %v1022
    %v1256 = vpack.c.bf16 %v1100, %v1099
    %v1257 = vpack.c.bf16 %v1177, %v1176
    %v1258 = vpack.c.bf16 %v1254, %v1253
    %v1263 = vunpack.c.l.b16 %v115
    %v1264 = vunpack.c.l.b16 %v116
    %v1265 = vunpack.c.l.b16 %v117
    %v1266 = vunpack.c.l.b16 %v118
    %v1267 = vpack.c.b16 %v1264, %v1263
    %v1268 = vpack.c.b16 %v1266, %v1265
    %1269 = vrot.lane.b32.xlu0 %v1267, 112
    %v1270 = vpop.permute.xlu0 %1269
    %1271 = vrot.lane.b32.xlu0 %v1268, 112
    %v1272 = vpop.permute.xlu0 %1271
    %vm1273 = vcmask 130048
    %v1275 = vsel %vm1273, %v1270, 0
    %v1278 = vsel %vm1273, %v1272, 0
    %1280 = vmatpush.bf16.msra.mxu0 0
    %1281 = vmatpush.bf16.msra.mxu0 0
    %1282 = vmatpush.bf16.msra.mxu0 0
    %1283 = vmatpush.bf16.msra.mxu0 0
    %1284 = vmatpush.bf16.msra.mxu0 0
    %1285 = vmatpush.bf16.msra.mxu0 0
    %1286 = vmatpush.bf16.msra.mxu0 0
    %1287 = vmatpush.bf16.msra.mxu0 %v1255
    %1288 = vmatmul.bf16.gmra.mxu0 %v1275
    %v1289 = vpop.f32.mrf.mxu0
    %v1290 = vadd.f32 0.0, %v1289
    %v1291 = vpop.f32.mrf.mxu0
    %v1292 = vadd.f32 0.0, %v1291
    %1293 = vmatmul.bf16.gmra.mxu0 %v1278
    %v1294 = vpop.f32.mrf.mxu0
    %v1295 = vadd.f32 0.0, %v1294
    %v1296 = vpop.f32.mrf.mxu0
    %v1297 = vadd.f32 0.0, %v1296
    %1298 = vdwg.mxu0
    %1299 = vmatpush.bf16.msra.mxu0 0
    %1300 = vmatpush.bf16.msra.mxu0 0
    %1301 = vmatpush.bf16.msra.mxu0 0
    %1302 = vmatpush.bf16.msra.mxu0 0
    %1303 = vmatpush.bf16.msra.mxu0 0
    %1304 = vmatpush.bf16.msra.mxu0 0
    %1305 = vmatpush.bf16.msra.mxu0 0
    %1306 = vmatpush.bf16.msra.mxu0 %v1256
    %1307 = vmatmul.bf16.gmra.mxu0 %v1275
    %v1308 = vpop.f32.mrf.mxu0
    %v1309 = vadd.f32 0.0, %v1308
    %v1310 = vpop.f32.mrf.mxu0
    %v1311 = vadd.f32 0.0, %v1310
    %1312 = vmatmul.bf16.gmra.mxu0 %v1278
    %v1313 = vpop.f32.mrf.mxu0
    %v1314 = vadd.f32 0.0, %v1313
    %v1315 = vpop.f32.mrf.mxu0
    %v1316 = vadd.f32 0.0, %v1315
    %1317 = vdwg.mxu0
    %1318 = vmatpush.bf16.msra.mxu0 0
    %1319 = vmatpush.bf16.msra.mxu0 0
    %1320 = vmatpush.bf16.msra.mxu0 0
    %1321 = vmatpush.bf16.msra.mxu0 0
    %1322 = vmatpush.bf16.msra.mxu0 0
    %1323 = vmatpush.bf16.msra.mxu0 0
    %1324 = vmatpush.bf16.msra.mxu0 0
    %1325 = vmatpush.bf16.msra.mxu0 %v1257
    %1326 = vmatmul.bf16.gmra.mxu0 %v1275
    %v1327 = vpop.f32.mrf.mxu0
    %v1328 = vadd.f32 0.0, %v1327
    %v1329 = vpop.f32.mrf.mxu0
    %v1330 = vadd.f32 0.0, %v1329
    %1331 = vmatmul.bf16.gmra.mxu0 %v1278
    %v1332 = vpop.f32.mrf.mxu0
    %v1333 = vadd.f32 0.0, %v1332
    %v1334 = vpop.f32.mrf.mxu0
    %v1335 = vadd.f32 0.0, %v1334
    %1336 = vdwg.mxu0
    %1337 = vmatpush.bf16.msra.mxu0 0
    %1338 = vmatpush.bf16.msra.mxu0 0
    %1339 = vmatpush.bf16.msra.mxu0 0
    %1340 = vmatpush.bf16.msra.mxu0 0
    %1341 = vmatpush.bf16.msra.mxu0 0
    %1342 = vmatpush.bf16.msra.mxu0 0
    %1343 = vmatpush.bf16.msra.mxu0 0
    %1344 = vmatpush.bf16.msra.mxu0 %v1258
    %1345 = vmatmul.bf16.gmra.mxu0 %v1275
    %v1346 = vpop.f32.mrf.mxu0
    %v1347 = vadd.f32 0.0, %v1346
    %v1348 = vpop.f32.mrf.mxu0
    %v1349 = vadd.f32 0.0, %v1348
    %1350 = vmatmul.bf16.gmra.mxu0 %v1278
    %v1351 = vpop.f32.mrf.mxu0
    %v1352 = vadd.f32 0.0, %v1351
    %v1353 = vpop.f32.mrf.mxu0
    %v1354 = vadd.f32 0.0, %v1353
    %1355 = vdwg.mxu0
    %v1357 = vsel %vm1273, %v1267, 0
    %v1360 = vsel %vm1273, %v1268, 0
    %1362 = vmatpush.bf16.msra.mxu0 0
    %1363 = vmatpush.bf16.msra.mxu0 0
    %1364 = vmatpush.bf16.msra.mxu0 0
    %1365 = vmatpush.bf16.msra.mxu0 0
    %1366 = vmatpush.bf16.msra.mxu0 0
    %1367 = vmatpush.bf16.msra.mxu0 0
    %1368 = vmatpush.bf16.msra.mxu0 0
    %1369 = vmatpush.bf16.msra.mxu0 %v943
    %1370 = vmatmul.bf16.gmra.mxu0 %v1357
    %v1371 = vpop.f32.mrf.mxu0
    %v1372 = vadd.f32 %v1290, %v1371
    %v1373 = vpop.f32.mrf.mxu0
    %v1374 = vadd.f32 %v1292, %v1373
    %1375 = vmatmul.bf16.gmra.mxu0 %v1360
    %v1376 = vpop.f32.mrf.mxu0
    %v1377 = vadd.f32 %v1295, %v1376
    %v1378 = vpop.f32.mrf.mxu0
    %v1379 = vadd.f32 %v1297, %v1378
    %1380 = vdwg.mxu0
    %1381 = vmatpush.bf16.msra.mxu0 0
    %1382 = vmatpush.bf16.msra.mxu0 0
    %1383 = vmatpush.bf16.msra.mxu0 0
    %1384 = vmatpush.bf16.msra.mxu0 0
    %1385 = vmatpush.bf16.msra.mxu0 0
    %1386 = vmatpush.bf16.msra.mxu0 0
    %1387 = vmatpush.bf16.msra.mxu0 0
    %1388 = vmatpush.bf16.msra.mxu0 %v944
    %1389 = vmatmul.bf16.gmra.mxu0 %v1357
    %v1390 = vpop.f32.mrf.mxu0
    %v1391 = vadd.f32 %v1309, %v1390
    %v1392 = vpop.f32.mrf.mxu0
    %v1393 = vadd.f32 %v1311, %v1392
    %1394 = vmatmul.bf16.gmra.mxu0 %v1360
    %v1395 = vpop.f32.mrf.mxu0
    %v1396 = vadd.f32 %v1314, %v1395
    %v1397 = vpop.f32.mrf.mxu0
    %v1398 = vadd.f32 %v1316, %v1397
    %1399 = vdwg.mxu0
    %1400 = vmatpush.bf16.msra.mxu0 0
    %1401 = vmatpush.bf16.msra.mxu0 0
    %1402 = vmatpush.bf16.msra.mxu0 0
    %1403 = vmatpush.bf16.msra.mxu0 0
    %1404 = vmatpush.bf16.msra.mxu0 0
    %1405 = vmatpush.bf16.msra.mxu0 0
    %1406 = vmatpush.bf16.msra.mxu0 0
    %1407 = vmatpush.bf16.msra.mxu0 %v945
    %1408 = vmatmul.bf16.gmra.mxu0 %v1357
    %v1409 = vpop.f32.mrf.mxu0
    %v1410 = vadd.f32 %v1328, %v1409
    %v1411 = vpop.f32.mrf.mxu0
    %v1412 = vadd.f32 %v1330, %v1411
    %1413 = vmatmul.bf16.gmra.mxu0 %v1360
    %v1414 = vpop.f32.mrf.mxu0
    %v1415 = vadd.f32 %v1333, %v1414
    %v1416 = vpop.f32.mrf.mxu0
    %v1417 = vadd.f32 %v1335, %v1416
    %1418 = vdwg.mxu0
    %1419 = vmatpush.bf16.msra.mxu0 0
    %1420 = vmatpush.bf16.msra.mxu0 0
    %1421 = vmatpush.bf16.msra.mxu0 0
    %1422 = vmatpush.bf16.msra.mxu0 0
    %1423 = vmatpush.bf16.msra.mxu0 0
    %1424 = vmatpush.bf16.msra.mxu0 0
    %1425 = vmatpush.bf16.msra.mxu0 0
    %1426 = vmatpush.bf16.msra.mxu0 %v946
    %1427 = vmatmul.bf16.gmra.mxu0 %v1357
    %v1428 = vpop.f32.mrf.mxu0
    %v1429 = vadd.f32 %v1347, %v1428
    %v1430 = vpop.f32.mrf.mxu0
    %v1431 = vadd.f32 %v1349, %v1430
    %1432 = vmatmul.bf16.gmra.mxu0 %v1360
    %v1433 = vpop.f32.mrf.mxu0
    %v1434 = vadd.f32 %v1352, %v1433
    %v1435 = vpop.f32.mrf.mxu0
    %v1436 = vadd.f32 %v1354, %v1435
    %1437 = vdwg.mxu0
    %1439 = vset.pattern.permute.xlu0 0
    %1440 = vperm.xlu0 %1439, %v59
    %v1441 = vpop.permute.xlu0 %1440
    %1444 = vset.pattern.permute.xlu0 0
    %1445 = vperm.xlu0 %1444, %v60
    %v1446 = vpop.permute.xlu0 %1445
    %1449 = vset.pattern.permute.xlu0 0
    %1450 = vperm.xlu0 %1449, %v61
    %v1451 = vpop.permute.xlu0 %1450
    %1454 = vset.pattern.permute.xlu0 0
    %1455 = vperm.xlu0 %1454, %v62
    %v1456 = vpop.permute.xlu0 %1455
    %v1458 = vadd.f32 %v1372, %v1441
    %v1459 = vadd.f32 %v1391, %v1441
    %v1460 = vadd.f32 %v1410, %v1441
    %v1461 = vadd.f32 %v1429, %v1441
    %v1462 = vadd.f32 %v1374, %v1446
    %v1463 = vadd.f32 %v1393, %v1446
    %v1464 = vadd.f32 %v1412, %v1446
    %v1465 = vadd.f32 %v1431, %v1446
    %v1466 = vadd.f32 %v1377, %v1451
    %v1467 = vadd.f32 %v1396, %v1451
    %v1468 = vadd.f32 %v1415, %v1451
    %v1469 = vadd.f32 %v1434, %v1451
    %v1470 = vadd.f32 %v1379, %v1456
    %v1471 = vadd.f32 %v1398, %v1456
    %v1472 = vadd.f32 %v1417, %v1456
    %v1473 = vadd.f32 %v1436, %v1456
    %v1474 = vadd.f32 %v1458, %v19
    %v1475 = vadd.f32 %v1459, %v20
    %v1476 = vadd.f32 %v1460, %v21
    %v1477 = vadd.f32 %v1461, %v22
    %v1478 = vadd.f32 %v1462, %v23
    %v1479 = vadd.f32 %v1463, %v24
    %v1480 = vadd.f32 %v1464, %v25
    %v1481 = vadd.f32 %v1465, %v26
    %v1482 = vadd.f32 %v1466, %v27
    %v1483 = vadd.f32 %v1467, %v28
    %v1484 = vadd.f32 %v1468, %v29
    %v1485 = vadd.f32 %v1469, %v30
    %v1486 = vadd.f32 %v1470, %v31
    %v1487 = vadd.f32 %v1471, %v32
    %v1488 = vadd.f32 %v1472, %v33
    %v1489 = vadd.f32 %v1473, %v34
    %v1490 = vadd.f32 %v1474, %v1478
    %v1491 = vadd.f32 %v1490, %v1482
    %v1492 = vadd.f32 %v1491, %v1486
    %v1493 = vrot.slane %v1492, 4
    %v1494 = vadd.f32 %v1492, %v1493
    %v1495 = vrot.slane %v1494, 2
    %v1496 = vadd.f32 %v1494, %v1495
    %v1497 = vrot.slane %v1496, 1
    %v1498 = vadd.f32 %v1496, %v1497
    %v1499 = vadd.f32 %v1475, %v1479
    %v1500 = vadd.f32 %v1499, %v1483
    %v1501 = vadd.f32 %v1500, %v1487
    %v1502 = vrot.slane %v1501, 4
    %v1503 = vadd.f32 %v1501, %v1502
    %v1504 = vrot.slane %v1503, 2
    %v1505 = vadd.f32 %v1503, %v1504
    %v1506 = vrot.slane %v1505, 1
    %v1507 = vadd.f32 %v1505, %v1506
    %v1508 = vadd.f32 %v1476, %v1480
    %v1509 = vadd.f32 %v1508, %v1484
    %v1510 = vadd.f32 %v1509, %v1488
    %v1511 = vrot.slane %v1510, 4
    %v1512 = vadd.f32 %v1510, %v1511
    %v1513 = vrot.slane %v1512, 2
    %v1514 = vadd.f32 %v1512, %v1513
    %v1515 = vrot.slane %v1514, 1
    %v1516 = vadd.f32 %v1514, %v1515
    %v1517 = vadd.f32 %v1477, %v1481
    %v1518 = vadd.f32 %v1517, %v1485
    %v1519 = vadd.f32 %v1518, %v1489
    %v1520 = vrot.slane %v1519, 4
    %v1521 = vadd.f32 %v1519, %v1520
    %v1522 = vrot.slane %v1521, 2
    %v1523 = vadd.f32 %v1521, %v1522
    %v1524 = vrot.slane %v1523, 1
    %v1525 = vadd.f32 %v1523, %v1524
    %v1526 = vmul.f32 %v1498, %v213
    %v1527 = vmul.f32 %v1507, %v213
    %v1528 = vmul.f32 %v1516, %v213
    %v1529 = vmul.f32 %v1525, %v213
    %v1530 = vsub.f32 %v1474, %v1526
    %v1531 = vsub.f32 %v1475, %v1527
    %v1532 = vsub.f32 %v1476, %v1528
    %v1533 = vsub.f32 %v1477, %v1529
    %v1534 = vsub.f32 %v1478, %v1526
    %v1535 = vsub.f32 %v1479, %v1527
    %v1536 = vsub.f32 %v1480, %v1528
    %v1537 = vsub.f32 %v1481, %v1529
    %v1538 = vsub.f32 %v1482, %v1526
    %v1539 = vsub.f32 %v1483, %v1527
    %v1540 = vsub.f32 %v1484, %v1528
    %v1541 = vsub.f32 %v1485, %v1529
    %v1542 = vsub.f32 %v1486, %v1526
    %v1543 = vsub.f32 %v1487, %v1527
    %v1544 = vsub.f32 %v1488, %v1528
    %v1545 = vsub.f32 %v1489, %v1529
    %v1546 = vmul.f32 %v1530, %v1530
    %v1547 = vmul.f32 %v1531, %v1531
    %v1548 = vmul.f32 %v1532, %v1532
    %v1549 = vmul.f32 %v1533, %v1533
    %v1550 = vmul.f32 %v1534, %v1534
    %v1551 = vmul.f32 %v1535, %v1535
    %v1552 = vmul.f32 %v1536, %v1536
    %v1553 = vmul.f32 %v1537, %v1537
    %v1554 = vmul.f32 %v1538, %v1538
    %v1555 = vmul.f32 %v1539, %v1539
    %v1556 = vmul.f32 %v1540, %v1540
    %v1557 = vmul.f32 %v1541, %v1541
    %v1558 = vmul.f32 %v1542, %v1542
    %v1559 = vmul.f32 %v1543, %v1543
    %v1560 = vmul.f32 %v1544, %v1544
    %v1561 = vmul.f32 %v1545, %v1545
    %v1562 = vadd.f32 %v1546, %v1550
    %v1563 = vadd.f32 %v1562, %v1554
    %v1564 = vadd.f32 %v1563, %v1558
    %v1565 = vrot.slane %v1564, 4
    %v1566 = vadd.f32 %v1564, %v1565
    %v1567 = vrot.slane %v1566, 2
    %v1568 = vadd.f32 %v1566, %v1567
    %v1569 = vrot.slane %v1568, 1
    %v1570 = vadd.f32 %v1568, %v1569
    %v1571 = vadd.f32 %v1547, %v1551
    %v1572 = vadd.f32 %v1571, %v1555
    %v1573 = vadd.f32 %v1572, %v1559
    %v1574 = vrot.slane %v1573, 4
    %v1575 = vadd.f32 %v1573, %v1574
    %v1576 = vrot.slane %v1575, 2
    %v1577 = vadd.f32 %v1575, %v1576
    %v1578 = vrot.slane %v1577, 1
    %v1579 = vadd.f32 %v1577, %v1578
    %v1580 = vadd.f32 %v1548, %v1552
    %v1581 = vadd.f32 %v1580, %v1556
    %v1582 = vadd.f32 %v1581, %v1560
    %v1583 = vrot.slane %v1582, 4
    %v1584 = vadd.f32 %v1582, %v1583
    %v1585 = vrot.slane %v1584, 2
    %v1586 = vadd.f32 %v1584, %v1585
    %v1587 = vrot.slane %v1586, 1
    %v1588 = vadd.f32 %v1586, %v1587
    %v1589 = vadd.f32 %v1549, %v1553
    %v1590 = vadd.f32 %v1589, %v1557
    %v1591 = vadd.f32 %v1590, %v1561
    %v1592 = vrot.slane %v1591, 4
    %v1593 = vadd.f32 %v1591, %v1592
    %v1594 = vrot.slane %v1593, 2
    %v1595 = vadd.f32 %v1593, %v1594
    %v1596 = vrot.slane %v1595, 1
    %v1597 = vadd.f32 %v1595, %v1596
    %v1598 = vmul.f32 %v1570, %v213
    %v1599 = vmul.f32 %v1579, %v213
    %v1600 = vmul.f32 %v1588, %v213
    %v1601 = vmul.f32 %v1597, %v213
    %v1602 = vadd.f32 %v1598, 1e-05
    %v1603 = vadd.f32 %v1599, 1e-05
    %v1604 = vadd.f32 %v1600, 1e-05
    %v1605 = vadd.f32 %v1601, 1e-05
    %v1606 = vrsqrt.pop %v1602
    %v1607 = vmul.f32 %v1606, %v1602
    %v1608 = vmul.f32 %v1607, %v1606
    %v1609 = vmul.f32 0.5, %v1608
    %v1610 = vsub.f32 1.5, %v1609
    %v1611 = vmul.f32 %v1606, %v1610
    %vm1612 = vweird.f32 %v1602
    %vm1613 = vweird.f32 %v1606
    %vm1614 = vmor %vm1612, %vm1613
    %v1615 = vsel %vm1614, %v1606, %v1611
    %v1616 = vrsqrt.pop %v1603
    %v1617 = vmul.f32 %v1616, %v1603
    %v1618 = vmul.f32 %v1617, %v1616
    %v1619 = vmul.f32 0.5, %v1618
    %v1620 = vsub.f32 1.5, %v1619
    %v1621 = vmul.f32 %v1616, %v1620
    %vm1622 = vweird.f32 %v1603
    %vm1623 = vweird.f32 %v1616
    %vm1624 = vmor %vm1622, %vm1623
    %v1625 = vsel %vm1624, %v1616, %v1621
    %v1626 = vrsqrt.pop %v1604
    %v1627 = vmul.f32 %v1626, %v1604
    %v1628 = vmul.f32 %v1627, %v1626
    %v1629 = vmul.f32 0.5, %v1628
    %v1630 = vsub.f32 1.5, %v1629
    %v1631 = vmul.f32 %v1626, %v1630
    %vm1632 = vweird.f32 %v1604
    %vm1633 = vweird.f32 %v1626
    %vm1634 = vmor %vm1632, %vm1633
    %v1635 = vsel %vm1634, %v1626, %v1631
    %v1636 = vrsqrt.pop %v1605
    %v1637 = vmul.f32 %v1636, %v1605
    %v1638 = vmul.f32 %v1637, %v1636
    %v1639 = vmul.f32 0.5, %v1638
    %v1640 = vsub.f32 1.5, %v1639
    %v1641 = vmul.f32 %v1636, %v1640
    %vm1642 = vweird.f32 %v1605
    %vm1643 = vweird.f32 %v1636
    %vm1644 = vmor %vm1642, %vm1643
    %v1645 = vsel %vm1644, %v1636, %v1641
    %v1646 = vmul.f32 %v1530, %v1615
    %v1647 = vmul.f32 %v1531, %v1625
    %v1648 = vmul.f32 %v1532, %v1635
    %v1649 = vmul.f32 %v1533, %v1645
    %v1650 = vmul.f32 %v1534, %v1615
    %v1651 = vmul.f32 %v1535, %v1625
    %v1652 = vmul.f32 %v1536, %v1635
    %v1653 = vmul.f32 %v1537, %v1645
    %v1654 = vmul.f32 %v1538, %v1615
    %v1655 = vmul.f32 %v1539, %v1625
    %v1656 = vmul.f32 %v1540, %v1635
    %v1657 = vmul.f32 %v1541, %v1645
    %v1658 = vmul.f32 %v1542, %v1615
    %v1659 = vmul.f32 %v1543, %v1625
    %v1660 = vmul.f32 %v1544, %v1635
    %v1661 = vmul.f32 %v1545, %v1645
    %1663 = vset.pattern.permute.xlu0 0
    %1664 = vperm.xlu0 %1663, %v43
    %v1665 = vpop.permute.xlu0 %1664
    %1668 = vset.pattern.permute.xlu0 0
    %1669 = vperm.xlu0 %1668, %v44
    %v1670 = vpop.permute.xlu0 %1669
    %1673 = vset.pattern.permute.xlu0 0
    %1674 = vperm.xlu0 %1673, %v45
    %v1675 = vpop.permute.xlu0 %1674
    %1678 = vset.pattern.permute.xlu0 0
    %1679 = vperm.xlu0 %1678, %v46
    %v1680 = vpop.permute.xlu0 %1679
    %v1682 = vmul.f32 %v1646, %v1665
    %v1683 = vmul.f32 %v1647, %v1665
    %v1684 = vmul.f32 %v1648, %v1665
    %v1685 = vmul.f32 %v1649, %v1665
    %v1686 = vmul.f32 %v1650, %v1670
    %v1687 = vmul.f32 %v1651, %v1670
    %v1688 = vmul.f32 %v1652, %v1670
    %v1689 = vmul.f32 %v1653, %v1670
    %v1690 = vmul.f32 %v1654, %v1675
    %v1691 = vmul.f32 %v1655, %v1675
    %v1692 = vmul.f32 %v1656, %v1675
    %v1693 = vmul.f32 %v1657, %v1675
    %v1694 = vmul.f32 %v1658, %v1680
    %v1695 = vmul.f32 %v1659, %v1680
    %v1696 = vmul.f32 %v1660, %v1680
    %v1697 = vmul.f32 %v1661, %v1680
    %1699 = vset.pattern.permute.xlu0 0
    %1700 = vperm.xlu0 %1699, %v47
    %v1701 = vpop.permute.xlu0 %1700
    %1704 = vset.pattern.permute.xlu0 0
    %1705 = vperm.xlu0 %1704, %v48
    %v1706 = vpop.permute.xlu0 %1705
    %1709 = vset.pattern.permute.xlu0 0
    %1710 = vperm.xlu0 %1709, %v49
    %v1711 = vpop.permute.xlu0 %1710
    %1714 = vset.pattern.permute.xlu0 0
    %1715 = vperm.xlu0 %1714, %v50
    %v1716 = vpop.permute.xlu0 %1715
    %v1718 = vadd.f32 %v1682, %v1701
    %v1719 = vadd.f32 %v1683, %v1701
    %v1720 = vadd.f32 %v1684, %v1701
    %v1721 = vadd.f32 %v1685, %v1701
    %v1722 = vadd.f32 %v1686, %v1706
    %v1723 = vadd.f32 %v1687, %v1706
    %v1724 = vadd.f32 %v1688, %v1706
    %v1725 = vadd.f32 %v1689, %v1706
    %v1726 = vadd.f32 %v1690, %v1711
    %v1727 = vadd.f32 %v1691, %v1711
    %v1728 = vadd.f32 %v1692, %v1711
    %v1729 = vadd.f32 %v1693, %v1711
    %v1730 = vadd.f32 %v1694, %v1716
    %v1731 = vadd.f32 %v1695, %v1716
    %v1732 = vadd.f32 %v1696, %v1716
    %v1733 = vadd.f32 %v1697, %v1716
    %v1734 = vpack.c.bf16 %v1722, %v1718
    %v1735 = vpack.c.bf16 %v1723, %v1719
    %v1736 = vpack.c.bf16 %v1724, %v1720
    %v1737 = vpack.c.bf16 %v1725, %v1721
    %v1738 = vpack.c.bf16 %v1730, %v1726
    %v1739 = vpack.c.bf16 %v1731, %v1727
    %v1740 = vpack.c.bf16 %v1732, %v1728
    %v1741 = vpack.c.bf16 %v1733, %v1729
    %v1754 = vunpack.c.l.b16 %v119
    %v1755 = vunpack.c.l.b16 %v120
    %v1756 = vunpack.c.l.b16 %v121
    %v1757 = vunpack.c.l.b16 %v122
    %v1758 = vunpack.c.l.b16 %v123
    %v1759 = vunpack.c.l.b16 %v124
    %v1760 = vunpack.c.l.b16 %v125
    %v1761 = vunpack.c.l.b16 %v126
    %v1762 = vunpack.c.l.b16 %v127
    %v1763 = vunpack.c.l.b16 %v128
    %v1764 = vunpack.c.l.b16 %v129
    %v1765 = vunpack.c.l.b16 %v130
    %v1766 = vpack.c.b16 %v1755, %v1754
    %v1767 = vpack.c.b16 %v1757, %v1756
    %v1768 = vpack.c.b16 %v1759, %v1758
    %v1769 = vpack.c.b16 %v1761, %v1760
    %v1770 = vpack.c.b16 %v1763, %v1762
    %v1771 = vpack.c.b16 %v1765, %v1764
    %v1773 = vsel %vm460, %v1766, 0
    %v1776 = vsel %vm460, %v1767, 0
    %v1779 = vsel %vm460, %v1768, 0
    %v1782 = vsel %vm460, %v1769, 0
    %v1785 = vsel %vm460, %v1770, 0
    %v1788 = vsel %vm460, %v1771, 0
    %1790 = vmatpush.bf16.msra.mxu0 0
    %1791 = vmatpush.bf16.msra.mxu0 0
    %1792 = vmatpush.bf16.msra.mxu0 0
    %1793 = vmatpush.bf16.msra.mxu0 0
    %1794 = vmatpush.bf16.msra.mxu0 0
    %1795 = vmatpush.bf16.msra.mxu0 0
    %1796 = vmatpush.bf16.msra.mxu0 %v1738
    %1797 = vmatpush.bf16.msra.mxu0 %v1734
    %1798 = vmatmul.bf16.gmra.mxu0 %v1773
    %v1799 = vpop.f32.mrf.mxu0
    %v1800 = vadd.f32 0.0, %v1799
    %v1801 = vpop.f32.mrf.mxu0
    %v1802 = vadd.f32 0.0, %v1801
    %1803 = vmatmul.bf16.gmra.mxu0 %v1776
    %v1804 = vpop.f32.mrf.mxu0
    %v1805 = vadd.f32 0.0, %v1804
    %v1806 = vpop.f32.mrf.mxu0
    %v1807 = vadd.f32 0.0, %v1806
    %1808 = vmatmul.bf16.gmra.mxu0 %v1779
    %v1809 = vpop.f32.mrf.mxu0
    %v1810 = vadd.f32 0.0, %v1809
    %v1811 = vpop.f32.mrf.mxu0
    %v1812 = vadd.f32 0.0, %v1811
    %1813 = vmatmul.bf16.gmra.mxu0 %v1782
    %v1814 = vpop.f32.mrf.mxu0
    %v1815 = vadd.f32 0.0, %v1814
    %v1816 = vpop.f32.mrf.mxu0
    %v1817 = vadd.f32 0.0, %v1816
    %1818 = vmatmul.bf16.gmra.mxu0 %v1785
    %v1819 = vpop.f32.mrf.mxu0
    %v1820 = vadd.f32 0.0, %v1819
    %v1821 = vpop.f32.mrf.mxu0
    %v1822 = vadd.f32 0.0, %v1821
    %1823 = vmatmul.bf16.gmra.mxu0 %v1788
    %v1824 = vpop.f32.mrf.mxu0
    %v1825 = vadd.f32 0.0, %v1824
    %v1826 = vpop.f32.mrf.mxu0
    %v1827 = vadd.f32 0.0, %v1826
    %1828 = vdwg.mxu0
    %1829 = vmatpush.bf16.msra.mxu0 0
    %1830 = vmatpush.bf16.msra.mxu0 0
    %1831 = vmatpush.bf16.msra.mxu0 0
    %1832 = vmatpush.bf16.msra.mxu0 0
    %1833 = vmatpush.bf16.msra.mxu0 0
    %1834 = vmatpush.bf16.msra.mxu0 0
    %1835 = vmatpush.bf16.msra.mxu0 %v1739
    %1836 = vmatpush.bf16.msra.mxu0 %v1735
    %1837 = vmatmul.bf16.gmra.mxu0 %v1773
    %v1838 = vpop.f32.mrf.mxu0
    %v1839 = vadd.f32 0.0, %v1838
    %v1840 = vpop.f32.mrf.mxu0
    %v1841 = vadd.f32 0.0, %v1840
    %1842 = vmatmul.bf16.gmra.mxu0 %v1776
    %v1843 = vpop.f32.mrf.mxu0
    %v1844 = vadd.f32 0.0, %v1843
    %v1845 = vpop.f32.mrf.mxu0
    %v1846 = vadd.f32 0.0, %v1845
    %1847 = vmatmul.bf16.gmra.mxu0 %v1779
    %v1848 = vpop.f32.mrf.mxu0
    %v1849 = vadd.f32 0.0, %v1848
    %v1850 = vpop.f32.mrf.mxu0
    %v1851 = vadd.f32 0.0, %v1850
    %1852 = vmatmul.bf16.gmra.mxu0 %v1782
    %v1853 = vpop.f32.mrf.mxu0
    %v1854 = vadd.f32 0.0, %v1853
    %v1855 = vpop.f32.mrf.mxu0
    %v1856 = vadd.f32 0.0, %v1855
    %1857 = vmatmul.bf16.gmra.mxu0 %v1785
    %v1858 = vpop.f32.mrf.mxu0
    %v1859 = vadd.f32 0.0, %v1858
    %v1860 = vpop.f32.mrf.mxu0
    %v1861 = vadd.f32 0.0, %v1860
    %1862 = vmatmul.bf16.gmra.mxu0 %v1788
    %v1863 = vpop.f32.mrf.mxu0
    %v1864 = vadd.f32 0.0, %v1863
    %v1865 = vpop.f32.mrf.mxu0
    %v1866 = vadd.f32 0.0, %v1865
    %1867 = vdwg.mxu0
    %1868 = vmatpush.bf16.msra.mxu0 0
    %1869 = vmatpush.bf16.msra.mxu0 0
    %1870 = vmatpush.bf16.msra.mxu0 0
    %1871 = vmatpush.bf16.msra.mxu0 0
    %1872 = vmatpush.bf16.msra.mxu0 0
    %1873 = vmatpush.bf16.msra.mxu0 0
    %1874 = vmatpush.bf16.msra.mxu0 %v1740
    %1875 = vmatpush.bf16.msra.mxu0 %v1736
    %1876 = vmatmul.bf16.gmra.mxu0 %v1773
    %v1877 = vpop.f32.mrf.mxu0
    %v1878 = vadd.f32 0.0, %v1877
    %v1879 = vpop.f32.mrf.mxu0
    %v1880 = vadd.f32 0.0, %v1879
    %1881 = vmatmul.bf16.gmra.mxu0 %v1776
    %v1882 = vpop.f32.mrf.mxu0
    %v1883 = vadd.f32 0.0, %v1882
    %v1884 = vpop.f32.mrf.mxu0
    %v1885 = vadd.f32 0.0, %v1884
    %1886 = vmatmul.bf16.gmra.mxu0 %v1779
    %v1887 = vpop.f32.mrf.mxu0
    %v1888 = vadd.f32 0.0, %v1887
    %v1889 = vpop.f32.mrf.mxu0
    %v1890 = vadd.f32 0.0, %v1889
    %1891 = vmatmul.bf16.gmra.mxu0 %v1782
    %v1892 = vpop.f32.mrf.mxu0
    %v1893 = vadd.f32 0.0, %v1892
    %v1894 = vpop.f32.mrf.mxu0
    %v1895 = vadd.f32 0.0, %v1894
    %1896 = vmatmul.bf16.gmra.mxu0 %v1785
    %v1897 = vpop.f32.mrf.mxu0
    %v1898 = vadd.f32 0.0, %v1897
    %v1899 = vpop.f32.mrf.mxu0
    %v1900 = vadd.f32 0.0, %v1899
    %1901 = vmatmul.bf16.gmra.mxu0 %v1788
    %v1902 = vpop.f32.mrf.mxu0
    %v1903 = vadd.f32 0.0, %v1902
    %v1904 = vpop.f32.mrf.mxu0
    %v1905 = vadd.f32 0.0, %v1904
    %1906 = vdwg.mxu0
    %1907 = vmatpush.bf16.msra.mxu0 0
    %1908 = vmatpush.bf16.msra.mxu0 0
    %1909 = vmatpush.bf16.msra.mxu0 0
    %1910 = vmatpush.bf16.msra.mxu0 0
    %1911 = vmatpush.bf16.msra.mxu0 0
    %1912 = vmatpush.bf16.msra.mxu0 0
    %1913 = vmatpush.bf16.msra.mxu0 %v1741
    %1914 = vmatpush.bf16.msra.mxu0 %v1737
    %1915 = vmatmul.bf16.gmra.mxu0 %v1773
    %v1916 = vpop.f32.mrf.mxu0
    %v1917 = vadd.f32 0.0, %v1916
    %v1918 = vpop.f32.mrf.mxu0
    %v1919 = vadd.f32 0.0, %v1918
    %1920 = vmatmul.bf16.gmra.mxu0 %v1776
    %v1921 = vpop.f32.mrf.mxu0
    %v1922 = vadd.f32 0.0, %v1921
    %v1923 = vpop.f32.mrf.mxu0
    %v1924 = vadd.f32 0.0, %v1923
    %1925 = vmatmul.bf16.gmra.mxu0 %v1779
    %v1926 = vpop.f32.mrf.mxu0
    %v1927 = vadd.f32 0.0, %v1926
    %v1928 = vpop.f32.mrf.mxu0
    %v1929 = vadd.f32 0.0, %v1928
    %1930 = vmatmul.bf16.gmra.mxu0 %v1782
    %v1931 = vpop.f32.mrf.mxu0
    %v1932 = vadd.f32 0.0, %v1931
    %v1933 = vpop.f32.mrf.mxu0
    %v1934 = vadd.f32 0.0, %v1933
    %1935 = vmatmul.bf16.gmra.mxu0 %v1785
    %v1936 = vpop.f32.mrf.mxu0
    %v1937 = vadd.f32 0.0, %v1936
    %v1938 = vpop.f32.mrf.mxu0
    %v1939 = vadd.f32 0.0, %v1938
    %1940 = vmatmul.bf16.gmra.mxu0 %v1788
    %v1941 = vpop.f32.mrf.mxu0
    %v1942 = vadd.f32 0.0, %v1941
    %v1943 = vpop.f32.mrf.mxu0
    %v1944 = vadd.f32 0.0, %v1943
    %1945 = vdwg.mxu0
    %v1946 = vmul.f32 %v1800, %v1810
    %v1947 = vmul.f32 %v1802, %v1812
    %v1948 = vadd.f32 %v1946, %v1947
    %v1949 = vrot.slane %v1948, 4
    %v1950 = vadd.f32 %v1948, %v1949
    %v1951 = vrot.slane %v1950, 2
    %v1952 = vadd.f32 %v1950, %v1951
    %v1953 = vrot.slane %v1952, 1
    %v1954 = vadd.f32 %v1952, %v1953
    %v1955 = vmul.f32 %v1954, 0.25
    %v1956 = vmul.f32 %v1800, %v1849
    %v1957 = vmul.f32 %v1802, %v1851
    %v1958 = vadd.f32 %v1956, %v1957
    %v1959 = vrot.slane %v1958, 4
    %v1960 = vadd.f32 %v1958, %v1959
    %v1961 = vrot.slane %v1960, 2
    %v1962 = vadd.f32 %v1960, %v1961
    %v1963 = vrot.slane %v1962, 1
    %v1964 = vadd.f32 %v1962, %v1963
    %v1965 = vmul.f32 %v1964, 0.25
    %v1966 = vmul.f32 %v1800, %v1888
    %v1967 = vmul.f32 %v1802, %v1890
    %v1968 = vadd.f32 %v1966, %v1967
    %v1969 = vrot.slane %v1968, 4
    %v1970 = vadd.f32 %v1968, %v1969
    %v1971 = vrot.slane %v1970, 2
    %v1972 = vadd.f32 %v1970, %v1971
    %v1973 = vrot.slane %v1972, 1
    %v1974 = vadd.f32 %v1972, %v1973
    %v1975 = vmul.f32 %v1974, 0.25
    %v1976 = vmul.f32 %v1800, %v1927
    %v1977 = vmul.f32 %v1802, %v1929
    %v1978 = vadd.f32 %v1976, %v1977
    %v1979 = vrot.slane %v1978, 4
    %v1980 = vadd.f32 %v1978, %v1979
    %v1981 = vrot.slane %v1980, 2
    %v1982 = vadd.f32 %v1980, %v1981
    %v1983 = vrot.slane %v1982, 1
    %v1984 = vadd.f32 %v1982, %v1983
    %v1985 = vmul.f32 %v1984, 0.25
    %v1986 = vmax.f32 %v1955, %v1965
    %v1987 = vmax.f32 %v1986, %v1975
    %v1988 = vmax.f32 %v1987, %v1985
    %v1989 = vsub.f32 %v1955, %v1988
    %v1990 = vmul.f32 %v1989, 1.442695
    %v1991 = vpow.pop %v1990
    %v1992 = vsub.f32 %v1965, %v1988
    %v1993 = vmul.f32 %v1992, 1.442695
    %v1994 = vpow.pop %v1993
    %v1995 = vsub.f32 %v1975, %v1988
    %v1996 = vmul.f32 %v1995, 1.442695
    %v1997 = vpow.pop %v1996
    %v1998 = vsub.f32 %v1985, %v1988
    %v1999 = vmul.f32 %v1998, 1.442695
    %v2000 = vpow.pop %v1999
    %v2001 = vadd.f32 %v1991, %v1994
    %v2002 = vadd.f32 %v2001, %v1997
    %v2003 = vadd.f32 %v2002, %v2000
    %v2004 = vrcp.pop %v2003
    %v2005 = vmul.f32 %v1991, %v2004
    %v2006 = vmul.f32 %v2005, %v1820
    %v2007 = vmul.f32 %v2005, %v1822
    %v2008 = vmul.f32 %v1994, %v2004
    %v2009 = vmul.f32 %v2008, %v1859
    %v2010 = vmul.f32 %v2008, %v1861
    %v2011 = vadd.f32 %v2006, %v2009
    %v2012 = vadd.f32 %v2007, %v2010
    %v2013 = vmul.f32 %v1997, %v2004
    %v2014 = vmul.f32 %v2013, %v1898
    %v2015 = vmul.f32 %v2013, %v1900
    %v2016 = vadd.f32 %v2011, %v2014
    %v2017 = vadd.f32 %v2012, %v2015
    %v2018 = vmul.f32 %v2000, %v2004
    %v2019 = vmul.f32 %v2018, %v1937
    %v2020 = vmul.f32 %v2018, %v1939
    %v2021 = vadd.f32 %v2016, %v2019
    %v2022 = vadd.f32 %v2017, %v2020
    %v2023 = vmul.f32 %v1839, %v1810
    %v2024 = vmul.f32 %v1841, %v1812
    %v2025 = vadd.f32 %v2023, %v2024
    %v2026 = vrot.slane %v2025, 4
    %v2027 = vadd.f32 %v2025, %v2026
    %v2028 = vrot.slane %v2027, 2
    %v2029 = vadd.f32 %v2027, %v2028
    %v2030 = vrot.slane %v2029, 1
    %v2031 = vadd.f32 %v2029, %v2030
    %v2032 = vmul.f32 %v2031, 0.25
    %v2033 = vmul.f32 %v1839, %v1849
    %v2034 = vmul.f32 %v1841, %v1851
    %v2035 = vadd.f32 %v2033, %v2034
    %v2036 = vrot.slane %v2035, 4
    %v2037 = vadd.f32 %v2035, %v2036
    %v2038 = vrot.slane %v2037, 2
    %v2039 = vadd.f32 %v2037, %v2038
    %v2040 = vrot.slane %v2039, 1
    %v2041 = vadd.f32 %v2039, %v2040
    %v2042 = vmul.f32 %v2041, 0.25
    %v2043 = vmul.f32 %v1839, %v1888
    %v2044 = vmul.f32 %v1841, %v1890
    %v2045 = vadd.f32 %v2043, %v2044
    %v2046 = vrot.slane %v2045, 4
    %v2047 = vadd.f32 %v2045, %v2046
    %v2048 = vrot.slane %v2047, 2
    %v2049 = vadd.f32 %v2047, %v2048
    %v2050 = vrot.slane %v2049, 1
    %v2051 = vadd.f32 %v2049, %v2050
    %v2052 = vmul.f32 %v2051, 0.25
    %v2053 = vmul.f32 %v1839, %v1927
    %v2054 = vmul.f32 %v1841, %v1929
    %v2055 = vadd.f32 %v2053, %v2054
    %v2056 = vrot.slane %v2055, 4
    %v2057 = vadd.f32 %v2055, %v2056
    %v2058 = vrot.slane %v2057, 2
    %v2059 = vadd.f32 %v2057, %v2058
    %v2060 = vrot.slane %v2059, 1
    %v2061 = vadd.f32 %v2059, %v2060
    %v2062 = vmul.f32 %v2061, 0.25
    %v2063 = vmax.f32 %v2032, %v2042
    %v2064 = vmax.f32 %v2063, %v2052
    %v2065 = vmax.f32 %v2064, %v2062
    %v2066 = vsub.f32 %v2032, %v2065
    %v2067 = vmul.f32 %v2066, 1.442695
    %v2068 = vpow.pop %v2067
    %v2069 = vsub.f32 %v2042, %v2065
    %v2070 = vmul.f32 %v2069, 1.442695
    %v2071 = vpow.pop %v2070
    %v2072 = vsub.f32 %v2052, %v2065
    %v2073 = vmul.f32 %v2072, 1.442695
    %v2074 = vpow.pop %v2073
    %v2075 = vsub.f32 %v2062, %v2065
    %v2076 = vmul.f32 %v2075, 1.442695
    %v2077 = vpow.pop %v2076
    %v2078 = vadd.f32 %v2068, %v2071
    %v2079 = vadd.f32 %v2078, %v2074
    %v2080 = vadd.f32 %v2079, %v2077
    %v2081 = vrcp.pop %v2080
    %v2082 = vmul.f32 %v2068, %v2081
    %v2083 = vmul.f32 %v2082, %v1820
    %v2084 = vmul.f32 %v2082, %v1822
    %v2085 = vmul.f32 %v2071, %v2081
    %v2086 = vmul.f32 %v2085, %v1859
    %v2087 = vmul.f32 %v2085, %v1861
    %v2088 = vadd.f32 %v2083, %v2086
    %v2089 = vadd.f32 %v2084, %v2087
    %v2090 = vmul.f32 %v2074, %v2081
    %v2091 = vmul.f32 %v2090, %v1898
    %v2092 = vmul.f32 %v2090, %v1900
    %v2093 = vadd.f32 %v2088, %v2091
    %v2094 = vadd.f32 %v2089, %v2092
    %v2095 = vmul.f32 %v2077, %v2081
    %v2096 = vmul.f32 %v2095, %v1937
    %v2097 = vmul.f32 %v2095, %v1939
    %v2098 = vadd.f32 %v2093, %v2096
    %v2099 = vadd.f32 %v2094, %v2097
    %v2100 = vmul.f32 %v1878, %v1810
    %v2101 = vmul.f32 %v1880, %v1812
    %v2102 = vadd.f32 %v2100, %v2101
    %v2103 = vrot.slane %v2102, 4
    %v2104 = vadd.f32 %v2102, %v2103
    %v2105 = vrot.slane %v2104, 2
    %v2106 = vadd.f32 %v2104, %v2105
    %v2107 = vrot.slane %v2106, 1
    %v2108 = vadd.f32 %v2106, %v2107
    %v2109 = vmul.f32 %v2108, 0.25
    %v2110 = vmul.f32 %v1878, %v1849
    %v2111 = vmul.f32 %v1880, %v1851
    %v2112 = vadd.f32 %v2110, %v2111
    %v2113 = vrot.slane %v2112, 4
    %v2114 = vadd.f32 %v2112, %v2113
    %v2115 = vrot.slane %v2114, 2
    %v2116 = vadd.f32 %v2114, %v2115
    %v2117 = vrot.slane %v2116, 1
    %v2118 = vadd.f32 %v2116, %v2117
    %v2119 = vmul.f32 %v2118, 0.25
    %v2120 = vmul.f32 %v1878, %v1888
    %v2121 = vmul.f32 %v1880, %v1890
    %v2122 = vadd.f32 %v2120, %v2121
    %v2123 = vrot.slane %v2122, 4
    %v2124 = vadd.f32 %v2122, %v2123
    %v2125 = vrot.slane %v2124, 2
    %v2126 = vadd.f32 %v2124, %v2125
    %v2127 = vrot.slane %v2126, 1
    %v2128 = vadd.f32 %v2126, %v2127
    %v2129 = vmul.f32 %v2128, 0.25
    %v2130 = vmul.f32 %v1878, %v1927
    %v2131 = vmul.f32 %v1880, %v1929
    %v2132 = vadd.f32 %v2130, %v2131
    %v2133 = vrot.slane %v2132, 4
    %v2134 = vadd.f32 %v2132, %v2133
    %v2135 = vrot.slane %v2134, 2
    %v2136 = vadd.f32 %v2134, %v2135
    %v2137 = vrot.slane %v2136, 1
    %v2138 = vadd.f32 %v2136, %v2137
    %v2139 = vmul.f32 %v2138, 0.25
    %v2140 = vmax.f32 %v2109, %v2119
    %v2141 = vmax.f32 %v2140, %v2129
    %v2142 = vmax.f32 %v2141, %v2139
    %v2143 = vsub.f32 %v2109, %v2142
    %v2144 = vmul.f32 %v2143, 1.442695
    %v2145 = vpow.pop %v2144
    %v2146 = vsub.f32 %v2119, %v2142
    %v2147 = vmul.f32 %v2146, 1.442695
    %v2148 = vpow.pop %v2147
    %v2149 = vsub.f32 %v2129, %v2142
    %v2150 = vmul.f32 %v2149, 1.442695
    %v2151 = vpow.pop %v2150
    %v2152 = vsub.f32 %v2139, %v2142
    %v2153 = vmul.f32 %v2152, 1.442695
    %v2154 = vpow.pop %v2153
    %v2155 = vadd.f32 %v2145, %v2148
    %v2156 = vadd.f32 %v2155, %v2151
    %v2157 = vadd.f32 %v2156, %v2154
    %v2158 = vrcp.pop %v2157
    %v2159 = vmul.f32 %v2145, %v2158
    %v2160 = vmul.f32 %v2159, %v1820
    %v2161 = vmul.f32 %v2159, %v1822
    %v2162 = vmul.f32 %v2148, %v2158
    %v2163 = vmul.f32 %v2162, %v1859
    %v2164 = vmul.f32 %v2162, %v1861
    %v2165 = vadd.f32 %v2160, %v2163
    %v2166 = vadd.f32 %v2161, %v2164
    %v2167 = vmul.f32 %v2151, %v2158
    %v2168 = vmul.f32 %v2167, %v1898
    %v2169 = vmul.f32 %v2167, %v1900
    %v2170 = vadd.f32 %v2165, %v2168
    %v2171 = vadd.f32 %v2166, %v2169
    %v2172 = vmul.f32 %v2154, %v2158
    %v2173 = vmul.f32 %v2172, %v1937
    %v2174 = vmul.f32 %v2172, %v1939
    %v2175 = vadd.f32 %v2170, %v2173
    %v2176 = vadd.f32 %v2171, %v2174
    %v2177 = vmul.f32 %v1917, %v1810
    %v2178 = vmul.f32 %v1919, %v1812
    %v2179 = vadd.f32 %v2177, %v2178
    %v2180 = vrot.slane %v2179, 4
    %v2181 = vadd.f32 %v2179, %v2180
    %v2182 = vrot.slane %v2181, 2
    %v2183 = vadd.f32 %v2181, %v2182
    %v2184 = vrot.slane %v2183, 1
    %v2185 = vadd.f32 %v2183, %v2184
    %v2186 = vmul.f32 %v2185, 0.25
    %v2187 = vmul.f32 %v1917, %v1849
    %v2188 = vmul.f32 %v1919, %v1851
    %v2189 = vadd.f32 %v2187, %v2188
    %v2190 = vrot.slane %v2189, 4
    %v2191 = vadd.f32 %v2189, %v2190
    %v2192 = vrot.slane %v2191, 2
    %v2193 = vadd.f32 %v2191, %v2192
    %v2194 = vrot.slane %v2193, 1
    %v2195 = vadd.f32 %v2193, %v2194
    %v2196 = vmul.f32 %v2195, 0.25
    %v2197 = vmul.f32 %v1917, %v1888
    %v2198 = vmul.f32 %v1919, %v1890
    %v2199 = vadd.f32 %v2197, %v2198
    %v2200 = vrot.slane %v2199, 4
    %v2201 = vadd.f32 %v2199, %v2200
    %v2202 = vrot.slane %v2201, 2
    %v2203 = vadd.f32 %v2201, %v2202
    %v2204 = vrot.slane %v2203, 1
    %v2205 = vadd.f32 %v2203, %v2204
    %v2206 = vmul.f32 %v2205, 0.25
    %v2207 = vmul.f32 %v1917, %v1927
    %v2208 = vmul.f32 %v1919, %v1929
    %v2209 = vadd.f32 %v2207, %v2208
    %v2210 = vrot.slane %v2209, 4
    %v2211 = vadd.f32 %v2209, %v2210
    %v2212 = vrot.slane %v2211, 2
    %v2213 = vadd.f32 %v2211, %v2212
    %v2214 = vrot.slane %v2213, 1
    %v2215 = vadd.f32 %v2213, %v2214
    %v2216 = vmul.f32 %v2215, 0.25
    %v2217 = vmax.f32 %v2186, %v2196
    %v2218 = vmax.f32 %v2217, %v2206
    %v2219 = vmax.f32 %v2218, %v2216
    %v2220 = vsub.f32 %v2186, %v2219
    %v2221 = vmul.f32 %v2220, 1.442695
    %v2222 = vpow.pop %v2221
    %v2223 = vsub.f32 %v2196, %v2219
    %v2224 = vmul.f32 %v2223, 1.442695
    %v2225 = vpow.pop %v2224
    %v2226 = vsub.f32 %v2206, %v2219
    %v2227 = vmul.f32 %v2226, 1.442695
    %v2228 = vpow.pop %v2227
    %v2229 = vsub.f32 %v2216, %v2219
    %v2230 = vmul.f32 %v2229, 1.442695
    %v2231 = vpow.pop %v2230
    %v2232 = vadd.f32 %v2222, %v2225
    %v2233 = vadd.f32 %v2232, %v2228
    %v2234 = vadd.f32 %v2233, %v2231
    %v2235 = vrcp.pop %v2234
    %v2236 = vmul.f32 %v2222, %v2235
    %v2237 = vmul.f32 %v2236, %v1820
    %v2238 = vmul.f32 %v2236, %v1822
    %v2239 = vmul.f32 %v2225, %v2235
    %v2240 = vmul.f32 %v2239, %v1859
    %v2241 = vmul.f32 %v2239, %v1861
    %v2242 = vadd.f32 %v2237, %v2240
    %v2243 = vadd.f32 %v2238, %v2241
    %v2244 = vmul.f32 %v2228, %v2235
    %v2245 = vmul.f32 %v2244, %v1898
    %v2246 = vmul.f32 %v2244, %v1900
    %v2247 = vadd.f32 %v2242, %v2245
    %v2248 = vadd.f32 %v2243, %v2246
    %v2249 = vmul.f32 %v2231, %v2235
    %v2250 = vmul.f32 %v2249, %v1937
    %v2251 = vmul.f32 %v2249, %v1939
    %v2252 = vadd.f32 %v2247, %v2250
    %v2253 = vadd.f32 %v2248, %v2251
    %v2254 = vpack.c.bf16 %v2022, %v2021
    %v2255 = vpack.c.bf16 %v2099, %v2098
    %v2256 = vpack.c.bf16 %v2176, %v2175
    %v2257 = vpack.c.bf16 %v2253, %v2252
    %v2258 = vmul.f32 %v1805, %v1815
    %v2259 = vmul.f32 %v1807, %v1817
    %v2260 = vadd.f32 %v2258, %v2259
    %v2261 = vrot.slane %v2260, 4
    %v2262 = vadd.f32 %v2260, %v2261
    %v2263 = vrot.slane %v2262, 2
    %v2264 = vadd.f32 %v2262, %v2263
    %v2265 = vrot.slane %v2264, 1
    %v2266 = vadd.f32 %v2264, %v2265
    %v2267 = vmul.f32 %v2266, 0.25
    %v2268 = vmul.f32 %v1805, %v1854
    %v2269 = vmul.f32 %v1807, %v1856
    %v2270 = vadd.f32 %v2268, %v2269
    %v2271 = vrot.slane %v2270, 4
    %v2272 = vadd.f32 %v2270, %v2271
    %v2273 = vrot.slane %v2272, 2
    %v2274 = vadd.f32 %v2272, %v2273
    %v2275 = vrot.slane %v2274, 1
    %v2276 = vadd.f32 %v2274, %v2275
    %v2277 = vmul.f32 %v2276, 0.25
    %v2278 = vmul.f32 %v1805, %v1893
    %v2279 = vmul.f32 %v1807, %v1895
    %v2280 = vadd.f32 %v2278, %v2279
    %v2281 = vrot.slane %v2280, 4
    %v2282 = vadd.f32 %v2280, %v2281
    %v2283 = vrot.slane %v2282, 2
    %v2284 = vadd.f32 %v2282, %v2283
    %v2285 = vrot.slane %v2284, 1
    %v2286 = vadd.f32 %v2284, %v2285
    %v2287 = vmul.f32 %v2286, 0.25
    %v2288 = vmul.f32 %v1805, %v1932
    %v2289 = vmul.f32 %v1807, %v1934
    %v2290 = vadd.f32 %v2288, %v2289
    %v2291 = vrot.slane %v2290, 4
    %v2292 = vadd.f32 %v2290, %v2291
    %v2293 = vrot.slane %v2292, 2
    %v2294 = vadd.f32 %v2292, %v2293
    %v2295 = vrot.slane %v2294, 1
    %v2296 = vadd.f32 %v2294, %v2295
    %v2297 = vmul.f32 %v2296, 0.25
    %v2298 = vmax.f32 %v2267, %v2277
    %v2299 = vmax.f32 %v2298, %v2287
    %v2300 = vmax.f32 %v2299, %v2297
    %v2301 = vsub.f32 %v2267, %v2300
    %v2302 = vmul.f32 %v2301, 1.442695
    %v2303 = vpow.pop %v2302
    %v2304 = vsub.f32 %v2277, %v2300
    %v2305 = vmul.f32 %v2304, 1.442695
    %v2306 = vpow.pop %v2305
    %v2307 = vsub.f32 %v2287, %v2300
    %v2308 = vmul.f32 %v2307, 1.442695
    %v2309 = vpow.pop %v2308
    %v2310 = vsub.f32 %v2297, %v2300
    %v2311 = vmul.f32 %v2310, 1.442695
    %v2312 = vpow.pop %v2311
    %v2313 = vadd.f32 %v2303, %v2306
    %v2314 = vadd.f32 %v2313, %v2309
    %v2315 = vadd.f32 %v2314, %v2312
    %v2316 = vrcp.pop %v2315
    %v2317 = vmul.f32 %v2303, %v2316
    %v2318 = vmul.f32 %v2317, %v1825
    %v2319 = vmul.f32 %v2317, %v1827
    %v2320 = vmul.f32 %v2306, %v2316
    %v2321 = vmul.f32 %v2320, %v1864
    %v2322 = vmul.f32 %v2320, %v1866
    %v2323 = vadd.f32 %v2318, %v2321
    %v2324 = vadd.f32 %v2319, %v2322
    %v2325 = vmul.f32 %v2309, %v2316
    %v2326 = vmul.f32 %v2325, %v1903
    %v2327 = vmul.f32 %v2325, %v1905
    %v2328 = vadd.f32 %v2323, %v2326
    %v2329 = vadd.f32 %v2324, %v2327
    %v2330 = vmul.f32 %v2312, %v2316
    %v2331 = vmul.f32 %v2330, %v1942
    %v2332 = vmul.f32 %v2330, %v1944
    %v2333 = vadd.f32 %v2328, %v2331
    %v2334 = vadd.f32 %v2329, %v2332
    %v2335 = vmul.f32 %v1844, %v1815
    %v2336 = vmul.f32 %v1846, %v1817
    %v2337 = vadd.f32 %v2335, %v2336
    %v2338 = vrot.slane %v2337, 4
    %v2339 = vadd.f32 %v2337, %v2338
    %v2340 = vrot.slane %v2339, 2
    %v2341 = vadd.f32 %v2339, %v2340
    %v2342 = vrot.slane %v2341, 1
    %v2343 = vadd.f32 %v2341, %v2342
    %v2344 = vmul.f32 %v2343, 0.25
    %v2345 = vmul.f32 %v1844, %v1854
    %v2346 = vmul.f32 %v1846, %v1856
    %v2347 = vadd.f32 %v2345, %v2346
    %v2348 = vrot.slane %v2347, 4
    %v2349 = vadd.f32 %v2347, %v2348
    %v2350 = vrot.slane %v2349, 2
    %v2351 = vadd.f32 %v2349, %v2350
    %v2352 = vrot.slane %v2351, 1
    %v2353 = vadd.f32 %v2351, %v2352
    %v2354 = vmul.f32 %v2353, 0.25
    %v2355 = vmul.f32 %v1844, %v1893
    %v2356 = vmul.f32 %v1846, %v1895
    %v2357 = vadd.f32 %v2355, %v2356
    %v2358 = vrot.slane %v2357, 4
    %v2359 = vadd.f32 %v2357, %v2358
    %v2360 = vrot.slane %v2359, 2
    %v2361 = vadd.f32 %v2359, %v2360
    %v2362 = vrot.slane %v2361, 1
    %v2363 = vadd.f32 %v2361, %v2362
    %v2364 = vmul.f32 %v2363, 0.25
    %v2365 = vmul.f32 %v1844, %v1932
    %v2366 = vmul.f32 %v1846, %v1934
    %v2367 = vadd.f32 %v2365, %v2366
    %v2368 = vrot.slane %v2367, 4
    %v2369 = vadd.f32 %v2367, %v2368
    %v2370 = vrot.slane %v2369, 2
    %v2371 = vadd.f32 %v2369, %v2370
    %v2372 = vrot.slane %v2371, 1
    %v2373 = vadd.f32 %v2371, %v2372
    %v2374 = vmul.f32 %v2373, 0.25
    %v2375 = vmax.f32 %v2344, %v2354
    %v2376 = vmax.f32 %v2375, %v2364
    %v2377 = vmax.f32 %v2376, %v2374
    %v2378 = vsub.f32 %v2344, %v2377
    %v2379 = vmul.f32 %v2378, 1.442695
    %v2380 = vpow.pop %v2379
    %v2381 = vsub.f32 %v2354, %v2377
    %v2382 = vmul.f32 %v2381, 1.442695
    %v2383 = vpow.pop %v2382
    %v2384 = vsub.f32 %v2364, %v2377
    %v2385 = vmul.f32 %v2384, 1.442695
    %v2386 = vpow.pop %v2385
    %v2387 = vsub.f32 %v2374, %v2377
    %v2388 = vmul.f32 %v2387, 1.442695
    %v2389 = vpow.pop %v2388
    %v2390 = vadd.f32 %v2380, %v2383
    %v2391 = vadd.f32 %v2390, %v2386
    %v2392 = vadd.f32 %v2391, %v2389
    %v2393 = vrcp.pop %v2392
    %v2394 = vmul.f32 %v2380, %v2393
    %v2395 = vmul.f32 %v2394, %v1825
    %v2396 = vmul.f32 %v2394, %v1827
    %v2397 = vmul.f32 %v2383, %v2393
    %v2398 = vmul.f32 %v2397, %v1864
    %v2399 = vmul.f32 %v2397, %v1866
    %v2400 = vadd.f32 %v2395, %v2398
    %v2401 = vadd.f32 %v2396, %v2399
    %v2402 = vmul.f32 %v2386, %v2393
    %v2403 = vmul.f32 %v2402, %v1903
    %v2404 = vmul.f32 %v2402, %v1905
    %v2405 = vadd.f32 %v2400, %v2403
    %v2406 = vadd.f32 %v2401, %v2404
    %v2407 = vmul.f32 %v2389, %v2393
    %v2408 = vmul.f32 %v2407, %v1942
    %v2409 = vmul.f32 %v2407, %v1944
    %v2410 = vadd.f32 %v2405, %v2408
    %v2411 = vadd.f32 %v2406, %v2409
    %v2412 = vmul.f32 %v1883, %v1815
    %v2413 = vmul.f32 %v1885, %v1817
    %v2414 = vadd.f32 %v2412, %v2413
    %v2415 = vrot.slane %v2414, 4
    %v2416 = vadd.f32 %v2414, %v2415
    %v2417 = vrot.slane %v2416, 2
    %v2418 = vadd.f32 %v2416, %v2417
    %v2419 = vrot.slane %v2418, 1
    %v2420 = vadd.f32 %v2418, %v2419
    %v2421 = vmul.f32 %v2420, 0.25
    %v2422 = vmul.f32 %v1883, %v1854
    %v2423 = vmul.f32 %v1885, %v1856
    %v2424 = vadd.f32 %v2422, %v2423
    %v2425 = vrot.slane %v2424, 4
    %v2426 = vadd.f32 %v2424, %v2425
    %v2427 = vrot.slane %v2426, 2
    %v2428 = vadd.f32 %v2426, %v2427
    %v2429 = vrot.slane %v2428, 1
    %v2430 = vadd.f32 %v2428, %v2429
    %v2431 = vmul.f32 %v2430, 0.25
    %v2432 = vmul.f32 %v1883, %v1893
    %v2433 = vmul.f32 %v1885, %v1895
    %v2434 = vadd.f32 %v2432, %v2433
    %v2435 = vrot.slane %v2434, 4
    %v2436 = vadd.f32 %v2434, %v2435
    %v2437 = vrot.slane %v2436, 2
    %v2438 = vadd.f32 %v2436, %v2437
    %v2439 = vrot.slane %v2438, 1
    %v2440 = vadd.f32 %v2438, %v2439
    %v2441 = vmul.f32 %v2440, 0.25
    %v2442 = vmul.f32 %v1883, %v1932
    %v2443 = vmul.f32 %v1885, %v1934
    %v2444 = vadd.f32 %v2442, %v2443
    %v2445 = vrot.slane %v2444, 4
    %v2446 = vadd.f32 %v2444, %v2445
    %v2447 = vrot.slane %v2446, 2
    %v2448 = vadd.f32 %v2446, %v2447
    %v2449 = vrot.slane %v2448, 1
    %v2450 = vadd.f32 %v2448, %v2449
    %v2451 = vmul.f32 %v2450, 0.25
    %v2452 = vmax.f32 %v2421, %v2431
    %v2453 = vmax.f32 %v2452, %v2441
    %v2454 = vmax.f32 %v2453, %v2451
    %v2455 = vsub.f32 %v2421, %v2454
    %v2456 = vmul.f32 %v2455, 1.442695
    %v2457 = vpow.pop %v2456
    %v2458 = vsub.f32 %v2431, %v2454
    %v2459 = vmul.f32 %v2458, 1.442695
    %v2460 = vpow.pop %v2459
    %v2461 = vsub.f32 %v2441, %v2454
    %v2462 = vmul.f32 %v2461, 1.442695
    %v2463 = vpow.pop %v2462
    %v2464 = vsub.f32 %v2451, %v2454
    %v2465 = vmul.f32 %v2464, 1.442695
    %v2466 = vpow.pop %v2465
    %v2467 = vadd.f32 %v2457, %v2460
    %v2468 = vadd.f32 %v2467, %v2463
    %v2469 = vadd.f32 %v2468, %v2466
    %v2470 = vrcp.pop %v2469
    %v2471 = vmul.f32 %v2457, %v2470
    %v2472 = vmul.f32 %v2471, %v1825
    %v2473 = vmul.f32 %v2471, %v1827
    %v2474 = vmul.f32 %v2460, %v2470
    %v2475 = vmul.f32 %v2474, %v1864
    %v2476 = vmul.f32 %v2474, %v1866
    %v2477 = vadd.f32 %v2472, %v2475
    %v2478 = vadd.f32 %v2473, %v2476
    %v2479 = vmul.f32 %v2463, %v2470
    %v2480 = vmul.f32 %v2479, %v1903
    %v2481 = vmul.f32 %v2479, %v1905
    %v2482 = vadd.f32 %v2477, %v2480
    %v2483 = vadd.f32 %v2478, %v2481
    %v2484 = vmul.f32 %v2466, %v2470
    %v2485 = vmul.f32 %v2484, %v1942
    %v2486 = vmul.f32 %v2484, %v1944
    %v2487 = vadd.f32 %v2482, %v2485
    %v2488 = vadd.f32 %v2483, %v2486
    %v2489 = vmul.f32 %v1922, %v1815
    %v2490 = vmul.f32 %v1924, %v1817
    %v2491 = vadd.f32 %v2489, %v2490
    %v2492 = vrot.slane %v2491, 4
    %v2493 = vadd.f32 %v2491, %v2492
    %v2494 = vrot.slane %v2493, 2
    %v2495 = vadd.f32 %v2493, %v2494
    %v2496 = vrot.slane %v2495, 1
    %v2497 = vadd.f32 %v2495, %v2496
    %v2498 = vmul.f32 %v2497, 0.25
    %v2499 = vmul.f32 %v1922, %v1854
    %v2500 = vmul.f32 %v1924, %v1856
    %v2501 = vadd.f32 %v2499, %v2500
    %v2502 = vrot.slane %v2501, 4
    %v2503 = vadd.f32 %v2501, %v2502
    %v2504 = vrot.slane %v2503, 2
    %v2505 = vadd.f32 %v2503, %v2504
    %v2506 = vrot.slane %v2505, 1
    %v2507 = vadd.f32 %v2505, %v2506
    %v2508 = vmul.f32 %v2507, 0.25
    %v2509 = vmul.f32 %v1922, %v1893
    %v2510 = vmul.f32 %v1924, %v1895
    %v2511 = vadd.f32 %v2509, %v2510
    %v2512 = vrot.slane %v2511, 4
    %v2513 = vadd.f32 %v2511, %v2512
    %v2514 = vrot.slane %v2513, 2
    %v2515 = vadd.f32 %v2513, %v2514
    %v2516 = vrot.slane %v2515, 1
    %v2517 = vadd.f32 %v2515, %v2516
    %v2518 = vmul.f32 %v2517, 0.25
    %v2519 = vmul.f32 %v1922, %v1932
    %v2520 = vmul.f32 %v1924, %v1934
    %v2521 = vadd.f32 %v2519, %v2520
    %v2522 = vrot.slane %v2521, 4
    %v2523 = vadd.f32 %v2521, %v2522
    %v2524 = vrot.slane %v2523, 2
    %v2525 = vadd.f32 %v2523, %v2524
    %v2526 = vrot.slane %v2525, 1
    %v2527 = vadd.f32 %v2525, %v2526
    %v2528 = vmul.f32 %v2527, 0.25
    %v2529 = vmax.f32 %v2498, %v2508
    %v2530 = vmax.f32 %v2529, %v2518
    %v2531 = vmax.f32 %v2530, %v2528
    %v2532 = vsub.f32 %v2498, %v2531
    %v2533 = vmul.f32 %v2532, 1.442695
    %v2534 = vpow.pop %v2533
    %v2535 = vsub.f32 %v2508, %v2531
    %v2536 = vmul.f32 %v2535, 1.442695
    %v2537 = vpow.pop %v2536
    %v2538 = vsub.f32 %v2518, %v2531
    %v2539 = vmul.f32 %v2538, 1.442695
    %v2540 = vpow.pop %v2539
    %v2541 = vsub.f32 %v2528, %v2531
    %v2542 = vmul.f32 %v2541, 1.442695
    %v2543 = vpow.pop %v2542
    %v2544 = vadd.f32 %v2534, %v2537
    %v2545 = vadd.f32 %v2544, %v2540
    %v2546 = vadd.f32 %v2545, %v2543
    %v2547 = vrcp.pop %v2546
    %v2548 = vmul.f32 %v2534, %v2547
    %v2549 = vmul.f32 %v2548, %v1825
    %v2550 = vmul.f32 %v2548, %v1827
    %v2551 = vmul.f32 %v2537, %v2547
    %v2552 = vmul.f32 %v2551, %v1864
    %v2553 = vmul.f32 %v2551, %v1866
    %v2554 = vadd.f32 %v2549, %v2552
    %v2555 = vadd.f32 %v2550, %v2553
    %v2556 = vmul.f32 %v2540, %v2547
    %v2557 = vmul.f32 %v2556, %v1903
    %v2558 = vmul.f32 %v2556, %v1905
    %v2559 = vadd.f32 %v2554, %v2557
    %v2560 = vadd.f32 %v2555, %v2558
    %v2561 = vmul.f32 %v2543, %v2547
    %v2562 = vmul.f32 %v2561, %v1942
    %v2563 = vmul.f32 %v2561, %v1944
    %v2564 = vadd.f32 %v2559, %v2562
    %v2565 = vadd.f32 %v2560, %v2563
    %v2566 = vpack.c.bf16 %v2334, %v2333
    %v2567 = vpack.c.bf16 %v2411, %v2410
    %v2568 = vpack.c.bf16 %v2488, %v2487
    %v2569 = vpack.c.bf16 %v2565, %v2564
    %v2574 = vunpack.c.l.b16 %v131
    %v2575 = vunpack.c.l.b16 %v132
    %v2576 = vunpack.c.l.b16 %v133
    %v2577 = vunpack.c.l.b16 %v134
    %v2578 = vpack.c.b16 %v2575, %v2574
    %v2579 = vpack.c.b16 %v2577, %v2576
    %2580 = vrot.lane.b32.xlu0 %v2578, 112
    %v2581 = vpop.permute.xlu0 %2580
    %2582 = vrot.lane.b32.xlu0 %v2579, 112
    %v2583 = vpop.permute.xlu0 %2582
    %v2585 = vsel %vm1273, %v2581, 0
    %v2588 = vsel %vm1273, %v2583, 0
    %2590 = vmatpush.bf16.msra.mxu0 0
    %2591 = vmatpush.bf16.msra.mxu0 0
    %2592 = vmatpush.bf16.msra.mxu0 0
    %2593 = vmatpush.bf16.msra.mxu0 0
    %2594 = vmatpush.bf16.msra.mxu0 0
    %2595 = vmatpush.bf16.msra.mxu0 0
    %2596 = vmatpush.bf16.msra.mxu0 0
    %2597 = vmatpush.bf16.msra.mxu0 %v2566
    %2598 = vmatmul.bf16.gmra.mxu0 %v2585
    %v2599 = vpop.f32.mrf.mxu0
    %v2600 = vadd.f32 0.0, %v2599
    %v2601 = vpop.f32.mrf.mxu0
    %v2602 = vadd.f32 0.0, %v2601
    %2603 = vmatmul.bf16.gmra.mxu0 %v2588
    %v2604 = vpop.f32.mrf.mxu0
    %v2605 = vadd.f32 0.0, %v2604
    %v2606 = vpop.f32.mrf.mxu0
    %v2607 = vadd.f32 0.0, %v2606
    %2608 = vdwg.mxu0
    %2609 = vmatpush.bf16.msra.mxu0 0
    %2610 = vmatpush.bf16.msra.mxu0 0
    %2611 = vmatpush.bf16.msra.mxu0 0
    %2612 = vmatpush.bf16.msra.mxu0 0
    %2613 = vmatpush.bf16.msra.mxu0 0
    %2614 = vmatpush.bf16.msra.mxu0 0
    %2615 = vmatpush.bf16.msra.mxu0 0
    %2616 = vmatpush.bf16.msra.mxu0 %v2567
    %2617 = vmatmul.bf16.gmra.mxu0 %v2585
    %v2618 = vpop.f32.mrf.mxu0
    %v2619 = vadd.f32 0.0, %v2618
    %v2620 = vpop.f32.mrf.mxu0
    %v2621 = vadd.f32 0.0, %v2620
    %2622 = vmatmul.bf16.gmra.mxu0 %v2588
    %v2623 = vpop.f32.mrf.mxu0
    %v2624 = vadd.f32 0.0, %v2623
    %v2625 = vpop.f32.mrf.mxu0
    %v2626 = vadd.f32 0.0, %v2625
    %2627 = vdwg.mxu0
    %2628 = vmatpush.bf16.msra.mxu0 0
    %2629 = vmatpush.bf16.msra.mxu0 0
    %2630 = vmatpush.bf16.msra.mxu0 0
    %2631 = vmatpush.bf16.msra.mxu0 0
    %2632 = vmatpush.bf16.msra.mxu0 0
    %2633 = vmatpush.bf16.msra.mxu0 0
    %2634 = vmatpush.bf16.msra.mxu0 0
    %2635 = vmatpush.bf16.msra.mxu0 %v2568
    %2636 = vmatmul.bf16.gmra.mxu0 %v2585
    %v2637 = vpop.f32.mrf.mxu0
    %v2638 = vadd.f32 0.0, %v2637
    %v2639 = vpop.f32.mrf.mxu0
    %v2640 = vadd.f32 0.0, %v2639
    %2641 = vmatmul.bf16.gmra.mxu0 %v2588
    %v2642 = vpop.f32.mrf.mxu0
    %v2643 = vadd.f32 0.0, %v2642
    %v2644 = vpop.f32.mrf.mxu0
    %v2645 = vadd.f32 0.0, %v2644
    %2646 = vdwg.mxu0
    %2647 = vmatpush.bf16.msra.mxu0 0
    %2648 = vmatpush.bf16.msra.mxu0 0
    %2649 = vmatpush.bf16.msra.mxu0 0
    %2650 = vmatpush.bf16.msra.mxu0 0
    %2651 = vmatpush.bf16.msra.mxu0 0
    %2652 = vmatpush.bf16.msra.mxu0 0
    %2653 = vmatpush.bf16.msra.mxu0 0
    %2654 = vmatpush.bf16.msra.mxu0 %v2569
    %2655 = vmatmul.bf16.gmra.mxu0 %v2585
    %v2656 = vpop.f32.mrf.mxu0
    %v2657 = vadd.f32 0.0, %v2656
    %v2658 = vpop.f32.mrf.mxu0
    %v2659 = vadd.f32 0.0, %v2658
    %2660 = vmatmul.bf16.gmra.mxu0 %v2588
    %v2661 = vpop.f32.mrf.mxu0
    %v2662 = vadd.f32 0.0, %v2661
    %v2663 = vpop.f32.mrf.mxu0
    %v2664 = vadd.f32 0.0, %v2663
    %2665 = vdwg.mxu0
    %v2667 = vsel %vm1273, %v2578, 0
    %v2670 = vsel %vm1273, %v2579, 0
    %2672 = vmatpush.bf16.msra.mxu0 0
    %2673 = vmatpush.bf16.msra.mxu0 0
    %2674 = vmatpush.bf16.msra.mxu0 0
    %2675 = vmatpush.bf16.msra.mxu0 0
    %2676 = vmatpush.bf16.msra.mxu0 0
    %2677 = vmatpush.bf16.msra.mxu0 0
    %2678 = vmatpush.bf16.msra.mxu0 0
    %2679 = vmatpush.bf16.msra.mxu0 %v2254
    %2680 = vmatmul.bf16.gmra.mxu0 %v2667
    %v2681 = vpop.f32.mrf.mxu0
    %v2682 = vadd.f32 %v2600, %v2681
    %v2683 = vpop.f32.mrf.mxu0
    %v2684 = vadd.f32 %v2602, %v2683
    %2685 = vmatmul.bf16.gmra.mxu0 %v2670
    %v2686 = vpop.f32.mrf.mxu0
    %v2687 = vadd.f32 %v2605, %v2686
    %v2688 = vpop.f32.mrf.mxu0
    %v2689 = vadd.f32 %v2607, %v2688
    %2690 = vdwg.mxu0
    %2691 = vmatpush.bf16.msra.mxu0 0
    %2692 = vmatpush.bf16.msra.mxu0 0
    %2693 = vmatpush.bf16.msra.mxu0 0
    %2694 = vmatpush.bf16.msra.mxu0 0
    %2695 = vmatpush.bf16.msra.mxu0 0
    %2696 = vmatpush.bf16.msra.mxu0 0
    %2697 = vmatpush.bf16.msra.mxu0 0
    %2698 = vmatpush.bf16.msra.mxu0 %v2255
    %2699 = vmatmul.bf16.gmra.mxu0 %v2667
    %v2700 = vpop.f32.mrf.mxu0
    %v2701 = vadd.f32 %v2619, %v2700
    %v2702 = vpop.f32.mrf.mxu0
    %v2703 = vadd.f32 %v2621, %v2702
    %2704 = vmatmul.bf16.gmra.mxu0 %v2670
    %v2705 = vpop.f32.mrf.mxu0
    %v2706 = vadd.f32 %v2624, %v2705
    %v2707 = vpop.f32.mrf.mxu0
    %v2708 = vadd.f32 %v2626, %v2707
    %2709 = vdwg.mxu0
    %2710 = vmatpush.bf16.msra.mxu0 0
    %2711 = vmatpush.bf16.msra.mxu0 0
    %2712 = vmatpush.bf16.msra.mxu0 0
    %2713 = vmatpush.bf16.msra.mxu0 0
    %2714 = vmatpush.bf16.msra.mxu0 0
    %2715 = vmatpush.bf16.msra.mxu0 0
    %2716 = vmatpush.bf16.msra.mxu0 0
    %2717 = vmatpush.bf16.msra.mxu0 %v2256
    %2718 = vmatmul.bf16.gmra.mxu0 %v2667
    %v2719 = vpop.f32.mrf.mxu0
    %v2720 = vadd.f32 %v2638, %v2719
    %v2721 = vpop.f32.mrf.mxu0
    %v2722 = vadd.f32 %v2640, %v2721
    %2723 = vmatmul.bf16.gmra.mxu0 %v2670
    %v2724 = vpop.f32.mrf.mxu0
    %v2725 = vadd.f32 %v2643, %v2724
    %v2726 = vpop.f32.mrf.mxu0
    %v2727 = vadd.f32 %v2645, %v2726
    %2728 = vdwg.mxu0
    %2729 = vmatpush.bf16.msra.mxu0 0
    %2730 = vmatpush.bf16.msra.mxu0 0
    %2731 = vmatpush.bf16.msra.mxu0 0
    %2732 = vmatpush.bf16.msra.mxu0 0
    %2733 = vmatpush.bf16.msra.mxu0 0
    %2734 = vmatpush.bf16.msra.mxu0 0
    %2735 = vmatpush.bf16.msra.mxu0 0
    %2736 = vmatpush.bf16.msra.mxu0 %v2257
    %2737 = vmatmul.bf16.gmra.mxu0 %v2667
    %v2738 = vpop.f32.mrf.mxu0
    %v2739 = vadd.f32 %v2657, %v2738
    %v2740 = vpop.f32.mrf.mxu0
    %v2741 = vadd.f32 %v2659, %v2740
    %2742 = vmatmul.bf16.gmra.mxu0 %v2670
    %v2743 = vpop.f32.mrf.mxu0
    %v2744 = vadd.f32 %v2662, %v2743
    %v2745 = vpop.f32.mrf.mxu0
    %v2746 = vadd.f32 %v2664, %v2745
    %2747 = vdwg.mxu0
    %2749 = vset.pattern.permute.xlu0 0
    %2750 = vperm.xlu0 %2749, %v63
    %v2751 = vpop.permute.xlu0 %2750
    %2754 = vset.pattern.permute.xlu0 0
    %2755 = vperm.xlu0 %2754, %v64
    %v2756 = vpop.permute.xlu0 %2755
    %2759 = vset.pattern.permute.xlu0 0
    %2760 = vperm.xlu0 %2759, %v65
    %v2761 = vpop.permute.xlu0 %2760
    %2764 = vset.pattern.permute.xlu0 0
    %2765 = vperm.xlu0 %2764, %v66
    %v2766 = vpop.permute.xlu0 %2765
    %v2768 = vadd.f32 %v2682, %v2751
    %v2769 = vadd.f32 %v2701, %v2751
    %v2770 = vadd.f32 %v2720, %v2751
    %v2771 = vadd.f32 %v2739, %v2751
    %v2772 = vadd.f32 %v2684, %v2756
    %v2773 = vadd.f32 %v2703, %v2756
    %v2774 = vadd.f32 %v2722, %v2756
    %v2775 = vadd.f32 %v2741, %v2756
    %v2776 = vadd.f32 %v2687, %v2761
    %v2777 = vadd.f32 %v2706, %v2761
    %v2778 = vadd.f32 %v2725, %v2761
    %v2779 = vadd.f32 %v2744, %v2761
    %v2780 = vadd.f32 %v2689, %v2766
    %v2781 = vadd.f32 %v2708, %v2766
    %v2782 = vadd.f32 %v2727, %v2766
    %v2783 = vadd.f32 %v2746, %v2766
    %v2784 = vadd.f32 %v2768, %v1474
    %v2785 = vadd.f32 %v2769, %v1475
    %v2786 = vadd.f32 %v2770, %v1476
    %v2787 = vadd.f32 %v2771, %v1477
    %v2788 = vadd.f32 %v2772, %v1478
    %v2789 = vadd.f32 %v2773, %v1479
    %v2790 = vadd.f32 %v2774, %v1480
    %v2791 = vadd.f32 %v2775, %v1481
    %v2792 = vadd.f32 %v2776, %v1482
    %v2793 = vadd.f32 %v2777, %v1483
    %v2794 = vadd.f32 %v2778, %v1484
    %v2795 = vadd.f32 %v2779, %v1485
    %v2796 = vadd.f32 %v2780, %v1486
    %v2797 = vadd.f32 %v2781, %v1487
    %v2798 = vadd.f32 %v2782, %v1488
    %v2799 = vadd.f32 %v2783, %v1489
    %v2800 = vadd.f32 %v2784, %v2788
    %v2801 = vadd.f32 %v2800, %v2792
    %v2802 = vadd.f32 %v2801, %v2796
    %v2803 = vrot.slane %v2802, 4
    %v2804 = vadd.f32 %v2802, %v2803
    %v2805 = vrot.slane %v2804, 2
    %v2806 = vadd.f32 %v2804, %v2805
    %v2807 = vrot.slane %v2806, 1
    %v2808 = vadd.f32 %v2806, %v2807
    %v2809 = vadd.f32 %v2785, %v2789
    %v2810 = vadd.f32 %v2809, %v2793
    %v2811 = vadd.f32 %v2810, %v2797
    %v2812 = vrot.slane %v2811, 4
    %v2813 = vadd.f32 %v2811, %v2812
    %v2814 = vrot.slane %v2813, 2
    %v2815 = vadd.f32 %v2813, %v2814
    %v2816 = vrot.slane %v2815, 1
    %v2817 = vadd.f32 %v2815, %v2816
    %v2818 = vadd.f32 %v2786, %v2790
    %v2819 = vadd.f32 %v2818, %v2794
    %v2820 = vadd.f32 %v2819, %v2798
    %v2821 = vrot.slane %v2820, 4
    %v2822 = vadd.f32 %v2820, %v2821
    %v2823 = vrot.slane %v2822, 2
    %v2824 = vadd.f32 %v2822, %v2823
    %v2825 = vrot.slane %v2824, 1
    %v2826 = vadd.f32 %v2824, %v2825
    %v2827 = vadd.f32 %v2787, %v2791
    %v2828 = vadd.f32 %v2827, %v2795
    %v2829 = vadd.f32 %v2828, %v2799
    %v2830 = vrot.slane %v2829, 4
    %v2831 = vadd.f32 %v2829, %v2830
    %v2832 = vrot.slane %v2831, 2
    %v2833 = vadd.f32 %v2831, %v2832
    %v2834 = vrot.slane %v2833, 1
    %v2835 = vadd.f32 %v2833, %v2834
    %v2836 = vmul.f32 %v2808, %v213
    %v2837 = vmul.f32 %v2817, %v213
    %v2838 = vmul.f32 %v2826, %v213
    %v2839 = vmul.f32 %v2835, %v213
    %v2840 = vsub.f32 %v2784, %v2836
    %v2841 = vsub.f32 %v2785, %v2837
    %v2842 = vsub.f32 %v2786, %v2838
    %v2843 = vsub.f32 %v2787, %v2839
    %v2844 = vsub.f32 %v2788, %v2836
    %v2845 = vsub.f32 %v2789, %v2837
    %v2846 = vsub.f32 %v2790, %v2838
    %v2847 = vsub.f32 %v2791, %v2839
    %v2848 = vsub.f32 %v2792, %v2836
    %v2849 = vsub.f32 %v2793, %v2837
    %v2850 = vsub.f32 %v2794, %v2838
    %v2851 = vsub.f32 %v2795, %v2839
    %v2852 = vsub.f32 %v2796, %v2836
    %v2853 = vsub.f32 %v2797, %v2837
    %v2854 = vsub.f32 %v2798, %v2838
    %v2855 = vsub.f32 %v2799, %v2839
    %v2856 = vmul.f32 %v2840, %v2840
    %v2857 = vmul.f32 %v2841, %v2841
    %v2858 = vmul.f32 %v2842, %v2842
    %v2859 = vmul.f32 %v2843, %v2843
    %v2860 = vmul.f32 %v2844, %v2844
    %v2861 = vmul.f32 %v2845, %v2845
    %v2862 = vmul.f32 %v2846, %v2846
    %v2863 = vmul.f32 %v2847, %v2847
    %v2864 = vmul.f32 %v2848, %v2848
    %v2865 = vmul.f32 %v2849, %v2849
    %v2866 = vmul.f32 %v2850, %v2850
    %v2867 = vmul.f32 %v2851, %v2851
    %v2868 = vmul.f32 %v2852, %v2852
    %v2869 = vmul.f32 %v2853, %v2853
    %v2870 = vmul.f32 %v2854, %v2854
    %v2871 = vmul.f32 %v2855, %v2855
    %v2872 = vadd.f32 %v2856, %v2860
    %v2873 = vadd.f32 %v2872, %v2864
    %v2874 = vadd.f32 %v2873, %v2868
    %v2875 = vrot.slane %v2874, 4
    %v2876 = vadd.f32 %v2874, %v2875
    %v2877 = vrot.slane %v2876, 2
    %v2878 = vadd.f32 %v2876, %v2877
    %v2879 = vrot.slane %v2878, 1
    %v2880 = vadd.f32 %v2878, %v2879
    %v2881 = vadd.f32 %v2857, %v2861
    %v2882 = vadd.f32 %v2881, %v2865
    %v2883 = vadd.f32 %v2882, %v2869
    %v2884 = vrot.slane %v2883, 4
    %v2885 = vadd.f32 %v2883, %v2884
    %v2886 = vrot.slane %v2885, 2
    %v2887 = vadd.f32 %v2885, %v2886
    %v2888 = vrot.slane %v2887, 1
    %v2889 = vadd.f32 %v2887, %v2888
    %v2890 = vadd.f32 %v2858, %v2862
    %v2891 = vadd.f32 %v2890, %v2866
    %v2892 = vadd.f32 %v2891, %v2870
    %v2893 = vrot.slane %v2892, 4
    %v2894 = vadd.f32 %v2892, %v2893
    %v2895 = vrot.slane %v2894, 2
    %v2896 = vadd.f32 %v2894, %v2895
    %v2897 = vrot.slane %v2896, 1
    %v2898 = vadd.f32 %v2896, %v2897
    %v2899 = vadd.f32 %v2859, %v2863
    %v2900 = vadd.f32 %v2899, %v2867
    %v2901 = vadd.f32 %v2900, %v2871
    %v2902 = vrot.slane %v2901, 4
    %v2903 = vadd.f32 %v2901, %v2902
    %v2904 = vrot.slane %v2903, 2
    %v2905 = vadd.f32 %v2903, %v2904
    %v2906 = vrot.slane %v2905, 1
    %v2907 = vadd.f32 %v2905, %v2906
    %v2908 = vmul.f32 %v2880, %v213
    %v2909 = vmul.f32 %v2889, %v213
    %v2910 = vmul.f32 %v2898, %v213
    %v2911 = vmul.f32 %v2907, %v213
    %v2912 = vadd.f32 %v2908, 1e-05
    %v2913 = vadd.f32 %v2909, 1e-05
    %v2914 = vadd.f32 %v2910, 1e-05
    %v2915 = vadd.f32 %v2911, 1e-05
    %v2916 = vrsqrt.pop %v2912
    %v2917 = vmul.f32 %v2916, %v2912
    %v2918 = vmul.f32 %v2917, %v2916
    %v2919 = vmul.f32 0.5, %v2918
    %v2920 = vsub.f32 1.5, %v2919
    %v2921 = vmul.f32 %v2916, %v2920
    %vm2922 = vweird.f32 %v2912
    %vm2923 = vweird.f32 %v2916
    %vm2924 = vmor %vm2922, %vm2923
    %v2925 = vsel %vm2924, %v2916, %v2921
    %v2926 = vrsqrt.pop %v2913
    %v2927 = vmul.f32 %v2926, %v2913
    %v2928 = vmul.f32 %v2927, %v2926
    %v2929 = vmul.f32 0.5, %v2928
    %v2930 = vsub.f32 1.5, %v2929
    %v2931 = vmul.f32 %v2926, %v2930
    %vm2932 = vweird.f32 %v2913
    %vm2933 = vweird.f32 %v2926
    %vm2934 = vmor %vm2932, %vm2933
    %v2935 = vsel %vm2934, %v2926, %v2931
    %v2936 = vrsqrt.pop %v2914
    %v2937 = vmul.f32 %v2936, %v2914
    %v2938 = vmul.f32 %v2937, %v2936
    %v2939 = vmul.f32 0.5, %v2938
    %v2940 = vsub.f32 1.5, %v2939
    %v2941 = vmul.f32 %v2936, %v2940
    %vm2942 = vweird.f32 %v2914
    %vm2943 = vweird.f32 %v2936
    %vm2944 = vmor %vm2942, %vm2943
    %v2945 = vsel %vm2944, %v2936, %v2941
    %v2946 = vrsqrt.pop %v2915
    %v2947 = vmul.f32 %v2946, %v2915
    %v2948 = vmul.f32 %v2947, %v2946
    %v2949 = vmul.f32 0.5, %v2948
    %v2950 = vsub.f32 1.5, %v2949
    %v2951 = vmul.f32 %v2946, %v2950
    %vm2952 = vweird.f32 %v2915
    %vm2953 = vweird.f32 %v2946
    %vm2954 = vmor %vm2952, %vm2953
    %v2955 = vsel %vm2954, %v2946, %v2951
    %v2956 = vmul.f32 %v2840, %v2925
    %v2957 = vmul.f32 %v2841, %v2935
    %v2958 = vmul.f32 %v2842, %v2945
    %v2959 = vmul.f32 %v2843, %v2955
    %v2960 = vmul.f32 %v2844, %v2925
    %v2961 = vmul.f32 %v2845, %v2935
    %v2962 = vmul.f32 %v2846, %v2945
    %v2963 = vmul.f32 %v2847, %v2955
    %v2964 = vmul.f32 %v2848, %v2925
    %v2965 = vmul.f32 %v2849, %v2935
    %v2966 = vmul.f32 %v2850, %v2945
    %v2967 = vmul.f32 %v2851, %v2955
    %v2968 = vmul.f32 %v2852, %v2925
    %v2969 = vmul.f32 %v2853, %v2935
    %v2970 = vmul.f32 %v2854, %v2945
    %v2971 = vmul.f32 %v2855, %v2955
    %2973 = vset.pattern.permute.xlu0 0
    %2974 = vperm.xlu0 %2973, %v51
    %v2975 = vpop.permute.xlu0 %2974
    %2978 = vset.pattern.permute.xlu0 0
    %2979 = vperm.xlu0 %2978, %v52
    %v2980 = vpop.permute.xlu0 %2979
    %2983 = vset.pattern.permute.xlu0 0
    %2984 = vperm.xlu0 %2983, %v53
    %v2985 = vpop.permute.xlu0 %2984
    %2988 = vset.pattern.permute.xlu0 0
    %2989 = vperm.xlu0 %2988, %v54
    %v2990 = vpop.permute.xlu0 %2989
    %v2992 = vmul.f32 %v2956, %v2975
    %v2993 = vmul.f32 %v2957, %v2975
    %v2994 = vmul.f32 %v2958, %v2975
    %v2995 = vmul.f32 %v2959, %v2975
    %v2996 = vmul.f32 %v2960, %v2980
    %v2997 = vmul.f32 %v2961, %v2980
    %v2998 = vmul.f32 %v2962, %v2980
    %v2999 = vmul.f32 %v2963, %v2980
    %v3000 = vmul.f32 %v2964, %v2985
    %v3001 = vmul.f32 %v2965, %v2985
    %v3002 = vmul.f32 %v2966, %v2985
    %v3003 = vmul.f32 %v2967, %v2985
    %v3004 = vmul.f32 %v2968, %v2990
    %v3005 = vmul.f32 %v2969, %v2990
    %v3006 = vmul.f32 %v2970, %v2990
    %v3007 = vmul.f32 %v2971, %v2990
    %3009 = vset.pattern.permute.xlu0 0
    %3010 = vperm.xlu0 %3009, %v55
    %v3011 = vpop.permute.xlu0 %3010
    %3014 = vset.pattern.permute.xlu0 0
    %3015 = vperm.xlu0 %3014, %v56
    %v3016 = vpop.permute.xlu0 %3015
    %3019 = vset.pattern.permute.xlu0 0
    %3020 = vperm.xlu0 %3019, %v57
    %v3021 = vpop.permute.xlu0 %3020
    %3024 = vset.pattern.permute.xlu0 0
    %3025 = vperm.xlu0 %3024, %v58
    %v3026 = vpop.permute.xlu0 %3025
    %v3028 = vadd.f32 %v2992, %v3011
    %v3029 = vadd.f32 %v2993, %v3011
    %v3030 = vadd.f32 %v2994, %v3011
    %v3031 = vadd.f32 %v2995, %v3011
    %v3032 = vadd.f32 %v2996, %v3016
    %v3033 = vadd.f32 %v2997, %v3016
    %v3034 = vadd.f32 %v2998, %v3016
    %v3035 = vadd.f32 %v2999, %v3016
    %v3036 = vadd.f32 %v3000, %v3021
    %v3037 = vadd.f32 %v3001, %v3021
    %v3038 = vadd.f32 %v3002, %v3021
    %v3039 = vadd.f32 %v3003, %v3021
    %v3040 = vadd.f32 %v3004, %v3026
    %v3041 = vadd.f32 %v3005, %v3026
    %v3042 = vadd.f32 %v3006, %v3026
    %v3043 = vadd.f32 %v3007, %v3026
    %v3044 = vpack.c.bf16 %v3032, %v3028
    %v3045 = vpack.c.bf16 %v3033, %v3029
    %v3046 = vpack.c.bf16 %v3034, %v3030
    %v3047 = vpack.c.bf16 %v3035, %v3031
    %v3048 = vpack.c.bf16 %v3040, %v3036
    %v3049 = vpack.c.bf16 %v3041, %v3037
    %v3050 = vpack.c.bf16 %v3042, %v3038
    %v3051 = vpack.c.bf16 %v3043, %v3039
    %3053 = vset.pattern.permute.xlu0 0
    %3054 = vperm.xlu0 %3053, %v71
    %v3055 = vpop.permute.xlu0 %3054
    %3058 = vset.pattern.permute.xlu0 0
    %3059 = vperm.xlu0 %3058, %v72
    %v3060 = vpop.permute.xlu0 %3059
    %3063 = vset.pattern.permute.xlu0 0
    %3064 = vperm.xlu0 %3063, %v73
    %v3065 = vpop.permute.xlu0 %3064
    %3068 = vset.pattern.permute.xlu0 0
    %3069 = vperm.xlu0 %3068, %v74
    %v3070 = vpop.permute.xlu0 %3069
    %3073 = vset.pattern.permute.xlu0 0
    %3074 = vperm.xlu0 %3073, %v75
    %v3075 = vpop.permute.xlu0 %3074
    %3078 = vset.pattern.permute.xlu0 0
    %3079 = vperm.xlu0 %3078, %v76
    %v3080 = vpop.permute.xlu0 %3079
    %3083 = vset.pattern.permute.xlu0 0
    %3084 = vperm.xlu0 %3083, %v77
    %v3085 = vpop.permute.xlu0 %3084
    %3088 = vset.pattern.permute.xlu0 0
    %3089 = vperm.xlu0 %3088, %v78
    %v3090 = vpop.permute.xlu0 %3089
    %3093 = vset.pattern.permute.xlu0 0
    %3094 = vperm.xlu0 %3093, %v79
    %v3095 = vpop.permute.xlu0 %3094
    %3098 = vset.pattern.permute.xlu0 0
    %3099 = vperm.xlu0 %3098, %v80
    %v3100 = vpop.permute.xlu0 %3099
    %3103 = vset.pattern.permute.xlu0 0
    %3104 = vperm.xlu0 %3103, %v81
    %v3105 = vpop.permute.xlu0 %3104
    %3108 = vset.pattern.permute.xlu0 0
    %3109 = vperm.xlu0 %3108, %v82
    %v3110 = vpop.permute.xlu0 %3109
    %3113 = vset.pattern.permute.xlu0 0
    %3114 = vperm.xlu0 %3113, %v83
    %v3115 = vpop.permute.xlu0 %3114
    %3118 = vset.pattern.permute.xlu0 0
    %3119 = vperm.xlu0 %3118, %v84
    %v3120 = vpop.permute.xlu0 %3119
    %3123 = vset.pattern.permute.xlu0 0
    %3124 = vperm.xlu0 %3123, %v85
    %v3125 = vpop.permute.xlu0 %3124
    %3128 = vset.pattern.permute.xlu0 0
    %3129 = vperm.xlu0 %3128, %v86
    %v3130 = vpop.permute.xlu0 %3129
    %3133 = vset.pattern.permute.xlu0 0
    %3134 = vperm.xlu0 %3133, %v87
    %v3135 = vpop.permute.xlu0 %3134
    %3138 = vset.pattern.permute.xlu0 0
    %3139 = vperm.xlu0 %3138, %v88
    %v3140 = vpop.permute.xlu0 %3139
    %3143 = vset.pattern.permute.xlu0 0
    %3144 = vperm.xlu0 %3143, %v89
    %v3145 = vpop.permute.xlu0 %3144
    %3148 = vset.pattern.permute.xlu0 0
    %3149 = vperm.xlu0 %3148, %v90
    %v3150 = vpop.permute.xlu0 %3149
    %3153 = vset.pattern.permute.xlu0 0
    %3154 = vperm.xlu0 %3153, %v91
    %v3155 = vpop.permute.xlu0 %3154
    %3158 = vset.pattern.permute.xlu0 0
    %3159 = vperm.xlu0 %3158, %v92
    %v3160 = vpop.permute.xlu0 %3159
    %3163 = vset.pattern.permute.xlu0 0
    %3164 = vperm.xlu0 %3163, %v93
    %v3165 = vpop.permute.xlu0 %3164
    %3168 = vset.pattern.permute.xlu0 0
    %3169 = vperm.xlu0 %3168, %v94
    %v3170 = vpop.permute.xlu0 %3169
    %3173 = vset.pattern.permute.xlu0 0
    %3174 = vperm.xlu0 %3173, %v95
    %v3175 = vpop.permute.xlu0 %3174
    %3178 = vset.pattern.permute.xlu0 0
    %3179 = vperm.xlu0 %3178, %v96
    %v3180 = vpop.permute.xlu0 %3179
    %3183 = vset.pattern.permute.xlu0 0
    %3184 = vperm.xlu0 %3183, %v97
    %v3185 = vpop.permute.xlu0 %3184
    %3188 = vset.pattern.permute.xlu0 0
    %3189 = vperm.xlu0 %3188, %v98
    %v3190 = vpop.permute.xlu0 %3189
    %3193 = vset.pattern.permute.xlu0 0
    %3194 = vperm.xlu0 %3193, %v99
    %v3195 = vpop.permute.xlu0 %3194
    %3198 = vset.pattern.permute.xlu0 0
    %3199 = vperm.xlu0 %3198, %v100
    %v3200 = vpop.permute.xlu0 %3199
    %3203 = vset.pattern.permute.xlu0 0
    %3204 = vperm.xlu0 %3203, %v101
    %v3205 = vpop.permute.xlu0 %3204
    %3208 = vset.pattern.permute.xlu0 0
    %3209 = vperm.xlu0 %3208, %v102
    %v3210 = vpop.permute.xlu0 %3209
    %v3244 = vunpack.c.l.b16 %v135
    %v3245 = vunpack.c.l.b16 %v136
    %v3246 = vunpack.c.l.b16 %v137
    %v3247 = vunpack.c.l.b16 %v138
    %v3248 = vunpack.c.l.b16 %v139
    %v3249 = vunpack.c.l.b16 %v140
    %v3250 = vunpack.c.l.b16 %v141
    %v3251 = vunpack.c.l.b16 %v142
    %v3252 = vunpack.c.l.b16 %v143
    %v3253 = vunpack.c.l.b16 %v144
    %v3254 = vunpack.c.l.b16 %v145
    %v3255 = vunpack.c.l.b16 %v146
    %v3256 = vunpack.c.l.b16 %v147
    %v3257 = vunpack.c.l.b16 %v148
    %v3258 = vunpack.c.l.b16 %v149
    %v3259 = vunpack.c.l.b16 %v150
    %v3260 = vunpack.c.l.b16 %v151
    %v3261 = vunpack.c.l.b16 %v152
    %v3262 = vunpack.c.l.b16 %v153
    %v3263 = vunpack.c.l.b16 %v154
    %v3264 = vunpack.c.l.b16 %v155
    %v3265 = vunpack.c.l.b16 %v156
    %v3266 = vunpack.c.l.b16 %v157
    %v3267 = vunpack.c.l.b16 %v158
    %v3268 = vunpack.c.l.b16 %v159
    %v3269 = vunpack.c.l.b16 %v160
    %v3270 = vunpack.c.l.b16 %v161
    %v3271 = vunpack.c.l.b16 %v162
    %v3272 = vunpack.c.l.b16 %v163
    %v3273 = vunpack.c.l.b16 %v164
    %v3274 = vunpack.c.l.b16 %v165
    %v3275 = vunpack.c.l.b16 %v166
    %v3276 = vpack.c.b16 %v3245, %v3244
    %v3277 = vpack.c.b16 %v3247, %v3246
    %v3278 = vpack.c.b16 %v3249, %v3248
    %v3279 = vpack.c.b16 %v3251, %v3250
    %v3280 = vpack.c.b16 %v3253, %v3252
    %v3281 = vpack.c.b16 %v3255, %v3254
    %v3282 = vpack.c.b16 %v3257, %v3256
    %v3283 = vpack.c.b16 %v3259, %v3258
    %v3284 = vpack.c.b16 %v3261, %v3260
    %v3285 = vpack.c.b16 %v3263, %v3262
    %v3286 = vpack.c.b16 %v3265, %v3264
    %v3287 = vpack.c.b16 %v3267, %v3266
    %v3288 = vpack.c.b16 %v3269, %v3268
    %v3289 = vpack.c.b16 %v3271, %v3270
    %v3290 = vpack.c.b16 %v3273, %v3272
    %v3291 = vpack.c.b16 %v3275, %v3274
    %v3293 = vsel %vm460, %v3276, 0
    %v3296 = vsel %vm460, %v3277, 0
    %v3299 = vsel %vm460, %v3278, 0
    %v3302 = vsel %vm460, %v3279, 0
    %v3305 = vsel %vm460, %v3280, 0
    %v3308 = vsel %vm460, %v3281, 0
    %v3311 = vsel %vm460, %v3282, 0
    %v3314 = vsel %vm460, %v3283, 0
    %v3317 = vsel %vm460, %v3284, 0
    %v3320 = vsel %vm460, %v3285, 0
    %v3323 = vsel %vm460, %v3286, 0
    %v3326 = vsel %vm460, %v3287, 0
    %v3329 = vsel %vm460, %v3288, 0
    %v3332 = vsel %vm460, %v3289, 0
    %v3335 = vsel %vm460, %v3290, 0
    %v3338 = vsel %vm460, %v3291, 0
    %3340 = vmatpush.bf16.msra.mxu0 0
    %3341 = vmatpush.bf16.msra.mxu0 0
    %3342 = vmatpush.bf16.msra.mxu0 0
    %3343 = vmatpush.bf16.msra.mxu0 0
    %3344 = vmatpush.bf16.msra.mxu0 0
    %3345 = vmatpush.bf16.msra.mxu0 0
    %3346 = vmatpush.bf16.msra.mxu0 %v3048
    %3347 = vmatpush.bf16.msra.mxu0 %v3044
    %3348 = vmatmul.bf16.gmra.mxu0 %v3293
    %v3349 = vpop.f32.mrf.mxu0
    %v3350 = vadd.f32 %v3055, %v3349
    %v3351 = vpop.f32.mrf.mxu0
    %v3352 = vadd.f32 %v3060, %v3351
    %3353 = vmatmul.bf16.gmra.mxu0 %v3296
    %v3354 = vpop.f32.mrf.mxu0
    %v3355 = vadd.f32 %v3065, %v3354
    %v3356 = vpop.f32.mrf.mxu0
    %v3357 = vadd.f32 %v3070, %v3356
    %3358 = vmatmul.bf16.gmra.mxu0 %v3299
    %v3359 = vpop.f32.mrf.mxu0
    %v3360 = vadd.f32 %v3075, %v3359
    %v3361 = vpop.f32.mrf.mxu0
    %v3362 = vadd.f32 %v3080, %v3361
    %3363 = vmatmul.bf16.gmra.mxu0 %v3302
    %v3364 = vpop.f32.mrf.mxu0
    %v3365 = vadd.f32 %v3085, %v3364
    %v3366 = vpop.f32.mrf.mxu0
    %v3367 = vadd.f32 %v3090, %v3366
    %3368 = vmatmul.bf16.gmra.mxu0 %v3305
    %v3369 = vpop.f32.mrf.mxu0
    %v3370 = vadd.f32 %v3095, %v3369
    %v3371 = vpop.f32.mrf.mxu0
    %v3372 = vadd.f32 %v3100, %v3371
    %3373 = vmatmul.bf16.gmra.mxu0 %v3308
    %v3374 = vpop.f32.mrf.mxu0
    %v3375 = vadd.f32 %v3105, %v3374
    %v3376 = vpop.f32.mrf.mxu0
    %v3377 = vadd.f32 %v3110, %v3376
    %3378 = vmatmul.bf16.gmra.mxu0 %v3311
    %v3379 = vpop.f32.mrf.mxu0
    %v3380 = vadd.f32 %v3115, %v3379
    %v3381 = vpop.f32.mrf.mxu0
    %v3382 = vadd.f32 %v3120, %v3381
    %3383 = vmatmul.bf16.gmra.mxu0 %v3314
    %v3384 = vpop.f32.mrf.mxu0
    %v3385 = vadd.f32 %v3125, %v3384
    %v3386 = vpop.f32.mrf.mxu0
    %v3387 = vadd.f32 %v3130, %v3386
    %3388 = vmatmul.bf16.gmra.mxu0 %v3317
    %v3389 = vpop.f32.mrf.mxu0
    %v3390 = vadd.f32 %v3135, %v3389
    %v3391 = vpop.f32.mrf.mxu0
    %v3392 = vadd.f32 %v3140, %v3391
    %3393 = vmatmul.bf16.gmra.mxu0 %v3320
    %v3394 = vpop.f32.mrf.mxu0
    %v3395 = vadd.f32 %v3145, %v3394
    %v3396 = vpop.f32.mrf.mxu0
    %v3397 = vadd.f32 %v3150, %v3396
    %3398 = vmatmul.bf16.gmra.mxu0 %v3323
    %v3399 = vpop.f32.mrf.mxu0
    %v3400 = vadd.f32 %v3155, %v3399
    %v3401 = vpop.f32.mrf.mxu0
    %v3402 = vadd.f32 %v3160, %v3401
    %3403 = vmatmul.bf16.gmra.mxu0 %v3326
    %v3404 = vpop.f32.mrf.mxu0
    %v3405 = vadd.f32 %v3165, %v3404
    %v3406 = vpop.f32.mrf.mxu0
    %v3407 = vadd.f32 %v3170, %v3406
    %3408 = vmatmul.bf16.gmra.mxu0 %v3329
    %v3409 = vpop.f32.mrf.mxu0
    %v3410 = vadd.f32 %v3175, %v3409
    %v3411 = vpop.f32.mrf.mxu0
    %v3412 = vadd.f32 %v3180, %v3411
    %3413 = vmatmul.bf16.gmra.mxu0 %v3332
    %v3414 = vpop.f32.mrf.mxu0
    %v3415 = vadd.f32 %v3185, %v3414
    %v3416 = vpop.f32.mrf.mxu0
    %v3417 = vadd.f32 %v3190, %v3416
    %3418 = vmatmul.bf16.gmra.mxu0 %v3335
    %v3419 = vpop.f32.mrf.mxu0
    %v3420 = vadd.f32 %v3195, %v3419
    %v3421 = vpop.f32.mrf.mxu0
    %v3422 = vadd.f32 %v3200, %v3421
    %3423 = vmatmul.bf16.gmra.mxu0 %v3338
    %v3424 = vpop.f32.mrf.mxu0
    %v3425 = vadd.f32 %v3205, %v3424
    %v3426 = vpop.f32.mrf.mxu0
    %v3427 = vadd.f32 %v3210, %v3426
    %3428 = vdwg.mxu0
    %3429 = vmatpush.bf16.msra.mxu0 0
    %3430 = vmatpush.bf16.msra.mxu0 0
    %3431 = vmatpush.bf16.msra.mxu0 0
    %3432 = vmatpush.bf16.msra.mxu0 0
    %3433 = vmatpush.bf16.msra.mxu0 0
    %3434 = vmatpush.bf16.msra.mxu0 0
    %3435 = vmatpush.bf16.msra.mxu0 %v3049
    %3436 = vmatpush.bf16.msra.mxu0 %v3045
    %3437 = vmatmul.bf16.gmra.mxu0 %v3293
    %v3438 = vpop.f32.mrf.mxu0
    %v3439 = vadd.f32 %v3055, %v3438
    %v3440 = vpop.f32.mrf.mxu0
    %v3441 = vadd.f32 %v3060, %v3440
    %3442 = vmatmul.bf16.gmra.mxu0 %v3296
    %v3443 = vpop.f32.mrf.mxu0
    %v3444 = vadd.f32 %v3065, %v3443
    %v3445 = vpop.f32.mrf.mxu0
    %v3446 = vadd.f32 %v3070, %v3445
    %3447 = vmatmul.bf16.gmra.mxu0 %v3299
    %v3448 = vpop.f32.mrf.mxu0
    %v3449 = vadd.f32 %v3075, %v3448
    %v3450 = vpop.f32.mrf.mxu0
    %v3451 = vadd.f32 %v3080, %v3450
    %3452 = vmatmul.bf16.gmra.mxu0 %v3302
    %v3453 = vpop.f32.mrf.mxu0
    %v3454 = vadd.f32 %v3085, %v3453
    %v3455 = vpop.f32.mrf.mxu0
    %v3456 = vadd.f32 %v3090, %v3455
    %3457 = vmatmul.bf16.gmra.mxu0 %v3305
    %v3458 = vpop.f32.mrf.mxu0
    %v3459 = vadd.f32 %v3095, %v3458
    %v3460 = vpop.f32.mrf.mxu0
    %v3461 = vadd.f32 %v3100, %v3460
    %3462 = vmatmul.bf16.gmra.mxu0 %v3308
    %v3463 = vpop.f32.mrf.mxu0
    %v3464 = vadd.f32 %v3105, %v3463
    %v3465 = vpop.f32.mrf.mxu0
    %v3466 = vadd.f32 %v3110, %v3465
    %3467 = vmatmul.bf16.gmra.mxu0 %v3311
    %v3468 = vpop.f32.mrf.mxu0
    %v3469 = vadd.f32 %v3115, %v3468
    %v3470 = vpop.f32.mrf.mxu0
    %v3471 = vadd.f32 %v3120, %v3470
    %3472 = vmatmul.bf16.gmra.mxu0 %v3314
    %v3473 = vpop.f32.mrf.mxu0
    %v3474 = vadd.f32 %v3125, %v3473
    %v3475 = vpop.f32.mrf.mxu0
    %v3476 = vadd.f32 %v3130, %v3475
    %3477 = vmatmul.bf16.gmra.mxu0 %v3317
    %v3478 = vpop.f32.mrf.mxu0
    %v3479 = vadd.f32 %v3135, %v3478
    %v3480 = vpop.f32.mrf.mxu0
    %v3481 = vadd.f32 %v3140, %v3480
    %3482 = vmatmul.bf16.gmra.mxu0 %v3320
    %v3483 = vpop.f32.mrf.mxu0
    %v3484 = vadd.f32 %v3145, %v3483
    %v3485 = vpop.f32.mrf.mxu0
    %v3486 = vadd.f32 %v3150, %v3485
    %3487 = vmatmul.bf16.gmra.mxu0 %v3323
    %v3488 = vpop.f32.mrf.mxu0
    %v3489 = vadd.f32 %v3155, %v3488
    %v3490 = vpop.f32.mrf.mxu0
    %v3491 = vadd.f32 %v3160, %v3490
    %3492 = vmatmul.bf16.gmra.mxu0 %v3326
    %v3493 = vpop.f32.mrf.mxu0
    %v3494 = vadd.f32 %v3165, %v3493
    %v3495 = vpop.f32.mrf.mxu0
    %v3496 = vadd.f32 %v3170, %v3495
    %3497 = vmatmul.bf16.gmra.mxu0 %v3329
    %v3498 = vpop.f32.mrf.mxu0
    %v3499 = vadd.f32 %v3175, %v3498
    %v3500 = vpop.f32.mrf.mxu0
    %v3501 = vadd.f32 %v3180, %v3500
    %3502 = vmatmul.bf16.gmra.mxu0 %v3332
    %v3503 = vpop.f32.mrf.mxu0
    %v3504 = vadd.f32 %v3185, %v3503
    %v3505 = vpop.f32.mrf.mxu0
    %v3506 = vadd.f32 %v3190, %v3505
    %3507 = vmatmul.bf16.gmra.mxu0 %v3335
    %v3508 = vpop.f32.mrf.mxu0
    %v3509 = vadd.f32 %v3195, %v3508
    %v3510 = vpop.f32.mrf.mxu0
    %v3511 = vadd.f32 %v3200, %v3510
    %3512 = vmatmul.bf16.gmra.mxu0 %v3338
    %v3513 = vpop.f32.mrf.mxu0
    %v3514 = vadd.f32 %v3205, %v3513
    %v3515 = vpop.f32.mrf.mxu0
    %v3516 = vadd.f32 %v3210, %v3515
    %3517 = vdwg.mxu0
    %3518 = vmatpush.bf16.msra.mxu0 0
    %3519 = vmatpush.bf16.msra.mxu0 0
    %3520 = vmatpush.bf16.msra.mxu0 0
    %3521 = vmatpush.bf16.msra.mxu0 0
    %3522 = vmatpush.bf16.msra.mxu0 0
    %3523 = vmatpush.bf16.msra.mxu0 0
    %3524 = vmatpush.bf16.msra.mxu0 %v3050
    %3525 = vmatpush.bf16.msra.mxu0 %v3046
    %3526 = vmatmul.bf16.gmra.mxu0 %v3293
    %v3527 = vpop.f32.mrf.mxu0
    %v3528 = vadd.f32 %v3055, %v3527
    %v3529 = vpop.f32.mrf.mxu0
    %v3530 = vadd.f32 %v3060, %v3529
    %3531 = vmatmul.bf16.gmra.mxu0 %v3296
    %v3532 = vpop.f32.mrf.mxu0
    %v3533 = vadd.f32 %v3065, %v3532
    %v3534 = vpop.f32.mrf.mxu0
    %v3535 = vadd.f32 %v3070, %v3534
    %3536 = vmatmul.bf16.gmra.mxu0 %v3299
    %v3537 = vpop.f32.mrf.mxu0
    %v3538 = vadd.f32 %v3075, %v3537
    %v3539 = vpop.f32.mrf.mxu0
    %v3540 = vadd.f32 %v3080, %v3539
    %3541 = vmatmul.bf16.gmra.mxu0 %v3302
    %v3542 = vpop.f32.mrf.mxu0
    %v3543 = vadd.f32 %v3085, %v3542
    %v3544 = vpop.f32.mrf.mxu0
    %v3545 = vadd.f32 %v3090, %v3544
    %3546 = vmatmul.bf16.gmra.mxu0 %v3305
    %v3547 = vpop.f32.mrf.mxu0
    %v3548 = vadd.f32 %v3095, %v3547
    %v3549 = vpop.f32.mrf.mxu0
    %v3550 = vadd.f32 %v3100, %v3549
    %3551 = vmatmul.bf16.gmra.mxu0 %v3308
    %v3552 = vpop.f32.mrf.mxu0
    %v3553 = vadd.f32 %v3105, %v3552
    %v3554 = vpop.f32.mrf.mxu0
    %v3555 = vadd.f32 %v3110, %v3554
    %3556 = vmatmul.bf16.gmra.mxu0 %v3311
    %v3557 = vpop.f32.mrf.mxu0
    %v3558 = vadd.f32 %v3115, %v3557
    %v3559 = vpop.f32.mrf.mxu0
    %v3560 = vadd.f32 %v3120, %v3559
    %3561 = vmatmul.bf16.gmra.mxu0 %v3314
    %v3562 = vpop.f32.mrf.mxu0
    %v3563 = vadd.f32 %v3125, %v3562
    %v3564 = vpop.f32.mrf.mxu0
    %v3565 = vadd.f32 %v3130, %v3564
    %3566 = vmatmul.bf16.gmra.mxu0 %v3317
    %v3567 = vpop.f32.mrf.mxu0
    %v3568 = vadd.f32 %v3135, %v3567
    %v3569 = vpop.f32.mrf.mxu0
    %v3570 = vadd.f32 %v3140, %v3569
    %3571 = vmatmul.bf16.gmra.mxu0 %v3320
    %v3572 = vpop.f32.mrf.mxu0
    %v3573 = vadd.f32 %v3145, %v3572
    %v3574 = vpop.f32.mrf.mxu0
    %v3575 = vadd.f32 %v3150, %v3574
    %3576 = vmatmul.bf16.gmra.mxu0 %v3323
    %v3577 = vpop.f32.mrf.mxu0
    %v3578 = vadd.f32 %v3155, %v3577
    %v3579 = vpop.f32.mrf.mxu0
    %v3580 = vadd.f32 %v3160, %v3579
    %3581 = vmatmul.bf16.gmra.mxu0 %v3326
    %v3582 = vpop.f32.mrf.mxu0
    %v3583 = vadd.f32 %v3165, %v3582
    %v3584 = vpop.f32.mrf.mxu0
    %v3585 = vadd.f32 %v3170, %v3584
    %3586 = vmatmul.bf16.gmra.mxu0 %v3329
    %v3587 = vpop.f32.mrf.mxu0
    %v3588 = vadd.f32 %v3175, %v3587
    %v3589 = vpop.f32.mrf.mxu0
    %v3590 = vadd.f32 %v3180, %v3589
    %3591 = vmatmul.bf16.gmra.mxu0 %v3332
    %v3592 = vpop.f32.mrf.mxu0
    %v3593 = vadd.f32 %v3185, %v3592
    %v3594 = vpop.f32.mrf.mxu0
    %v3595 = vadd.f32 %v3190, %v3594
    %3596 = vmatmul.bf16.gmra.mxu0 %v3335
    %v3597 = vpop.f32.mrf.mxu0
    %v3598 = vadd.f32 %v3195, %v3597
    %v3599 = vpop.f32.mrf.mxu0
    %v3600 = vadd.f32 %v3200, %v3599
    %3601 = vmatmul.bf16.gmra.mxu0 %v3338
    %v3602 = vpop.f32.mrf.mxu0
    %v3603 = vadd.f32 %v3205, %v3602
    %v3604 = vpop.f32.mrf.mxu0
    %v3605 = vadd.f32 %v3210, %v3604
    %3606 = vdwg.mxu0
    %3607 = vmatpush.bf16.msra.mxu0 0
    %3608 = vmatpush.bf16.msra.mxu0 0
    %3609 = vmatpush.bf16.msra.mxu0 0
    %3610 = vmatpush.bf16.msra.mxu0 0
    %3611 = vmatpush.bf16.msra.mxu0 0
    %3612 = vmatpush.bf16.msra.mxu0 0
    %3613 = vmatpush.bf16.msra.mxu0 %v3051
    %3614 = vmatpush.bf16.msra.mxu0 %v3047
    %3615 = vmatmul.bf16.gmra.mxu0 %v3293
    %v3616 = vpop.f32.mrf.mxu0
    %v3617 = vadd.f32 %v3055, %v3616
    %v3618 = vpop.f32.mrf.mxu0
    %v3619 = vadd.f32 %v3060, %v3618
    %3620 = vmatmul.bf16.gmra.mxu0 %v3296
    %v3621 = vpop.f32.mrf.mxu0
    %v3622 = vadd.f32 %v3065, %v3621
    %v3623 = vpop.f32.mrf.mxu0
    %v3624 = vadd.f32 %v3070, %v3623
    %3625 = vmatmul.bf16.gmra.mxu0 %v3299
    %v3626 = vpop.f32.mrf.mxu0
    %v3627 = vadd.f32 %v3075, %v3626
    %v3628 = vpop.f32.mrf.mxu0
    %v3629 = vadd.f32 %v3080, %v3628
    %3630 = vmatmul.bf16.gmra.mxu0 %v3302
    %v3631 = vpop.f32.mrf.mxu0
    %v3632 = vadd.f32 %v3085, %v3631
    %v3633 = vpop.f32.mrf.mxu0
    %v3634 = vadd.f32 %v3090, %v3633
    %3635 = vmatmul.bf16.gmra.mxu0 %v3305
    %v3636 = vpop.f32.mrf.mxu0
    %v3637 = vadd.f32 %v3095, %v3636
    %v3638 = vpop.f32.mrf.mxu0
    %v3639 = vadd.f32 %v3100, %v3638
    %3640 = vmatmul.bf16.gmra.mxu0 %v3308
    %v3641 = vpop.f32.mrf.mxu0
    %v3642 = vadd.f32 %v3105, %v3641
    %v3643 = vpop.f32.mrf.mxu0
    %v3644 = vadd.f32 %v3110, %v3643
    %3645 = vmatmul.bf16.gmra.mxu0 %v3311
    %v3646 = vpop.f32.mrf.mxu0
    %v3647 = vadd.f32 %v3115, %v3646
    %v3648 = vpop.f32.mrf.mxu0
    %v3649 = vadd.f32 %v3120, %v3648
    %3650 = vmatmul.bf16.gmra.mxu0 %v3314
    %v3651 = vpop.f32.mrf.mxu0
    %v3652 = vadd.f32 %v3125, %v3651
    %v3653 = vpop.f32.mrf.mxu0
    %v3654 = vadd.f32 %v3130, %v3653
    %3655 = vmatmul.bf16.gmra.mxu0 %v3317
    %v3656 = vpop.f32.mrf.mxu0
    %v3657 = vadd.f32 %v3135, %v3656
    %v3658 = vpop.f32.mrf.mxu0
    %v3659 = vadd.f32 %v3140, %v3658
    %3660 = vmatmul.bf16.gmra.mxu0 %v3320
    %v3661 = vpop.f32.mrf.mxu0
    %v3662 = vadd.f32 %v3145, %v3661
    %v3663 = vpop.f32.mrf.mxu0
    %v3664 = vadd.f32 %v3150, %v3663
    %3665 = vmatmul.bf16.gmra.mxu0 %v3323
    %v3666 = vpop.f32.mrf.mxu0
    %v3667 = vadd.f32 %v3155, %v3666
    %v3668 = vpop.f32.mrf.mxu0
    %v3669 = vadd.f32 %v3160, %v3668
    %3670 = vmatmul.bf16.gmra.mxu0 %v3326
    %v3671 = vpop.f32.mrf.mxu0
    %v3672 = vadd.f32 %v3165, %v3671
    %v3673 = vpop.f32.mrf.mxu0
    %v3674 = vadd.f32 %v3170, %v3673
    %3675 = vmatmul.bf16.gmra.mxu0 %v3329
    %v3676 = vpop.f32.mrf.mxu0
    %v3677 = vadd.f32 %v3175, %v3676
    %v3678 = vpop.f32.mrf.mxu0
    %v3679 = vadd.f32 %v3180, %v3678
    %3680 = vmatmul.bf16.gmra.mxu0 %v3332
    %v3681 = vpop.f32.mrf.mxu0
    %v3682 = vadd.f32 %v3185, %v3681
    %v3683 = vpop.f32.mrf.mxu0
    %v3684 = vadd.f32 %v3190, %v3683
    %3685 = vmatmul.bf16.gmra.mxu0 %v3335
    %v3686 = vpop.f32.mrf.mxu0
    %v3687 = vadd.f32 %v3195, %v3686
    %v3688 = vpop.f32.mrf.mxu0
    %v3689 = vadd.f32 %v3200, %v3688
    %3690 = vmatmul.bf16.gmra.mxu0 %v3338
    %v3691 = vpop.f32.mrf.mxu0
    %v3692 = vadd.f32 %v3205, %v3691
    %v3693 = vpop.f32.mrf.mxu0
    %v3694 = vadd.f32 %v3210, %v3693
    %3695 = vdwg.mxu0
    %v3696 = vmul.f32 %v3390, %v3390
    %v3697 = vmul.f32 %v3479, %v3479
    %v3698 = vmul.f32 %v3568, %v3568
    %v3699 = vmul.f32 %v3657, %v3657
    %v3700 = vmul.f32 %v3392, %v3392
    %v3701 = vmul.f32 %v3481, %v3481
    %v3702 = vmul.f32 %v3570, %v3570
    %v3703 = vmul.f32 %v3659, %v3659
    %v3704 = vmul.f32 %v3395, %v3395
    %v3705 = vmul.f32 %v3484, %v3484
    %v3706 = vmul.f32 %v3573, %v3573
    %v3707 = vmul.f32 %v3662, %v3662
    %v3708 = vmul.f32 %v3397, %v3397
    %v3709 = vmul.f32 %v3486, %v3486
    %v3710 = vmul.f32 %v3575, %v3575
    %v3711 = vmul.f32 %v3664, %v3664
    %v3712 = vmul.f32 %v3400, %v3400
    %v3713 = vmul.f32 %v3489, %v3489
    %v3714 = vmul.f32 %v3578, %v3578
    %v3715 = vmul.f32 %v3667, %v3667
    %v3716 = vmul.f32 %v3402, %v3402
    %v3717 = vmul.f32 %v3491, %v3491
    %v3718 = vmul.f32 %v3580, %v3580
    %v3719 = vmul.f32 %v3669, %v3669
    %v3720 = vmul.f32 %v3405, %v3405
    %v3721 = vmul.f32 %v3494, %v3494
    %v3722 = vmul.f32 %v3583, %v3583
    %v3723 = vmul.f32 %v3672, %v3672
    %v3724 = vmul.f32 %v3407, %v3407
    %v3725 = vmul.f32 %v3496, %v3496
    %v3726 = vmul.f32 %v3585, %v3585
    %v3727 = vmul.f32 %v3674, %v3674
    %v3728 = vmul.f32 %v3410, %v3410
    %v3729 = vmul.f32 %v3499, %v3499
    %v3730 = vmul.f32 %v3588, %v3588
    %v3731 = vmul.f32 %v3677, %v3677
    %v3732 = vmul.f32 %v3412, %v3412
    %v3733 = vmul.f32 %v3501, %v3501
    %v3734 = vmul.f32 %v3590, %v3590
    %v3735 = vmul.f32 %v3679, %v3679
    %v3736 = vmul.f32 %v3415, %v3415
    %v3737 = vmul.f32 %v3504, %v3504
    %v3738 = vmul.f32 %v3593, %v3593
    %v3739 = vmul.f32 %v3682, %v3682
    %v3740 = vmul.f32 %v3417, %v3417
    %v3741 = vmul.f32 %v3506, %v3506
    %v3742 = vmul.f32 %v3595, %v3595
    %v3743 = vmul.f32 %v3684, %v3684
    %v3744 = vmul.f32 %v3420, %v3420
    %v3745 = vmul.f32 %v3509, %v3509
    %v3746 = vmul.f32 %v3598, %v3598
    %v3747 = vmul.f32 %v3687, %v3687
    %v3748 = vmul.f32 %v3422, %v3422
    %v3749 = vmul.f32 %v3511, %v3511
    %v3750 = vmul.f32 %v3600, %v3600
    %v3751 = vmul.f32 %v3689, %v3689
    %v3752 = vmul.f32 %v3425, %v3425
    %v3753 = vmul.f32 %v3514, %v3514
    %v3754 = vmul.f32 %v3603, %v3603
    %v3755 = vmul.f32 %v3692, %v3692
    %v3756 = vmul.f32 %v3427, %v3427
    %v3757 = vmul.f32 %v3516, %v3516
    %v3758 = vmul.f32 %v3605, %v3605
    %v3759 = vmul.f32 %v3694, %v3694
    %v3760 = vmul.f32 %v3390, %v3696
    %v3761 = vmul.f32 %v3479, %v3697
    %v3762 = vmul.f32 %v3568, %v3698
    %v3763 = vmul.f32 %v3657, %v3699
    %v3764 = vmul.f32 %v3392, %v3700
    %v3765 = vmul.f32 %v3481, %v3701
    %v3766 = vmul.f32 %v3570, %v3702
    %v3767 = vmul.f32 %v3659, %v3703
    %v3768 = vmul.f32 %v3395, %v3704
    %v3769 = vmul.f32 %v3484, %v3705
    %v3770 = vmul.f32 %v3573, %v3706
    %v3771 = vmul.f32 %v3662, %v3707
    %v3772 = vmul.f32 %v3397, %v3708
    %v3773 = vmul.f32 %v3486, %v3709
    %v3774 = vmul.f32 %v3575, %v3710
    %v3775 = vmul.f32 %v3664, %v3711
    %v3776 = vmul.f32 %v3400, %v3712
    %v3777 = vmul.f32 %v3489, %v3713
    %v3778 = vmul.f32 %v3578, %v3714
    %v3779 = vmul.f32 %v3667, %v3715
    %v3780 = vmul.f32 %v3402, %v3716
    %v3781 = vmul.f32 %v3491, %v3717
    %v3782 = vmul.f32 %v3580, %v3718
    %v3783 = vmul.f32 %v3669, %v3719
    %v3784 = vmul.f32 %v3405, %v3720
    %v3785 = vmul.f32 %v3494, %v3721
    %v3786 = vmul.f32 %v3583, %v3722
    %v3787 = vmul.f32 %v3672, %v3723
    %v3788 = vmul.f32 %v3407, %v3724
    %v3789 = vmul.f32 %v3496, %v3725
    %v3790 = vmul.f32 %v3585, %v3726
    %v3791 = vmul.f32 %v3674, %v3727
    %v3792 = vmul.f32 %v3410, %v3728
    %v3793 = vmul.f32 %v3499, %v3729
    %v3794 = vmul.f32 %v3588, %v3730
    %v3795 = vmul.f32 %v3677, %v3731
    %v3796 = vmul.f32 %v3412, %v3732
    %v3797 = vmul.f32 %v3501, %v3733
    %v3798 = vmul.f32 %v3590, %v3734
    %v3799 = vmul.f32 %v3679, %v3735
    %v3800 = vmul.f32 %v3415, %v3736
    %v3801 = vmul.f32 %v3504, %v3737
    %v3802 = vmul.f32 %v3593, %v3738
    %v3803 = vmul.f32 %v3682, %v3739
    %v3804 = vmul.f32 %v3417, %v3740
    %v3805 = vmul.f32 %v3506, %v3741
    %v3806 = vmul.f32 %v3595, %v3742
    %v3807 = vmul.f32 %v3684, %v3743
    %v3808 = vmul.f32 %v3420, %v3744
    %v3809 = vmul.f32 %v3509, %v3745
    %v3810 = vmul.f32 %v3598, %v3746
    %v3811 = vmul.f32 %v3687, %v3747
    %v3812 = vmul.f32 %v3422, %v3748
    %v3813 = vmul.f32 %v3511, %v3749
    %v3814 = vmul.f32 %v3600, %v3750
    %v3815 = vmul.f32 %v3689, %v3751
    %v3816 = vmul.f32 %v3425, %v3752
    %v3817 = vmul.f32 %v3514, %v3753
    %v3818 = vmul.f32 %v3603, %v3754
    %v3819 = vmul.f32 %v3692, %v3755
    %v3820 = vmul.f32 %v3427, %v3756
    %v3821 = vmul.f32 %v3516, %v3757
    %v3822 = vmul.f32 %v3605, %v3758
    %v3823 = vmul.f32 %v3694, %v3759
    %v3824 = vmul.f32 %v3760, 0.044715
    %v3825 = vmul.f32 %v3761, 0.044715
    %v3826 = vmul.f32 %v3762, 0.044715
    %v3827 = vmul.f32 %v3763, 0.044715
    %v3828 = vmul.f32 %v3764, 0.044715
    %v3829 = vmul.f32 %v3765, 0.044715
    %v3830 = vmul.f32 %v3766, 0.044715
    %v3831 = vmul.f32 %v3767, 0.044715
    %v3832 = vmul.f32 %v3768, 0.044715
    %v3833 = vmul.f32 %v3769, 0.044715
    %v3834 = vmul.f32 %v3770, 0.044715
    %v3835 = vmul.f32 %v3771, 0.044715
    %v3836 = vmul.f32 %v3772, 0.044715
    %v3837 = vmul.f32 %v3773, 0.044715
    %v3838 = vmul.f32 %v3774, 0.044715
    %v3839 = vmul.f32 %v3775, 0.044715
    %v3840 = vmul.f32 %v3776, 0.044715
    %v3841 = vmul.f32 %v3777, 0.044715
    %v3842 = vmul.f32 %v3778, 0.044715
    %v3843 = vmul.f32 %v3779, 0.044715
    %v3844 = vmul.f32 %v3780, 0.044715
    %v3845 = vmul.f32 %v3781, 0.044715
    %v3846 = vmul.f32 %v3782, 0.044715
    %v3847 = vmul.f32 %v3783, 0.044715
    %v3848 = vmul.f32 %v3784, 0.044715
    %v3849 = vmul.f32 %v3785, 0.044715
    %v3850 = vmul.f32 %v3786, 0.044715
    %v3851 = vmul.f32 %v3787, 0.044715
    %v3852 = vmul.f32 %v3788, 0.044715
    %v3853 = vmul.f32 %v3789, 0.044715
    %v3854 = vmul.f32 %v3790, 0.044715
    %v3855 = vmul.f32 %v3791, 0.044715
    %v3856 = vmul.f32 %v3792, 0.044715
    %v3857 = vmul.f32 %v3793, 0.044715
    %v3858 = vmul.f32 %v3794, 0.044715
    %v3859 = vmul.f32 %v3795, 0.044715
    %v3860 = vmul.f32 %v3796, 0.044715
    %v3861 = vmul.f32 %v3797, 0.044715
    %v3862 = vmul.f32 %v3798, 0.044715
    %v3863 = vmul.f32 %v3799, 0.044715
    %v3864 = vmul.f32 %v3800, 0.044715
    %v3865 = vmul.f32 %v3801, 0.044715
    %v3866 = vmul.f32 %v3802, 0.044715
    %v3867 = vmul.f32 %v3803, 0.044715
    %v3868 = vmul.f32 %v3804, 0.044715
    %v3869 = vmul.f32 %v3805, 0.044715
    %v3870 = vmul.f32 %v3806, 0.044715
    %v3871 = vmul.f32 %v3807, 0.044715
    %v3872 = vmul.f32 %v3808, 0.044715
    %v3873 = vmul.f32 %v3809, 0.044715
    %v3874 = vmul.f32 %v3810, 0.044715
    %v3875 = vmul.f32 %v3811, 0.044715
    %v3876 = vmul.f32 %v3812, 0.044715
    %v3877 = vmul.f32 %v3813, 0.044715
    %v3878 = vmul.f32 %v3814, 0.044715
    %v3879 = vmul.f32 %v3815, 0.044715
    %v3880 = vmul.f32 %v3816, 0.044715
    %v3881 = vmul.f32 %v3817, 0.044715
    %v3882 = vmul.f32 %v3818, 0.044715
    %v3883 = vmul.f32 %v3819, 0.044715
    %v3884 = vmul.f32 %v3820, 0.044715
    %v3885 = vmul.f32 %v3821, 0.044715
    %v3886 = vmul.f32 %v3822, 0.044715
    %v3887 = vmul.f32 %v3823, 0.044715
    %v3888 = vadd.f32 %v3390, %v3824
    %v3889 = vadd.f32 %v3479, %v3825
    %v3890 = vadd.f32 %v3568, %v3826
    %v3891 = vadd.f32 %v3657, %v3827
    %v3892 = vadd.f32 %v3392, %v3828
    %v3893 = vadd.f32 %v3481, %v3829
    %v3894 = vadd.f32 %v3570, %v3830
    %v3895 = vadd.f32 %v3659, %v3831
    %v3896 = vadd.f32 %v3395, %v3832
    %v3897 = vadd.f32 %v3484, %v3833
    %v3898 = vadd.f32 %v3573, %v3834
    %v3899 = vadd.f32 %v3662, %v3835
    %v3900 = vadd.f32 %v3397, %v3836
    %v3901 = vadd.f32 %v3486, %v3837
    %v3902 = vadd.f32 %v3575, %v3838
    %v3903 = vadd.f32 %v3664, %v3839
    %v3904 = vadd.f32 %v3400, %v3840
    %v3905 = vadd.f32 %v3489, %v3841
    %v3906 = vadd.f32 %v3578, %v3842
    %v3907 = vadd.f32 %v3667, %v3843
    %v3908 = vadd.f32 %v3402, %v3844
    %v3909 = vadd.f32 %v3491, %v3845
    %v3910 = vadd.f32 %v3580, %v3846
    %v3911 = vadd.f32 %v3669, %v3847
    %v3912 = vadd.f32 %v3405, %v3848
    %v3913 = vadd.f32 %v3494, %v3849
    %v3914 = vadd.f32 %v3583, %v3850
    %v3915 = vadd.f32 %v3672, %v3851
    %v3916 = vadd.f32 %v3407, %v3852
    %v3917 = vadd.f32 %v3496, %v3853
    %v3918 = vadd.f32 %v3585, %v3854
    %v3919 = vadd.f32 %v3674, %v3855
    %v3920 = vadd.f32 %v3410, %v3856
    %v3921 = vadd.f32 %v3499, %v3857
    %v3922 = vadd.f32 %v3588, %v3858
    %v3923 = vadd.f32 %v3677, %v3859
    %v3924 = vadd.f32 %v3412, %v3860
    %v3925 = vadd.f32 %v3501, %v3861
    %v3926 = vadd.f32 %v3590, %v3862
    %v3927 = vadd.f32 %v3679, %v3863
    %v3928 = vadd.f32 %v3415, %v3864
    %v3929 = vadd.f32 %v3504, %v3865
    %v3930 = vadd.f32 %v3593, %v3866
    %v3931 = vadd.f32 %v3682, %v3867
    %v3932 = vadd.f32 %v3417, %v3868
    %v3933 = vadd.f32 %v3506, %v3869
    %v3934 = vadd.f32 %v3595, %v3870
    %v3935 = vadd.f32 %v3684, %v3871
    %v3936 = vadd.f32 %v3420, %v3872
    %v3937 = vadd.f32 %v3509, %v3873
    %v3938 = vadd.f32 %v3598, %v3874
    %v3939 = vadd.f32 %v3687, %v3875
    %v3940 = vadd.f32 %v3422, %v3876
    %v3941 = vadd.f32 %v3511, %v3877
    %v3942 = vadd.f32 %v3600, %v3878
    %v3943 = vadd.f32 %v3689, %v3879
    %v3944 = vadd.f32 %v3425, %v3880
    %v3945 = vadd.f32 %v3514, %v3881
    %v3946 = vadd.f32 %v3603, %v3882
    %v3947 = vadd.f32 %v3692, %v3883
    %v3948 = vadd.f32 %v3427, %v3884
    %v3949 = vadd.f32 %v3516, %v3885
    %v3950 = vadd.f32 %v3605, %v3886
    %v3951 = vadd.f32 %v3694, %v3887
    %v3952 = vmul.f32 %v3888, 0.7978846
    %v3953 = vmul.f32 %v3889, 0.7978846
    %v3954 = vmul.f32 %v3890, 0.7978846
    %v3955 = vmul.f32 %v3891, 0.7978846
    %v3956 = vmul.f32 %v3892, 0.7978846
    %v3957 = vmul.f32 %v3893, 0.7978846
    %v3958 = vmul.f32 %v3894, 0.7978846
    %v3959 = vmul.f32 %v3895, 0.7978846
    %v3960 = vmul.f32 %v3896, 0.7978846
    %v3961 = vmul.f32 %v3897, 0.7978846
    %v3962 = vmul.f32 %v3898, 0.7978846
    %v3963 = vmul.f32 %v3899, 0.7978846
    %v3964 = vmul.f32 %v3900, 0.7978846
    %v3965 = vmul.f32 %v3901, 0.7978846
    %v3966 = vmul.f32 %v3902, 0.7978846
    %v3967 = vmul.f32 %v3903, 0.7978846
    %v3968 = vmul.f32 %v3904, 0.7978846
    %v3969 = vmul.f32 %v3905, 0.7978846
    %v3970 = vmul.f32 %v3906, 0.7978846
    %v3971 = vmul.f32 %v3907, 0.7978846
    %v3972 = vmul.f32 %v3908, 0.7978846
    %v3973 = vmul.f32 %v3909, 0.7978846
    %v3974 = vmul.f32 %v3910, 0.7978846
    %v3975 = vmul.f32 %v3911, 0.7978846
    %v3976 = vmul.f32 %v3912, 0.7978846
    %v3977 = vmul.f32 %v3913, 0.7978846
    %v3978 = vmul.f32 %v3914, 0.7978846
    %v3979 = vmul.f32 %v3915, 0.7978846
    %v3980 = vmul.f32 %v3916, 0.7978846
    %v3981 = vmul.f32 %v3917, 0.7978846
    %v3982 = vmul.f32 %v3918, 0.7978846
    %v3983 = vmul.f32 %v3919, 0.7978846
    %v3984 = vmul.f32 %v3920, 0.7978846
    %v3985 = vmul.f32 %v3921, 0.7978846
    %v3986 = vmul.f32 %v3922, 0.7978846
    %v3987 = vmul.f32 %v3923, 0.7978846
    %v3988 = vmul.f32 %v3924, 0.7978846
    %v3989 = vmul.f32 %v3925, 0.7978846
    %v3990 = vmul.f32 %v3926, 0.7978846
    %v3991 = vmul.f32 %v3927, 0.7978846
    %v3992 = vmul.f32 %v3928, 0.7978846
    %v3993 = vmul.f32 %v3929, 0.7978846
    %v3994 = vmul.f32 %v3930, 0.7978846
    %v3995 = vmul.f32 %v3931, 0.7978846
    %v3996 = vmul.f32 %v3932, 0.7978846
    %v3997 = vmul.f32 %v3933, 0.7978846
    %v3998 = vmul.f32 %v3934, 0.7978846
    %v3999 = vmul.f32 %v3935, 0.7978846
    %v4000 = vmul.f32 %v3936, 0.7978846
    %v4001 = vmul.f32 %v3937, 0.7978846
    %v4002 = vmul.f32 %v3938, 0.7978846
    %v4003 = vmul.f32 %v3939, 0.7978846
    %v4004 = vmul.f32 %v3940, 0.7978846
    %v4005 = vmul.f32 %v3941, 0.7978846
    %v4006 = vmul.f32 %v3942, 0.7978846
    %v4007 = vmul.f32 %v3943, 0.7978846
    %v4008 = vmul.f32 %v3944, 0.7978846
    %v4009 = vmul.f32 %v3945, 0.7978846
    %v4010 = vmul.f32 %v3946, 0.7978846
    %v4011 = vmul.f32 %v3947, 0.7978846
    %v4012 = vmul.f32 %v3948, 0.7978846
    %v4013 = vmul.f32 %v3949, 0.7978846
    %v4014 = vmul.f32 %v3950, 0.7978846
    %v4015 = vmul.f32 %v3951, 0.7978846
    %v4016 = vtanh.pop %v3952
    %v4017 = vtanh.pop %v3953
    %v4018 = vtanh.pop %v3954
    %v4019 = vtanh.pop %v3955
    %v4020 = vtanh.pop %v3956
    %v4021 = vtanh.pop %v3957
    %v4022 = vtanh.pop %v3958
    %v4023 = vtanh.pop %v3959
    %v4024 = vtanh.pop %v3960
    %v4025 = vtanh.pop %v3961
    %v4026 = vtanh.pop %v3962
    %v4027 = vtanh.pop %v3963
    %v4028 = vtanh.pop %v3964
    %v4029 = vtanh.pop %v3965
    %v4030 = vtanh.pop %v3966
    %v4031 = vtanh.pop %v3967
    %v4032 = vtanh.pop %v3968
    %v4033 = vtanh.pop %v3969
    %v4034 = vtanh.pop %v3970
    %v4035 = vtanh.pop %v3971
    %v4036 = vtanh.pop %v3972
    %v4037 = vtanh.pop %v3973
    %v4038 = vtanh.pop %v3974
    %v4039 = vtanh.pop %v3975
    %v4040 = vtanh.pop %v3976
    %v4041 = vtanh.pop %v3977
    %v4042 = vtanh.pop %v3978
    %v4043 = vtanh.pop %v3979
    %v4044 = vtanh.pop %v3980
    %v4045 = vtanh.pop %v3981
    %v4046 = vtanh.pop %v3982
    %v4047 = vtanh.pop %v3983
    %v4048 = vtanh.pop %v3984
    %v4049 = vtanh.pop %v3985
    %v4050 = vtanh.pop %v3986
    %v4051 = vtanh.pop %v3987
    %v4052 = vtanh.pop %v3988
    %v4053 = vtanh.pop %v3989
    %v4054 = vtanh.pop %v3990
    %v4055 = vtanh.pop %v3991
    %v4056 = vtanh.pop %v3992
    %v4057 = vtanh.pop %v3993
    %v4058 = vtanh.pop %v3994
    %v4059 = vtanh.pop %v3995
    %v4060 = vtanh.pop %v3996
    %v4061 = vtanh.pop %v3997
    %v4062 = vtanh.pop %v3998
    %v4063 = vtanh.pop %v3999
    %v4064 = vtanh.pop %v4000
    %v4065 = vtanh.pop %v4001
    %v4066 = vtanh.pop %v4002
    %v4067 = vtanh.pop %v4003
    %v4068 = vtanh.pop %v4004
    %v4069 = vtanh.pop %v4005
    %v4070 = vtanh.pop %v4006
    %v4071 = vtanh.pop %v4007
    %v4072 = vtanh.pop %v4008
    %v4073 = vtanh.pop %v4009
    %v4074 = vtanh.pop %v4010
    %v4075 = vtanh.pop %v4011
    %v4076 = vtanh.pop %v4012
    %v4077 = vtanh.pop %v4013
    %v4078 = vtanh.pop %v4014
    %v4079 = vtanh.pop %v4015
    %v4080 = vadd.f32 %v4016, 1.0
    %v4081 = vadd.f32 %v4017, 1.0
    %v4082 = vadd.f32 %v4018, 1.0
    %v4083 = vadd.f32 %v4019, 1.0
    %v4084 = vadd.f32 %v4020, 1.0
    %v4085 = vadd.f32 %v4021, 1.0
    %v4086 = vadd.f32 %v4022, 1.0
    %v4087 = vadd.f32 %v4023, 1.0
    %v4088 = vadd.f32 %v4024, 1.0
    %v4089 = vadd.f32 %v4025, 1.0
    %v4090 = vadd.f32 %v4026, 1.0
    %v4091 = vadd.f32 %v4027, 1.0
    %v4092 = vadd.f32 %v4028, 1.0
    %v4093 = vadd.f32 %v4029, 1.0
    %v4094 = vadd.f32 %v4030, 1.0
    %v4095 = vadd.f32 %v4031, 1.0
    %v4096 = vadd.f32 %v4032, 1.0
    %v4097 = vadd.f32 %v4033, 1.0
    %v4098 = vadd.f32 %v4034, 1.0
    %v4099 = vadd.f32 %v4035, 1.0
    %v4100 = vadd.f32 %v4036, 1.0
    %v4101 = vadd.f32 %v4037, 1.0
    %v4102 = vadd.f32 %v4038, 1.0
    %v4103 = vadd.f32 %v4039, 1.0
    %v4104 = vadd.f32 %v4040, 1.0
    %v4105 = vadd.f32 %v4041, 1.0
    %v4106 = vadd.f32 %v4042, 1.0
    %v4107 = vadd.f32 %v4043, 1.0
    %v4108 = vadd.f32 %v4044, 1.0
    %v4109 = vadd.f32 %v4045, 1.0
    %v4110 = vadd.f32 %v4046, 1.0
    %v4111 = vadd.f32 %v4047, 1.0
    %v4112 = vadd.f32 %v4048, 1.0
    %v4113 = vadd.f32 %v4049, 1.0
    %v4114 = vadd.f32 %v4050, 1.0
    %v4115 = vadd.f32 %v4051, 1.0
    %v4116 = vadd.f32 %v4052, 1.0
    %v4117 = vadd.f32 %v4053, 1.0
    %v4118 = vadd.f32 %v4054, 1.0
    %v4119 = vadd.f32 %v4055, 1.0
    %v4120 = vadd.f32 %v4056, 1.0
    %v4121 = vadd.f32 %v4057, 1.0
    %v4122 = vadd.f32 %v4058, 1.0
    %v4123 = vadd.f32 %v4059, 1.0
    %v4124 = vadd.f32 %v4060, 1.0
    %v4125 = vadd.f32 %v4061, 1.0
    %v4126 = vadd.f32 %v4062, 1.0
    %v4127 = vadd.f32 %v4063, 1.0
    %v4128 = vadd.f32 %v4064, 1.0
    %v4129 = vadd.f32 %v4065, 1.0
    %v4130 = vadd.f32 %v4066, 1.0
    %v4131 = vadd.f32 %v4067, 1.0
    %v4132 = vadd.f32 %v4068, 1.0
    %v4133 = vadd.f32 %v4069, 1.0
    %v4134 = vadd.f32 %v4070, 1.0
    %v4135 = vadd.f32 %v4071, 1.0
    %v4136 = vadd.f32 %v4072, 1.0
    %v4137 = vadd.f32 %v4073, 1.0
    %v4138 = vadd.f32 %v4074, 1.0
    %v4139 = vadd.f32 %v4075, 1.0
    %v4140 = vadd.f32 %v4076, 1.0
    %v4141 = vadd.f32 %v4077, 1.0
    %v4142 = vadd.f32 %v4078, 1.0
    %v4143 = vadd.f32 %v4079, 1.0
    %v4144 = vmul.f32 %v4080, 0.5
    %v4145 = vmul.f32 %v4081, 0.5
    %v4146 = vmul.f32 %v4082, 0.5
    %v4147 = vmul.f32 %v4083, 0.5
    %v4148 = vmul.f32 %v4084, 0.5
    %v4149 = vmul.f32 %v4085, 0.5
    %v4150 = vmul.f32 %v4086, 0.5
    %v4151 = vmul.f32 %v4087, 0.5
    %v4152 = vmul.f32 %v4088, 0.5
    %v4153 = vmul.f32 %v4089, 0.5
    %v4154 = vmul.f32 %v4090, 0.5
    %v4155 = vmul.f32 %v4091, 0.5
    %v4156 = vmul.f32 %v4092, 0.5
    %v4157 = vmul.f32 %v4093, 0.5
    %v4158 = vmul.f32 %v4094, 0.5
    %v4159 = vmul.f32 %v4095, 0.5
    %v4160 = vmul.f32 %v4096, 0.5
    %v4161 = vmul.f32 %v4097, 0.5
    %v4162 = vmul.f32 %v4098, 0.5
    %v4163 = vmul.f32 %v4099, 0.5
    %v4164 = vmul.f32 %v4100, 0.5
    %v4165 = vmul.f32 %v4101, 0.5
    %v4166 = vmul.f32 %v4102, 0.5
    %v4167 = vmul.f32 %v4103, 0.5
    %v4168 = vmul.f32 %v4104, 0.5
    %v4169 = vmul.f32 %v4105, 0.5
    %v4170 = vmul.f32 %v4106, 0.5
    %v4171 = vmul.f32 %v4107, 0.5
    %v4172 = vmul.f32 %v4108, 0.5
    %v4173 = vmul.f32 %v4109, 0.5
    %v4174 = vmul.f32 %v4110, 0.5
    %v4175 = vmul.f32 %v4111, 0.5
    %v4176 = vmul.f32 %v4112, 0.5
    %v4177 = vmul.f32 %v4113, 0.5
    %v4178 = vmul.f32 %v4114, 0.5
    %v4179 = vmul.f32 %v4115, 0.5
    %v4180 = vmul.f32 %v4116, 0.5
    %v4181 = vmul.f32 %v4117, 0.5
    %v4182 = vmul.f32 %v4118, 0.5
    %v4183 = vmul.f32 %v4119, 0.5
    %v4184 = vmul.f32 %v4120, 0.5
    %v4185 = vmul.f32 %v4121, 0.5
    %v4186 = vmul.f32 %v4122, 0.5
    %v4187 = vmul.f32 %v4123, 0.5
    %v4188 = vmul.f32 %v4124, 0.5
    %v4189 = vmul.f32 %v4125, 0.5
    %v4190 = vmul.f32 %v4126, 0.5
    %v4191 = vmul.f32 %v4127, 0.5
    %v4192 = vmul.f32 %v4128, 0.5
    %v4193 = vmul.f32 %v4129, 0.5
    %v4194 = vmul.f32 %v4130, 0.5
    %v4195 = vmul.f32 %v4131, 0.5
    %v4196 = vmul.f32 %v4132, 0.5
    %v4197 = vmul.f32 %v4133, 0.5
    %v4198 = vmul.f32 %v4134, 0.5
    %v4199 = vmul.f32 %v4135, 0.5
    %v4200 = vmul.f32 %v4136, 0.5
    %v4201 = vmul.f32 %v4137, 0.5
    %v4202 = vmul.f32 %v4138, 0.5
    %v4203 = vmul.f32 %v4139, 0.5
    %v4204 = vmul.f32 %v4140, 0.5
    %v4205 = vmul.f32 %v4141, 0.5
    %v4206 = vmul.f32 %v4142, 0.5
    %v4207 = vmul.f32 %v4143, 0.5
    %v4208 = vmul.f32 %v3390, %v4144
    %v4209 = vmul.f32 %v3479, %v4145
    %v4210 = vmul.f32 %v3568, %v4146
    %v4211 = vmul.f32 %v3657, %v4147
    %v4212 = vmul.f32 %v3392, %v4148
    %v4213 = vmul.f32 %v3481, %v4149
    %v4214 = vmul.f32 %v3570, %v4150
    %v4215 = vmul.f32 %v3659, %v4151
    %v4216 = vmul.f32 %v3395, %v4152
    %v4217 = vmul.f32 %v3484, %v4153
    %v4218 = vmul.f32 %v3573, %v4154
    %v4219 = vmul.f32 %v3662, %v4155
    %v4220 = vmul.f32 %v3397, %v4156
    %v4221 = vmul.f32 %v3486, %v4157
    %v4222 = vmul.f32 %v3575, %v4158
    %v4223 = vmul.f32 %v3664, %v4159
    %v4224 = vmul.f32 %v3400, %v4160
    %v4225 = vmul.f32 %v3489, %v4161
    %v4226 = vmul.f32 %v3578, %v4162
    %v4227 = vmul.f32 %v3667, %v4163
    %v4228 = vmul.f32 %v3402, %v4164
    %v4229 = vmul.f32 %v3491, %v4165
    %v4230 = vmul.f32 %v3580, %v4166
    %v4231 = vmul.f32 %v3669, %v4167
    %v4232 = vmul.f32 %v3405, %v4168
    %v4233 = vmul.f32 %v3494, %v4169
    %v4234 = vmul.f32 %v3583, %v4170
    %v4235 = vmul.f32 %v3672, %v4171
    %v4236 = vmul.f32 %v3407, %v4172
    %v4237 = vmul.f32 %v3496, %v4173
    %v4238 = vmul.f32 %v3585, %v4174
    %v4239 = vmul.f32 %v3674, %v4175
    %v4240 = vmul.f32 %v3410, %v4176
    %v4241 = vmul.f32 %v3499, %v4177
    %v4242 = vmul.f32 %v3588, %v4178
    %v4243 = vmul.f32 %v3677, %v4179
    %v4244 = vmul.f32 %v3412, %v4180
    %v4245 = vmul.f32 %v3501, %v4181
    %v4246 = vmul.f32 %v3590, %v4182
    %v4247 = vmul.f32 %v3679, %v4183
    %v4248 = vmul.f32 %v3415, %v4184
    %v4249 = vmul.f32 %v3504, %v4185
    %v4250 = vmul.f32 %v3593, %v4186
    %v4251 = vmul.f32 %v3682, %v4187
    %v4252 = vmul.f32 %v3417, %v4188
    %v4253 = vmul.f32 %v3506, %v4189
    %v4254 = vmul.f32 %v3595, %v4190
    %v4255 = vmul.f32 %v3684, %v4191
    %v4256 = vmul.f32 %v3420, %v4192
    %v4257 = vmul.f32 %v3509, %v4193
    %v4258 = vmul.f32 %v3598, %v4194
    %v4259 = vmul.f32 %v3687, %v4195
    %v4260 = vmul.f32 %v3422, %v4196
    %v4261 = vmul.f32 %v3511, %v4197
    %v4262 = vmul.f32 %v3600, %v4198
    %v4263 = vmul.f32 %v3689, %v4199
    %v4264 = vmul.f32 %v3425, %v4200
    %v4265 = vmul.f32 %v3514, %v4201
    %v4266 = vmul.f32 %v3603, %v4202
    %v4267 = vmul.f32 %v3692, %v4203
    %v4268 = vmul.f32 %v3427, %v4204
    %v4269 = vmul.f32 %v3516, %v4205
    %v4270 = vmul.f32 %v3605, %v4206
    %v4271 = vmul.f32 %v3694, %v4207
    %v4272 = vmul.f32 %v3350, %v4208
    %v4273 = vmul.f32 %v3439, %v4209
    %v4274 = vmul.f32 %v3528, %v4210
    %v4275 = vmul.f32 %v3617, %v4211
    %v4276 = vmul.f32 %v3352, %v4212
    %v4277 = vmul.f32 %v3441, %v4213
    %v4278 = vmul.f32 %v3530, %v4214
    %v4279 = vmul.f32 %v3619, %v4215
    %v4280 = vmul.f32 %v3355, %v4216
    %v4281 = vmul.f32 %v3444, %v4217
    %v4282 = vmul.f32 %v3533, %v4218
    %v4283 = vmul.f32 %v3622, %v4219
    %v4284 = vmul.f32 %v3357, %v4220
    %v4285 = vmul.f32 %v3446, %v4221
    %v4286 = vmul.f32 %v3535, %v4222
    %v4287 = vmul.f32 %v3624, %v4223
    %v4288 = vmul.f32 %v3360, %v4224
    %v4289 = vmul.f32 %v3449, %v4225
    %v4290 = vmul.f32 %v3538, %v4226
    %v4291 = vmul.f32 %v3627, %v4227
    %v4292 = vmul.f32 %v3362, %v4228
    %v4293 = vmul.f32 %v3451, %v4229
    %v4294 = vmul.f32 %v3540, %v4230
    %v4295 = vmul.f32 %v3629, %v4231
    %v4296 = vmul.f32 %v3365, %v4232
    %v4297 = vmul.f32 %v3454, %v4233
    %v4298 = vmul.f32 %v3543, %v4234
    %v4299 = vmul.f32 %v3632, %v4235
    %v4300 = vmul.f32 %v3367, %v4236
    %v4301 = vmul.f32 %v3456, %v4237
    %v4302 = vmul.f32 %v3545, %v4238
    %v4303 = vmul.f32 %v3634, %v4239
    %v4304 = vmul.f32 %v3370, %v4240
    %v4305 = vmul.f32 %v3459, %v4241
    %v4306 = vmul.f32 %v3548, %v4242
    %v4307 = vmul.f32 %v3637, %v4243
    %v4308 = vmul.f32 %v3372, %v4244
    %v4309 = vmul.f32 %v3461, %v4245
    %v4310 = vmul.f32 %v3550, %v4246
    %v4311 = vmul.f32 %v3639, %v4247
    %v4312 = vmul.f32 %v3375, %v4248
    %v4313 = vmul.f32 %v3464, %v4249
    %v4314 = vmul.f32 %v3553, %v4250
    %v4315 = vmul.f32 %v3642, %v4251
    %v4316 = vmul.f32 %v3377, %v4252
    %v4317 = vmul.f32 %v3466, %v4253
    %v4318 = vmul.f32 %v3555, %v4254
    %v4319 = vmul.f32 %v3644, %v4255
    %v4320 = vmul.f32 %v3380, %v4256
    %v4321 = vmul.f32 %v3469, %v4257
    %v4322 = vmul.f32 %v3558, %v4258
    %v4323 = vmul.f32 %v3647, %v4259
    %v4324 = vmul.f32 %v3382, %v4260
    %v4325 = vmul.f32 %v3471, %v4261
    %v4326 = vmul.f32 %v3560, %v4262
    %v4327 = vmul.f32 %v3649, %v4263
    %v4328 = vmul.f32 %v3385, %v4264
    %v4329 = vmul.f32 %v3474, %v4265
    %v4330 = vmul.f32 %v3563, %v4266
    %v4331 = vmul.f32 %v3652, %v4267
    %v4332 = vmul.f32 %v3387, %v4268
    %v4333 = vmul.f32 %v3476, %v4269
    %v4334 = vmul.f32 %v3565, %v4270
    %v4335 = vmul.f32 %v3654, %v4271
    %v4336 = vpack.c.bf16 %v4276, %v4272
    %v4337 = vpack.c.bf16 %v4277, %v4273
    %v4338 = vpack.c.bf16 %v4278, %v4274
    %v4339 = vpack.c.bf16 %v4279, %v4275
    %v4340 = vpack.c.bf16 %v4284, %v4280
    %v4341 = vpack.c.bf16 %v4285, %v4281
    %v4342 = vpack.c.bf16 %v4286, %v4282
    %v4343 = vpack.c.bf16 %v4287, %v4283
    %v4344 = vpack.c.bf16 %v4292, %v4288
    %v4345 = vpack.c.bf16 %v4293, %v4289
    %v4346 = vpack.c.bf16 %v4294, %v4290
    %v4347 = vpack.c.bf16 %v4295, %v4291
    %v4348 = vpack.c.bf16 %v4300, %v4296
    %v4349 = vpack.c.bf16 %v4301, %v4297
    %v4350 = vpack.c.bf16 %v4302, %v4298
    %v4351 = vpack.c.bf16 %v4303, %v4299
    %v4352 = vpack.c.bf16 %v4308, %v4304
    %v4353 = vpack.c.bf16 %v4309, %v4305
    %v4354 = vpack.c.bf16 %v4310, %v4306
    %v4355 = vpack.c.bf16 %v4311, %v4307
    %v4356 = vpack.c.bf16 %v4316, %v4312
    %v4357 = vpack.c.bf16 %v4317, %v4313
    %v4358 = vpack.c.bf16 %v4318, %v4314
    %v4359 = vpack.c.bf16 %v4319, %v4315
    %v4360 = vpack.c.bf16 %v4324, %v4320
    %v4361 = vpack.c.bf16 %v4325, %v4321
    %v4362 = vpack.c.bf16 %v4326, %v4322
    %v4363 = vpack.c.bf16 %v4327, %v4323
    %v4364 = vpack.c.bf16 %v4332, %v4328
    %v4365 = vpack.c.bf16 %v4333, %v4329
    %v4366 = vpack.c.bf16 %v4334, %v4330
    %v4367 = vpack.c.bf16 %v4335, %v4331
    %4369 = vset.pattern.permute.xlu0 0
    %4370 = vperm.xlu0 %4369, %v67
    %v4371 = vpop.permute.xlu0 %4370
    %4374 = vset.pattern.permute.xlu0 0
    %4375 = vperm.xlu0 %4374, %v68
    %v4376 = vpop.permute.xlu0 %4375
    %4379 = vset.pattern.permute.xlu0 0
    %4380 = vperm.xlu0 %4379, %v69
    %v4381 = vpop.permute.xlu0 %4380
    %4384 = vset.pattern.permute.xlu0 0
    %4385 = vperm.xlu0 %4384, %v70
    %v4386 = vpop.permute.xlu0 %4385
    %v4392 = vunpack.c.l.b16 %v167
    %v4393 = vunpack.c.l.b16 %v168
    %v4394 = vunpack.c.l.b16 %v169
    %v4395 = vunpack.c.l.b16 %v170
    %v4396 = vpack.c.b16 %v4393, %v4392
    %v4397 = vpack.c.b16 %v4395, %v4394
    %4400 = vmatpush.bf16.msra.mxu0 %v4364
    %4401 = vmatpush.bf16.msra.mxu0 %v4360
    %4402 = vmatpush.bf16.msra.mxu0 %v4356
    %4403 = vmatpush.bf16.msra.mxu0 %v4352
    %4404 = vmatpush.bf16.msra.mxu0 %v4348
    %4405 = vmatpush.bf16.msra.mxu0 %v4344
    %4406 = vmatpush.bf16.msra.mxu0 %v4340
    %4407 = vmatpush.bf16.msra.mxu0 %v4336
    %4408 = vmatmul.bf16.gmra.mxu0 %v4396
    %v4409 = vpop.f32.mrf.mxu0
    %v4410 = vadd.f32 %v4371, %v4409
    %v4411 = vpop.f32.mrf.mxu0
    %v4412 = vadd.f32 %v4376, %v4411
    %4413 = vmatmul.bf16.gmra.mxu0 %v4397
    %v4414 = vpop.f32.mrf.mxu0
    %v4415 = vadd.f32 %v4381, %v4414
    %v4416 = vpop.f32.mrf.mxu0
    %v4417 = vadd.f32 %v4386, %v4416
    %4418 = vdwg.mxu0
    %4419 = vmatpush.bf16.msra.mxu0 %v4365
    %4420 = vmatpush.bf16.msra.mxu0 %v4361
    %4421 = vmatpush.bf16.msra.mxu0 %v4357
    %4422 = vmatpush.bf16.msra.mxu0 %v4353
    %4423 = vmatpush.bf16.msra.mxu0 %v4349
    %4424 = vmatpush.bf16.msra.mxu0 %v4345
    %4425 = vmatpush.bf16.msra.mxu0 %v4341
    %4426 = vmatpush.bf16.msra.mxu0 %v4337
    %4427 = vmatmul.bf16.gmra.mxu0 %v4396
    %v4428 = vpop.f32.mrf.mxu0
    %v4429 = vadd.f32 %v4371, %v4428
    %v4430 = vpop.f32.mrf.mxu0
    %v4431 = vadd.f32 %v4376, %v4430
    %4432 = vmatmul.bf16.gmra.mxu0 %v4397
    %v4433 = vpop.f32.mrf.mxu0
    %v4434 = vadd.f32 %v4381, %v4433
    %v4435 = vpop.f32.mrf.mxu0
    %v4436 = vadd.f32 %v4386, %v4435
    %4437 = vdwg.mxu0
    %4438 = vmatpush.bf16.msra.mxu0 %v4366
    %4439 = vmatpush.bf16.msra.mxu0 %v4362
    %4440 = vmatpush.bf16.msra.mxu0 %v4358
    %4441 = vmatpush.bf16.msra.mxu0 %v4354
    %4442 = vmatpush.bf16.msra.mxu0 %v4350
    %4443 = vmatpush.bf16.msra.mxu0 %v4346
    %4444 = vmatpush.bf16.msra.mxu0 %v4342
    %4445 = vmatpush.bf16.msra.mxu0 %v4338
    %4446 = vmatmul.bf16.gmra.mxu0 %v4396
    %v4447 = vpop.f32.mrf.mxu0
    %v4448 = vadd.f32 %v4371, %v4447
    %v4449 = vpop.f32.mrf.mxu0
    %v4450 = vadd.f32 %v4376, %v4449
    %4451 = vmatmul.bf16.gmra.mxu0 %v4397
    %v4452 = vpop.f32.mrf.mxu0
    %v4453 = vadd.f32 %v4381, %v4452
    %v4454 = vpop.f32.mrf.mxu0
    %v4455 = vadd.f32 %v4386, %v4454
    %4456 = vdwg.mxu0
    %4457 = vmatpush.bf16.msra.mxu0 %v4367
    %4458 = vmatpush.bf16.msra.mxu0 %v4363
    %4459 = vmatpush.bf16.msra.mxu0 %v4359
    %4460 = vmatpush.bf16.msra.mxu0 %v4355
    %4461 = vmatpush.bf16.msra.mxu0 %v4351
    %4462 = vmatpush.bf16.msra.mxu0 %v4347
    %4463 = vmatpush.bf16.msra.mxu0 %v4343
    %4464 = vmatpush.bf16.msra.mxu0 %v4339
    %4465 = vmatmul.bf16.gmra.mxu0 %v4396
    %v4466 = vpop.f32.mrf.mxu0
    %v4467 = vadd.f32 %v4371, %v4466
    %v4468 = vpop.f32.mrf.mxu0
    %v4469 = vadd.f32 %v4376, %v4468
    %4470 = vmatmul.bf16.gmra.mxu0 %v4397
    %v4471 = vpop.f32.mrf.mxu0
    %v4472 = vadd.f32 %v4381, %v4471
    %v4473 = vpop.f32.mrf.mxu0
    %v4474 = vadd.f32 %v4386, %v4473
    %4475 = vdwg.mxu0
    %v4476 = vadd.f32 %v4410, %v2784
    %v4477 = vadd.f32 %v4429, %v2785
    %v4478 = vadd.f32 %v4448, %v2786
    %v4479 = vadd.f32 %v4467, %v2787
    %v4480 = vadd.f32 %v4412, %v2788
    %v4481 = vadd.f32 %v4431, %v2789
    %v4482 = vadd.f32 %v4450, %v2790
    %v4483 = vadd.f32 %v4469, %v2791
    %v4484 = vadd.f32 %v4415, %v2792
    %v4485 = vadd.f32 %v4434, %v2793
    %v4486 = vadd.f32 %v4453, %v2794
    %v4487 = vadd.f32 %v4472, %v2795
    %v4488 = vadd.f32 %v4417, %v2796
    %v4489 = vadd.f32 %v4436, %v2797
    %v4490 = vadd.f32 %v4455, %v2798
    %v4491 = vadd.f32 %v4474, %v2799
    %4492 = vst [vmem:[#allocation2] sm:$0xff] %v4476
    %4493 = vst [vmem:[#allocation2 + $0x8] sm:$0xff] %v4477
    %4494 = vst [vmem:[#allocation2 + $0x10] sm:$0xff] %v4478
    %4495 = vst [vmem:[#allocation2 + $0x18] sm:$0xff] %v4479
    %4496 = vst [vmem:[#allocation2 + $0x20] sm:$0xff] %v4480
    %4497 = vst [vmem:[#allocation2 + $0x28] sm:$0xff] %v4481
    %4498 = vst [vmem:[#allocation2 + $0x30] sm:$0xff] %v4482
    %4499 = vst [vmem:[#allocation2 + $0x38] sm:$0xff] %v4483
    %4500 = vst [vmem:[#allocation2 + $0x40] sm:$0xff] %v4484
    %4501 = vst [vmem:[#allocation2 + $0x48] sm:$0xff] %v4485
    %4502 = vst [vmem:[#allocation2 + $0x50] sm:$0xff] %v4486
    %4503 = vst [vmem:[#allocation2 + $0x58] sm:$0xff] %v4487
    %4504 = vst [vmem:[#allocation2 + $0x60] sm:$0xff] %v4488
    %4505 = vst [vmem:[#allocation2 + $0x68] sm:$0xff] %v4489
    %4506 = vst [vmem:[#allocation2 + $0x70] sm:$0xff] %v4490
    %4507 = vst [vmem:[#allocation2 + $0x78] sm:$0xff] %v4491
    // Predicated region
    $region18: #{tpu_custom_call.1} parent=1 // pred_check
      _
    $region19: #{tpu_custom_call.1} parent=1 // pred_check_branch
      %4509 = sbr.rel (0) target = $region21
    $region20: #{tpu_custom_call.1} parent=1 // pred_region
      %4511 = vsyncadd [#allocation3], 0
      %s4512 = sshll.u32 [#allocation2], 4
      %s4513 = int_to_ptr.vmem [resolvable:$true] %s4512
      %s4514 = sshll.u32 %s4, 4
      %s4515 = int_to_ptr.hbm [resolvable:$true] %s4514
      %4520 = dma.vmem_to_hbm [thread:$0]  %s4513, 2048, %s4515, [#allocation3], 512, 512, 32
    $region21: #{tpu_custom_call.1} parent=1 // pred_fallthru
      _
    // Predicated region
    $region22: #{tpu_custom_call.1} parent=1 // pred_check
      _
    $region23: #{tpu_custom_call.1} parent=1 // pred_check_branch
      %4522 = sbr.rel (0) target = $region25
    $region24: #{tpu_custom_call.1} parent=1 // pred_region
      %4524 = dma.done [#allocation3], 2048
    $region25: #{tpu_custom_call.1} parent=1 // pred_fallthru
      _
    %4525 = vsyncpa [#allocation3], 1

</llo_original>
